<compile_context>
chip_gen: v7x
topology: tpu7x:2x2x1
jax: 0.10.0
libtpu: 0.0.40
codegen_flags: <defaults>
</compile_context>

<pallas_src>
import math

import jax
import jax.numpy as jnp
from jax.experimental import pallas as pl
from jax.experimental.pallas import tpu as pltpu

X_DIM = 28 * 28   # 784
Y_DIM = 10
H_DIM = 400
Z_DIM = 20
ZP = 64           # Z padded to 64 lanes so the mu/logvar halves split cleanly


def _cvae_kernel(
    x_ref, y_ref, eps_ref,
    w1x_ref, w1y_ref, b1_ref,
    w2_ref, b2_ref,
    w3z_ref, w3y_ref, b3_ref,
    w4_ref, b4_ref,
    recon_ref, muvar_ref,
):
    x = x_ref[...]      # (TM, 784) bf16
    y = y_ref[...]      # (TM, 10)  bf16 one-hot
    eps = eps_ref[...]  # (TM, ZP)  f32, columns >= Z_DIM are zero

    # ---- encode: h1 = relu([x, y] @ W1 + b1) as split matmul ----
    h1 = (
        jnp.dot(x, w1x_ref[...], preferred_element_type=jnp.float32)
        + jnp.dot(y, w1y_ref[...], preferred_element_type=jnp.float32)
        + b1_ref[...]
    )
    h1 = jnp.maximum(h1, 0.0)

    # ---- fused fc21 || fc22 : (TM, 2*ZP), lane-dense output ----
    muvar = (
        jnp.dot(h1.astype(jnp.bfloat16), w2_ref[...],
                preferred_element_type=jnp.float32)
        + b2_ref[...]
    )
    muvar_ref[...] = muvar

    mu = muvar[:, :ZP]       # padded lanes are exactly zero
    logvar = muvar[:, ZP:]   # padded lanes are exactly zero

    # ---- reparameterize: z = mu + eps * exp(0.5 * logvar) (f32) ----
    z = mu + eps * jnp.exp(0.5 * logvar)   # padded lanes stay zero

    # ---- decode: h3 = relu([z, y] @ W3 + b3); recon = sigmoid(h3 @ W4 + b4) ----
    h3 = (
        jnp.dot(z.astype(jnp.bfloat16), w3z_ref[...],
                preferred_element_type=jnp.float32)
        + jnp.dot(y, w3y_ref[...], preferred_element_type=jnp.float32)
        + b3_ref[...]
    )
    h3 = jnp.maximum(h3, 0.0)

    logits = (
        jnp.dot(h3.astype(jnp.bfloat16), w4_ref[...],
                preferred_element_type=jnp.float32)
        + b4_ref[...]
    )
    recon_ref[...] = jax.nn.sigmoid(logits)


def init_params(key):
    """Torch-like U(-1/sqrt(fan_in), ...) init, re-laid-out for the kernel.

    Weights pre-transposed to [in, out] and stored bf16; biases f32 [1, out].
    fc21/fc22 are fused (each half padded to ZP lanes, padding zero-filled),
    fc3's z-rows are padded to ZP rows with zeros.
    """
    def linear(k, fan_in, fan_out):
        kw, kb = jax.random.split(k)
        bound = 1.0 / math.sqrt(fan_in)
        w = jax.random.uniform(kw, (fan_in, fan_out), jnp.float32, -bound, bound)
        b = jax.random.uniform(kb, (1, fan_out), jnp.float32, -bound, bound)
        return w, b

    k1, k21, k22, k3, k4 = jax.random.split(key, 5)
    w1, b1 = linear(k1, X_DIM + Y_DIM, H_DIM)   # fc1
    w21, b21 = linear(k21, H_DIM, Z_DIM)        # fc21
    w22, b22 = linear(k22, H_DIM, Z_DIM)        # fc22
    w3, b3 = linear(k3, Z_DIM + Y_DIM, H_DIM)   # fc3
    w4, b4 = linear(k4, H_DIM, X_DIM)           # fc4

    # fc21 || fc22 fused, each half padded to ZP lanes (zeros in padding).
    w2 = jnp.zeros((H_DIM, 2 * ZP), jnp.float32)
    w2 = w2.at[:, :Z_DIM].set(w21).at[:, ZP:ZP + Z_DIM].set(w22)
    b2 = jnp.zeros((1, 2 * ZP), jnp.float32)
    b2 = b2.at[:, :Z_DIM].set(b21).at[:, ZP:ZP + Z_DIM].set(b22)

    # fc3 split into z-part (rows padded to ZP with zeros) and y-part.
    w3z = jnp.zeros((ZP, H_DIM), jnp.float32).at[:Z_DIM].set(w3[:Z_DIM])
    w3y = w3[Z_DIM:]

    bf = lambda a: a.astype(jnp.bfloat16)
    return {
        "w1x": bf(w1[:X_DIM]), "w1y": bf(w1[X_DIM:]), "b1": b1,
        "w2": bf(w2), "b2": b2,
        "w3z": bf(w3z), "w3y": bf(w3y), "b3": b3,
        "w4": bf(w4), "b4": b4,
    }


def _round_up(n, m):
    return ((n + m - 1) // m) * m


def cvae_forward(x, y, eps, params, *, block_m=None):
    """x: (B, 784) f32, y: (B, 10) f32 one-hot, eps: (B, 20) f32."""
    B = x.shape[0]
    if block_m is None:
        # 128-row tiles fill the v5e MXU and work well on v6e/v7x; tiny batches
        # just round up to a sublane multiple and run as a single tile.
        block_m = 128 if B >= 128 else _round_up(max(B, 1), 8)
    Bp = _round_up(B, block_m)

    xb = x.astype(jnp.bfloat16)
    yb = y.astype(jnp.bfloat16)
    eps_p = jnp.pad(eps, ((0, 0), (0, ZP - Z_DIM)))
    if Bp != B:
        pad = Bp - B
        xb = jnp.pad(xb, ((0, pad), (0, 0)))
        yb = jnp.pad(yb, ((0, pad), (0, 0)))
        eps_p = jnp.pad(eps_p, ((0, pad), (0, 0)))

    grid = (Bp // block_m,)
    act = lambda i: (i, 0)   # batch-tiled activations
    pin = lambda i: (0, 0)   # weights: same block every step -> DMA'd once

    in_specs = [
        pl.BlockSpec((block_m, X_DIM), act),      # x
        pl.BlockSpec((block_m, Y_DIM), act),      # y
        pl.BlockSpec((block_m, ZP), act),         # eps
        pl.BlockSpec((X_DIM, H_DIM), pin),        # w1x
        pl.BlockSpec((Y_DIM, H_DIM), pin),        # w1y
        pl.BlockSpec((1, H_DIM), pin),            # b1
        pl.BlockSpec((H_DIM, 2 * ZP), pin),       # w2  (fc21||fc22)
        pl.BlockSpec((1, 2 * ZP), pin),           # b2
        pl.BlockSpec((ZP, H_DIM), pin),           # w3z
        pl.BlockSpec((Y_DIM, H_DIM), pin),        # w3y
        pl.BlockSpec((1, H_DIM), pin),            # b3
        pl.BlockSpec((H_DIM, X_DIM), pin),        # w4
        pl.BlockSpec((1, X_DIM), pin),            # b4
    ]
    out_specs = (
        pl.BlockSpec((block_m, X_DIM), act),      # recon
        pl.BlockSpec((block_m, 2 * ZP), act),     # packed [mu | logvar]
    )
    out_shape = (
        jax.ShapeDtypeStruct((Bp, X_DIM), jnp.float32),
        jax.ShapeDtypeStruct((Bp, 2 * ZP), jnp.float32),
    )

    recon_p, muvar_p = pl.pallas_call(
        _cvae_kernel,
        out_shape=out_shape,
        grid=grid,
        in_specs=in_specs,
        out_specs=out_specs,
        compiler_params=pltpu.CompilerParams(
            dimension_semantics=("parallel",),
        ),
    )(
        xb, yb, eps_p,
        params["w1x"], params["w1y"], params["b1"],
        params["w2"], params["b2"],
        params["w3z"], params["w3y"], params["b3"],
        params["w4"], params["b4"],
    )

    recon = recon_p[:B]
    mu = muvar_p[:B, :Z_DIM]
    logvar = muvar_p[:B, ZP:ZP + Z_DIM]
    return recon, mu, logvar


def cvae_reference(x, y, eps, params):
    """Plain-JAX reference using identical (bf16 weight, f32 accumulate) math."""
    xb = x.astype(jnp.bfloat16)
    yb = y.astype(jnp.bfloat16)
    eps_p = jnp.pad(eps, ((0, 0), (0, ZP - Z_DIM)))

    h1 = jnp.maximum(
        jnp.dot(xb, params["w1x"], preferred_element_type=jnp.float32)
        + jnp.dot(yb, params["w1y"], preferred_element_type=jnp.float32)
        + params["b1"], 0.0)
    muvar = (jnp.dot(h1.astype(jnp.bfloat16), params["w2"],
                     preferred_element_type=jnp.float32) + params["b2"])
    mu, logvar = muvar[:, :ZP], muvar[:, ZP:]
    z = mu + eps_p * jnp.exp(0.5 * logvar)
    h3 = jnp.maximum(
        jnp.dot(z.astype(jnp.bfloat16), params["w3z"],
                preferred_element_type=jnp.float32)
        + jnp.dot(yb, params["w3y"], preferred_element_type=jnp.float32)
        + params["b3"], 0.0)
    recon = jax.nn.sigmoid(
        jnp.dot(h3.astype(jnp.bfloat16), params["w4"],
                preferred_element_type=jnp.float32) + params["b4"])
    return recon, mu[:, :Z_DIM], logvar[:, :Z_DIM]


if __name__ == "__main__":
    key = jax.random.PRNGKey(0)
    k_par, k_x, k_y, k_eps = jax.random.split(key, 4)

    B = 8
    params = init_params(k_par)

    # x: flattened 28x28 images in [0,1); y: one-hot class labels.
    x = jax.random.uniform(k_x, (B, X_DIM), jnp.float32)
    labels = jax.random.randint(k_y, (B,), 0, Y_DIM)
    y = jax.nn.one_hot(labels, Y_DIM, dtype=jnp.float32)
    # eps corresponds to torch.randn_like(std); generated outside the kernel
    # so the forward is deterministic for the check.
    eps = jax.random.normal(k_eps, (B, Z_DIM), jnp.float32)

    recon, mu, logvar = cvae_forward(x, y, eps, params)
    jax.block_until_ready((recon, mu, logvar))

    r_ref, mu_ref, lv_ref = cvae_reference(x, y, eps, params)
    assert recon.shape == (B, X_DIM)
    assert mu.shape == (B, Z_DIM) and logvar.shape == (B, Z_DIM)
    assert jnp.allclose(recon, r_ref, atol=2e-3, rtol=2e-3)
    assert jnp.allclose(mu, mu_ref, atol=2e-3, rtol=2e-3)
    assert jnp.allclose(logvar, lv_ref, atol=2e-3, rtol=2e-3)

    print("KERNEL_OK")
</pallas_src>

<mosaic_0001>
module attributes {stable_mosaic.version = 11 : i64} {
  func.func @_cvae_kernel(%arg0: i32, %arg1: memref<8x784xbf16, #tpu.memory_space<vmem>>, %arg2: memref<8x10xbf16, #tpu.memory_space<vmem>>, %arg3: memref<8x64xf32, #tpu.memory_space<vmem>>, %arg4: memref<784x400xbf16, #tpu.memory_space<vmem>>, %arg5: memref<10x400xbf16, #tpu.memory_space<vmem>>, %arg6: memref<1x400xf32, #tpu.memory_space<vmem>>, %arg7: memref<400x128xbf16, #tpu.memory_space<vmem>>, %arg8: memref<1x128xf32, #tpu.memory_space<vmem>>, %arg9: memref<64x400xbf16, #tpu.memory_space<vmem>>, %arg10: memref<10x400xbf16, #tpu.memory_space<vmem>>, %arg11: memref<1x400xf32, #tpu.memory_space<vmem>>, %arg12: memref<400x784xbf16, #tpu.memory_space<vmem>>, %arg13: memref<1x784xf32, #tpu.memory_space<vmem>>, %arg14: memref<8x784xf32, #tpu.memory_space<vmem>>, %arg15: memref<8x128xf32, #tpu.memory_space<vmem>>) attributes {dimension_semantics = [#tpu.dimension_semantics<parallel>], iteration_bounds = array<i64: 1>, scalar_prefetch = 0 : i64, scratch_operands = 0 : i64, tpu.core_type = #tpu.core_type<tc>, window_params = [{transform_indices = @transform_0, window_bounds = array<i64: 8, 784>}, {transform_indices = @transform_1, window_bounds = array<i64: 8, 10>}, {transform_indices = @transform_2, window_bounds = array<i64: 8, 64>}, {pipeline_mode = #tpu.pipeline_mode<synchronous>, transform_indices = @transform_3, window_bounds = array<i64: 784, 400>}, {pipeline_mode = #tpu.pipeline_mode<synchronous>, transform_indices = @transform_4, window_bounds = array<i64: 10, 400>}, {pipeline_mode = #tpu.pipeline_mode<synchronous>, transform_indices = @transform_5, window_bounds = array<i64: 1, 400>}, {pipeline_mode = #tpu.pipeline_mode<synchronous>, transform_indices = @transform_6, window_bounds = array<i64: 400, 128>}, {pipeline_mode = #tpu.pipeline_mode<synchronous>, transform_indices = @transform_7, window_bounds = array<i64: 1, 128>}, {pipeline_mode = #tpu.pipeline_mode<synchronous>, transform_indices = @transform_8, window_bounds = array<i64: 64, 400>}, {pipeline_mode = #tpu.pipeline_mode<synchronous>, transform_indices = @transform_9, window_bounds = array<i64: 10, 400>}, {pipeline_mode = #tpu.pipeline_mode<synchronous>, transform_indices = @transform_10, window_bounds = array<i64: 1, 400>}, {pipeline_mode = #tpu.pipeline_mode<synchronous>, transform_indices = @transform_11, window_bounds = array<i64: 400, 784>}, {pipeline_mode = #tpu.pipeline_mode<synchronous>, transform_indices = @transform_12, window_bounds = array<i64: 1, 784>}, {transform_indices = @transform_13, window_bounds = array<i64: 8, 784>}, {transform_indices = @transform_14, window_bounds = array<i64: 8, 128>}]} {
    %c0 = arith.constant 0 : index
    %c0_0 = arith.constant 0 : index
    %0 = vector.load %arg1[%c0, %c0_0] : memref<8x784xbf16, #tpu.memory_space<vmem>>, vector<8x784xbf16>
    %c0_1 = arith.constant 0 : index
    %c0_2 = arith.constant 0 : index
    %1 = vector.load %arg2[%c0_1, %c0_2] : memref<8x10xbf16, #tpu.memory_space<vmem>>, vector<8x10xbf16>
    %c0_3 = arith.constant 0 : index
    %c0_4 = arith.constant 0 : index
    %2 = vector.load %arg3[%c0_3, %c0_4] : memref<8x64xf32, #tpu.memory_space<vmem>>, vector<8x64xf32>
    %c0_5 = arith.constant 0 : index
    %c0_6 = arith.constant 0 : index
    %3 = vector.load %arg4[%c0_5, %c0_6] : memref<784x400xbf16, #tpu.memory_space<vmem>>, vector<784x400xbf16>
    %cst = arith.constant dense<0.000000e+00> : vector<8x400xf32>
    %4 = tpu.matmul %0, %3, %cst {dimension_numbers = #tpu.dot_dimension_numbers<[1], [0], [0], [1], [0, 0, 1, 1], [], []>} : vector<8x784xbf16>, vector<784x400xbf16>, vector<8x400xf32> -> vector<8x400xf32>
    %c0_7 = arith.constant 0 : index
    %c0_8 = arith.constant 0 : index
    %5 = vector.load %arg5[%c0_7, %c0_8] : memref<10x400xbf16, #tpu.memory_space<vmem>>, vector<10x400xbf16>
    %cst_9 = arith.constant dense<0.000000e+00> : vector<8x400xf32>
    %6 = tpu.matmul %1, %5, %cst_9 {dimension_numbers = #tpu.dot_dimension_numbers<[1], [0], [0], [1], [0, 0, 1, 1], [], []>} : vector<8x10xbf16>, vector<10x400xbf16>, vector<8x400xf32> -> vector<8x400xf32>
    %7 = arith.addf %4, %6 : vector<8x400xf32>
    %c0_10 = arith.constant 0 : index
    %c0_11 = arith.constant 0 : index
    %8 = vector.load %arg6[%c0_10, %c0_11] : memref<1x400xf32, #tpu.memory_space<vmem>>, vector<1x400xf32>
    %9 = vector.broadcast %8 : vector<1x400xf32> to vector<8x400xf32>
    %10 = arith.addf %7, %9 : vector<8x400xf32>
    %cst_12 = arith.constant 0.000000e+00 : f32
    %11 = vector.broadcast %cst_12 : f32 to vector<8x400xf32>
    %12 = arith.maximumf %10, %11 : vector<8x400xf32>
    %13 = arith.truncf %12 : vector<8x400xf32> to vector<8x400xbf16>
    %c0_13 = arith.constant 0 : index
    %c0_14 = arith.constant 0 : index
    %14 = vector.load %arg7[%c0_13, %c0_14] : memref<400x128xbf16, #tpu.memory_space<vmem>>, vector<400x128xbf16>
    %cst_15 = arith.constant dense<0.000000e+00> : vector<8x128xf32>
    %15 = tpu.matmul %13, %14, %cst_15 {dimension_numbers = #tpu.dot_dimension_numbers<[1], [0], [0], [1], [0, 0, 1, 1], [], []>} : vector<8x400xbf16>, vector<400x128xbf16>, vector<8x128xf32> -> vector<8x128xf32>
    %c0_16 = arith.constant 0 : index
    %c0_17 = arith.constant 0 : index
    %16 = vector.load %arg8[%c0_16, %c0_17] : memref<1x128xf32, #tpu.memory_space<vmem>>, vector<1x128xf32>
    %17 = vector.broadcast %16 : vector<1x128xf32> to vector<8x128xf32>
    %18 = arith.addf %15, %17 : vector<8x128xf32>
    %c0_18 = arith.constant 0 : index
    %c0_19 = arith.constant 0 : index
    %19 = vector.load %arg15[%c0_18, %c0_19] : memref<8x128xf32, #tpu.memory_space<vmem>>, vector<8x128xf32>
    tpu.vector_store %arg15[%c0_18, %c0_19], %18 {strides = array<i32>} : memref<8x128xf32, #tpu.memory_space<vmem>>, vector<8x128xf32>,
    %20 = vector.extract_strided_slice %18 {offsets = [0, 0], sizes = [8, 64], strides = [1, 1]} : vector<8x128xf32> to vector<8x64xf32>
    %21 = vector.extract_strided_slice %18 {offsets = [0, 64], sizes = [8, 64], strides = [1, 1]} : vector<8x128xf32> to vector<8x64xf32>
    %cst_20 = arith.constant 5.000000e-01 : f32
    %22 = vector.broadcast %cst_20 : f32 to vector<8x64xf32>
    %23 = arith.mulf %22, %21 : vector<8x64xf32>
    %24 = math.exp %23 : vector<8x64xf32>
    %25 = arith.mulf %2, %24 : vector<8x64xf32>
    %26 = arith.addf %20, %25 : vector<8x64xf32>
    %27 = arith.truncf %26 : vector<8x64xf32> to vector<8x64xbf16>
    %c0_21 = arith.constant 0 : index
    %c0_22 = arith.constant 0 : index
    %28 = vector.load %arg9[%c0_21, %c0_22] : memref<64x400xbf16, #tpu.memory_space<vmem>>, vector<64x400xbf16>
    %cst_23 = arith.constant dense<0.000000e+00> : vector<8x400xf32>
    %29 = tpu.matmul %27, %28, %cst_23 {dimension_numbers = #tpu.dot_dimension_numbers<[1], [0], [0], [1], [0, 0, 1, 1], [], []>} : vector<8x64xbf16>, vector<64x400xbf16>, vector<8x400xf32> -> vector<8x400xf32>
    %c0_24 = arith.constant 0 : index
    %c0_25 = arith.constant 0 : index
    %30 = vector.load %arg10[%c0_24, %c0_25] : memref<10x400xbf16, #tpu.memory_space<vmem>>, vector<10x400xbf16>
    %cst_26 = arith.constant dense<0.000000e+00> : vector<8x400xf32>
    %31 = tpu.matmul %1, %30, %cst_26 {dimension_numbers = #tpu.dot_dimension_numbers<[1], [0], [0], [1], [0, 0, 1, 1], [], []>} : vector<8x10xbf16>, vector<10x400xbf16>, vector<8x400xf32> -> vector<8x400xf32>
    %32 = arith.addf %29, %31 : vector<8x400xf32>
    %c0_27 = arith.constant 0 : index
    %c0_28 = arith.constant 0 : index
    %33 = vector.load %arg11[%c0_27, %c0_28] : memref<1x400xf32, #tpu.memory_space<vmem>>, vector<1x400xf32>
    %34 = vector.broadcast %33 : vector<1x400xf32> to vector<8x400xf32>
    %35 = arith.addf %32, %34 : vector<8x400xf32>
    %cst_29 = arith.constant 0.000000e+00 : f32
    %36 = vector.broadcast %cst_29 : f32 to vector<8x400xf32>
    %37 = arith.maximumf %35, %36 : vector<8x400xf32>
    %38 = arith.truncf %37 : vector<8x400xf32> to vector<8x400xbf16>
    %c0_30 = arith.constant 0 : index
    %c0_31 = arith.constant 0 : index
    %39 = vector.load %arg12[%c0_30, %c0_31] : memref<400x784xbf16, #tpu.memory_space<vmem>>, vector<400x784xbf16>
    %cst_32 = arith.constant dense<0.000000e+00> : vector<8x784xf32>
    %40 = tpu.matmul %38, %39, %cst_32 {dimension_numbers = #tpu.dot_dimension_numbers<[1], [0], [0], [1], [0, 0, 1, 1], [], []>} : vector<8x400xbf16>, vector<400x784xbf16>, vector<8x784xf32> -> vector<8x784xf32>
    %c0_33 = arith.constant 0 : index
    %c0_34 = arith.constant 0 : index
    %41 = vector.load %arg13[%c0_33, %c0_34] : memref<1x784xf32, #tpu.memory_space<vmem>>, vector<1x784xf32>
    %42 = vector.broadcast %41 : vector<1x784xf32> to vector<8x784xf32>
    %43 = arith.addf %40, %42 : vector<8x784xf32>
    %44 = arith.negf %43 : vector<8x784xf32>
    %45 = math.exp %44 : vector<8x784xf32>
    %cst_35 = arith.constant 1.000000e+00 : f32
    %46 = vector.broadcast %cst_35 : f32 to vector<8x784xf32>
    %47 = arith.addf %46, %45 : vector<8x784xf32>
    %48 = arith.divf %46, %47 : vector<8x784xf32>
    %c0_36 = arith.constant 0 : index
    %c0_37 = arith.constant 0 : index
    %49 = vector.load %arg14[%c0_36, %c0_37] : memref<8x784xf32, #tpu.memory_space<vmem>>, vector<8x784xf32>
    tpu.vector_store %arg14[%c0_36, %c0_37], %48 {strides = array<i32>} : memref<8x784xf32, #tpu.memory_space<vmem>>, vector<8x784xf32>,
    return
  }
  func.func @transform_0(%arg0: i32) -> (i32, i32) {
    %c0_i32 = arith.constant 0 : i32
    %c0_i32_0 = arith.constant 0 : i32
    return %arg0, %c0_i32 : i32, i32
  }
  func.func @transform_1(%arg0: i32) -> (i32, i32) {
    %c0_i32 = arith.constant 0 : i32
    %c0_i32_0 = arith.constant 0 : i32
    return %arg0, %c0_i32 : i32, i32
  }
  func.func @transform_2(%arg0: i32) -> (i32, i32) {
    %c0_i32 = arith.constant 0 : i32
    %c0_i32_0 = arith.constant 0 : i32
    return %arg0, %c0_i32 : i32, i32
  }
  func.func @transform_3(%arg0: i32) -> (i32, i32) {
    %c0_i32 = arith.constant 0 : i32
    %c0_i32_0 = arith.constant 0 : i32
    %c0_i32_1 = arith.constant 0 : i32
    return %c0_i32, %c0_i32_0 : i32, i32
  }
  func.func @transform_4(%arg0: i32) -> (i32, i32) {
    %c0_i32 = arith.constant 0 : i32
    %c0_i32_0 = arith.constant 0 : i32
    %c0_i32_1 = arith.constant 0 : i32
    return %c0_i32, %c0_i32_0 : i32, i32
  }
  func.func @transform_5(%arg0: i32) -> (i32, i32) {
    %c0_i32 = arith.constant 0 : i32
    %c0_i32_0 = arith.constant 0 : i32
    %c0_i32_1 = arith.constant 0 : i32
    return %c0_i32, %c0_i32_0 : i32, i32
  }
  func.func @transform_6(%arg0: i32) -> (i32, i32) {
    %c0_i32 = arith.constant 0 : i32
    %c0_i32_0 = arith.constant 0 : i32
    %c0_i32_1 = arith.constant 0 : i32
    return %c0_i32, %c0_i32_0 : i32, i32
  }
  func.func @transform_7(%arg0: i32) -> (i32, i32) {
    %c0_i32 = arith.constant 0 : i32
    %c0_i32_0 = arith.constant 0 : i32
    %c0_i32_1 = arith.constant 0 : i32
    return %c0_i32, %c0_i32_0 : i32, i32
  }
  func.func @transform_8(%arg0: i32) -> (i32, i32) {
    %c0_i32 = arith.constant 0 : i32
    %c0_i32_0 = arith.constant 0 : i32
    %c0_i32_1 = arith.constant 0 : i32
    return %c0_i32, %c0_i32_0 : i32, i32
  }
  func.func @transform_9(%arg0: i32) -> (i32, i32) {
    %c0_i32 = arith.constant 0 : i32
    %c0_i32_0 = arith.constant 0 : i32
    %c0_i32_1 = arith.constant 0 : i32
    return %c0_i32, %c0_i32_0 : i32, i32
  }
  func.func @transform_10(%arg0: i32) -> (i32, i32) {
    %c0_i32 = arith.constant 0 : i32
    %c0_i32_0 = arith.constant 0 : i32
    %c0_i32_1 = arith.constant 0 : i32
    return %c0_i32, %c0_i32_0 : i32, i32
  }
  func.func @transform_11(%arg0: i32) -> (i32, i32) {
    %c0_i32 = arith.constant 0 : i32
    %c0_i32_0 = arith.constant 0 : i32
    %c0_i32_1 = arith.constant 0 : i32
    return %c0_i32, %c0_i32_0 : i32, i32
  }
  func.func @transform_12(%arg0: i32) -> (i32, i32) {
    %c0_i32 = arith.constant 0 : i32
    %c0_i32_0 = arith.constant 0 : i32
    %c0_i32_1 = arith.constant 0 : i32
    return %c0_i32, %c0_i32_0 : i32, i32
  }
  func.func @transform_13(%arg0: i32) -> (i32, i32) {
    %c0_i32 = arith.constant 0 : i32
    %c0_i32_0 = arith.constant 0 : i32
    return %arg0, %c0_i32 : i32, i32
  }
  func.func @transform_14(%arg0: i32) -> (i32, i32) {
    %c0_i32 = arith.constant 0 : i32
    %c0_i32_0 = arith.constant 0 : i32
    return %arg0, %c0_i32 : i32, i32
  }
}

</mosaic_0001>

<llo_original>
// kernel: tpu_custom_call.1
$region0: #{tpu_custom_call.1}
  #allocation0 [shape = 'u32[]', space=smem, size = 0x4, offset = 0x4, fixed_abs, tag = 'smem constant byte address 0x4 - core index']
  #allocation1 [shape = 'u32[144,128]{1,0:T(1,128)}', space=vmem, size = 0x12000, scoped, tag = 'internal scratch']
  %s0 = inlined_call_operand.vmem [shape: bf16[8,784], index: 0, kind: input, shape index: {}]
  %s1 = inlined_call_operand.vmem [shape: bf16[8,10], index: 1, kind: input, shape index: {}]
  %s2 = inlined_call_operand.vmem [shape: f32[8,64], index: 2, kind: input, shape index: {}]
  %s3 = inlined_call_operand.vmem [shape: bf16[784,400], index: 3, kind: input, shape index: {}]
  %s4 = inlined_call_operand.vmem [shape: bf16[10,400], index: 4, kind: input, shape index: {}]
  %s5 = inlined_call_operand.vmem [shape: f32[1,400], index: 5, kind: input, shape index: {}]
  %s6 = inlined_call_operand.vmem [shape: bf16[400,128], index: 6, kind: input, shape index: {}]
  %s7 = inlined_call_operand.vmem [shape: f32[1,128], index: 7, kind: input, shape index: {}]
  %s8 = inlined_call_operand.vmem [shape: bf16[64,400], index: 8, kind: input, shape index: {}]
  %s9 = inlined_call_operand.vmem [shape: bf16[10,400], index: 9, kind: input, shape index: {}]
  %s10 = inlined_call_operand.vmem [shape: f32[1,400], index: 10, kind: input, shape index: {}]
  %s11 = inlined_call_operand.vmem [shape: bf16[400,784], index: 11, kind: input, shape index: {}]
  %s12 = inlined_call_operand.vmem [shape: f32[1,784], index: 12, kind: input, shape index: {}]
  %s13 = inlined_call_operand.hbm [shape: f32[8,784], index: 13, kind: output, shape index: {0}]
  %s14 = inlined_call_operand.hbm [shape: f32[8,128], index: 14, kind: output, shape index: {1}]
  %15 = xla_tuple %s13, %s14
  %s16 = sld [smem:[#allocation0]]
  $region70: #{tpu_custom_call.1} parent=0
    _
  %s18 = ssub.s32 1, %s16
  %s19 = scalar_select 0, %s18, %s16
  $region1: #{tpu_custom_call.1} parent=0
    #allocation2 [shape = 'u8[28672]{0}', space=vmem, size = 0x7000, scoped, tag = 'output window, operand 0, single buffered']
    #allocation3 [shape = 's32[1]{0}', space=sflag, size = 0x4, scoped, tag = 'scoped memory for tpu_custom_call.1']
    #allocation4 [shape = 'u8[4096]{0}', space=vmem, size = 0x1000, scoped, tag = 'output window, operand 1, single buffered']
    #allocation5 [shape = 's32[1]{0}', space=sflag, size = 0x4, scoped, tag = 'scoped memory for tpu_custom_call.1']
    %20 = vsyncpa [#allocation3], 0
    %21 = vsyncpa [#allocation5], 0
    // Predicated region
    $region2: #{tpu_custom_call.1} parent=1 // pred_check
      _
    $region3: #{tpu_custom_call.1} parent=1 // pred_check_branch
      %23 = sbr.rel (0) target = $region5
    $region4: #{tpu_custom_call.1} parent=1 // pred_region
      _
    $region5: #{tpu_custom_call.1} parent=1 // pred_fallthru
      _
    // Predicated region
    $region6: #{tpu_custom_call.1} parent=1 // pred_check
      _
    $region7: #{tpu_custom_call.1} parent=1 // pred_check_branch
      %25 = sbr.rel (0) target = $region9
    $region8: #{tpu_custom_call.1} parent=1 // pred_region
      _
    $region9: #{tpu_custom_call.1} parent=1 // pred_fallthru
      _
    // Predicated region
    $region10: #{tpu_custom_call.1} parent=1 // pred_check
      _
    $region11: #{tpu_custom_call.1} parent=1 // pred_check_branch
      %27 = sbr.rel (0) target = $region13
    $region12: #{tpu_custom_call.1} parent=1 // pred_region
      _
    $region13: #{tpu_custom_call.1} parent=1 // pred_fallthru
      _
    // Predicated region
    $region14: #{tpu_custom_call.1} parent=1 // pred_check
      _
    $region15: #{tpu_custom_call.1} parent=1 // pred_check_branch
      %29 = sbr.rel (0) target = $region17
    $region16: #{tpu_custom_call.1} parent=1 // pred_region
      _
    $region17: #{tpu_custom_call.1} parent=1 // pred_fallthru
      _
    // Predicated region
    $region18: #{tpu_custom_call.1} parent=1 // pred_check
      _
    $region19: #{tpu_custom_call.1} parent=1 // pred_check_branch
      %31 = sbr.rel (0) target = $region21
    $region20: #{tpu_custom_call.1} parent=1 // pred_region
      _
    $region21: #{tpu_custom_call.1} parent=1 // pred_fallthru
      _
    // Predicated region
    $region22: #{tpu_custom_call.1} parent=1 // pred_check
      _
    $region23: #{tpu_custom_call.1} parent=1 // pred_check_branch
      %33 = sbr.rel (0) target = $region25
    $region24: #{tpu_custom_call.1} parent=1 // pred_region
      _
    $region25: #{tpu_custom_call.1} parent=1 // pred_fallthru
      _
    // Predicated region
    $region26: #{tpu_custom_call.1} parent=1 // pred_check
      _
    $region27: #{tpu_custom_call.1} parent=1 // pred_check_branch
      %35 = sbr.rel (0) target = $region29
    $region28: #{tpu_custom_call.1} parent=1 // pred_region
      _
    $region29: #{tpu_custom_call.1} parent=1 // pred_fallthru
      _
    // Predicated region
    $region30: #{tpu_custom_call.1} parent=1 // pred_check
      _
    $region31: #{tpu_custom_call.1} parent=1 // pred_check_branch
      %37 = sbr.rel (0) target = $region33
    $region32: #{tpu_custom_call.1} parent=1 // pred_region
      _
    $region33: #{tpu_custom_call.1} parent=1 // pred_fallthru
      _
    // Predicated region
    $region34: #{tpu_custom_call.1} parent=1 // pred_check
      _
    $region35: #{tpu_custom_call.1} parent=1 // pred_check_branch
      %39 = sbr.rel (0) target = $region37
    $region36: #{tpu_custom_call.1} parent=1 // pred_region
      _
    $region37: #{tpu_custom_call.1} parent=1 // pred_fallthru
      _
    // Predicated region
    $region38: #{tpu_custom_call.1} parent=1 // pred_check
      _
    $region39: #{tpu_custom_call.1} parent=1 // pred_check_branch
      %41 = sbr.rel (0) target = $region41
    $region40: #{tpu_custom_call.1} parent=1 // pred_region
      _
    $region41: #{tpu_custom_call.1} parent=1 // pred_fallthru
      _
    // Predicated region
    $region42: #{tpu_custom_call.1} parent=1 // pred_check
      _
    $region43: #{tpu_custom_call.1} parent=1 // pred_check_branch
      %43 = sbr.rel (0) target = $region45
    $region44: #{tpu_custom_call.1} parent=1 // pred_region
      _
    $region45: #{tpu_custom_call.1} parent=1 // pred_fallthru
      _
    // Predicated region
    $region46: #{tpu_custom_call.1} parent=1 // pred_check
      _
    $region47: #{tpu_custom_call.1} parent=1 // pred_check_branch
      %45 = sbr.rel (0) target = $region49
    $region48: #{tpu_custom_call.1} parent=1 // pred_region
      _
    $region49: #{tpu_custom_call.1} parent=1 // pred_fallthru
      _
    // Predicated region
    $region50: #{tpu_custom_call.1} parent=1 // pred_check
      _
    $region51: #{tpu_custom_call.1} parent=1 // pred_check_branch
      %47 = sbr.rel (0) target = $region53
    $region52: #{tpu_custom_call.1} parent=1 // pred_region
      _
    $region53: #{tpu_custom_call.1} parent=1 // pred_fallthru
      _
    %v49 = vld [vmem:[%s0] sm:$0xff]
    %v50 = vld [vmem:[%s0 + $0x8] sm:$0xff]
    %v51 = vld [vmem:[%s0 + $0x10] sm:$0xff]
    %v52 = vld [vmem:[%s0 + $0x18] sm:$0xf]
    %v53 = vld [vmem:[%s1] sm:$0xf]
    %v54 = vld [vmem:[%s2] sm:$0xff]
    %v55 = vld [vmem:[%s3] sm:$0xff]
    %v56 = vld [vmem:[%s3 + $0x8] sm:$0xff]
    %v57 = vld [vmem:[%s3 + $0x10] sm:$0xff]
    %v58 = vld [vmem:[%s3 + $0x18] sm:$0xff]
    %v59 = vld [vmem:[%s3 + $0x20] sm:$0xff]
    %v60 = vld [vmem:[%s3 + $0x28] sm:$0xff]
    %v61 = vld [vmem:[%s3 + $0x30] sm:$0xff]
    %v62 = vld [vmem:[%s3 + $0x38] sm:$0xff]
    %v63 = vld [vmem:[%s3 + $0x40] sm:$0xff]
    %v64 = vld [vmem:[%s3 + $0x48] sm:$0xff]
    %v65 = vld [vmem:[%s3 + $0x50] sm:$0xff]
    %v66 = vld [vmem:[%s3 + $0x58] sm:$0xff]
    %v67 = vld [vmem:[%s3 + $0x60] sm:$0xff]
    %v68 = vld [vmem:[%s3 + $0x68] sm:$0xff]
    %v69 = vld [vmem:[%s3 + $0x70] sm:$0xff]
    %v70 = vld [vmem:[%s3 + $0x78] sm:$0xff]
    %v71 = vld [vmem:[%s3 + $0x80] sm:$0xff]
    %v72 = vld [vmem:[%s3 + $0x88] sm:$0xff]
    %v73 = vld [vmem:[%s3 + $0x90] sm:$0xff]
    %v74 = vld [vmem:[%s3 + $0x98] sm:$0xff]
    %v75 = vld [vmem:[%s3 + $0xa0] sm:$0xff]
    %v76 = vld [vmem:[%s3 + $0xa8] sm:$0xff]
    %v77 = vld [vmem:[%s3 + $0xb0] sm:$0xff]
    %v78 = vld [vmem:[%s3 + $0xb8] sm:$0xff]
    %v79 = vld [vmem:[%s3 + $0xc0] sm:$0xff]
    %v80 = vld [vmem:[%s3 + $0xc8] sm:$0xff]
    %v81 = vld [vmem:[%s3 + $0xd0] sm:$0xff]
    %v82 = vld [vmem:[%s3 + $0xd8] sm:$0xff]
    %v83 = vld [vmem:[%s3 + $0xe0] sm:$0xff]
    %v84 = vld [vmem:[%s3 + $0xe8] sm:$0xff]
    %v85 = vld [vmem:[%s3 + $0xf0] sm:$0xff]
    %v86 = vld [vmem:[%s3 + $0xf8] sm:$0xff]
    %v87 = vld [vmem:[%s3 + $0x100] sm:$0xff]
    %v88 = vld [vmem:[%s3 + $0x108] sm:$0xff]
    %v89 = vld [vmem:[%s3 + $0x110] sm:$0xff]
    %v90 = vld [vmem:[%s3 + $0x118] sm:$0xff]
    %v91 = vld [vmem:[%s3 + $0x120] sm:$0xff]
    %v92 = vld [vmem:[%s3 + $0x128] sm:$0xff]
    %v93 = vld [vmem:[%s3 + $0x130] sm:$0xff]
    %v94 = vld [vmem:[%s3 + $0x138] sm:$0xff]
    %v95 = vld [vmem:[%s3 + $0x140] sm:$0xff]
    %v96 = vld [vmem:[%s3 + $0x148] sm:$0xff]
    %v97 = vld [vmem:[%s3 + $0x150] sm:$0xff]
    %v98 = vld [vmem:[%s3 + $0x158] sm:$0xff]
    %v99 = vld [vmem:[%s3 + $0x160] sm:$0xff]
    %v100 = vld [vmem:[%s3 + $0x168] sm:$0xff]
    %v101 = vld [vmem:[%s3 + $0x170] sm:$0xff]
    %v102 = vld [vmem:[%s3 + $0x178] sm:$0xff]
    %v103 = vld [vmem:[%s3 + $0x180] sm:$0xff]
    %v104 = vld [vmem:[%s3 + $0x188] sm:$0xff]
    %v105 = vld [vmem:[%s3 + $0x190] sm:$0xff]
    %v106 = vld [vmem:[%s3 + $0x198] sm:$0xff]
    %v107 = vld [vmem:[%s3 + $0x1a0] sm:$0xff]
    %v108 = vld [vmem:[%s3 + $0x1a8] sm:$0xff]
    %v109 = vld [vmem:[%s3 + $0x1b0] sm:$0xff]
    %v110 = vld [vmem:[%s3 + $0x1b8] sm:$0xff]
    %v111 = vld [vmem:[%s3 + $0x1c0] sm:$0xff]
    %v112 = vld [vmem:[%s3 + $0x1c8] sm:$0xff]
    %v113 = vld [vmem:[%s3 + $0x1d0] sm:$0xff]
    %v114 = vld [vmem:[%s3 + $0x1d8] sm:$0xff]
    %v115 = vld [vmem:[%s3 + $0x1e0] sm:$0xff]
    %v116 = vld [vmem:[%s3 + $0x1e8] sm:$0xff]
    %v117 = vld [vmem:[%s3 + $0x1f0] sm:$0xff]
    %v118 = vld [vmem:[%s3 + $0x1f8] sm:$0xff]
    %v119 = vld [vmem:[%s3 + $0x200] sm:$0xff]
    %v120 = vld [vmem:[%s3 + $0x208] sm:$0xff]
    %v121 = vld [vmem:[%s3 + $0x210] sm:$0xff]
    %v122 = vld [vmem:[%s3 + $0x218] sm:$0xff]
    %v123 = vld [vmem:[%s3 + $0x220] sm:$0xff]
    %v124 = vld [vmem:[%s3 + $0x228] sm:$0xff]
    %v125 = vld [vmem:[%s3 + $0x230] sm:$0xff]
    %v126 = vld [vmem:[%s3 + $0x238] sm:$0xff]
    %v127 = vld [vmem:[%s3 + $0x240] sm:$0xff]
    %v128 = vld [vmem:[%s3 + $0x248] sm:$0xff]
    %v129 = vld [vmem:[%s3 + $0x250] sm:$0xff]
    %v130 = vld [vmem:[%s3 + $0x258] sm:$0xff]
    %v131 = vld [vmem:[%s3 + $0x260] sm:$0xff]
    %v132 = vld [vmem:[%s3 + $0x268] sm:$0xff]
    %v133 = vld [vmem:[%s3 + $0x270] sm:$0xff]
    %v134 = vld [vmem:[%s3 + $0x278] sm:$0xff]
    %v135 = vld [vmem:[%s3 + $0x280] sm:$0xff]
    %v136 = vld [vmem:[%s3 + $0x288] sm:$0xff]
    %v137 = vld [vmem:[%s3 + $0x290] sm:$0xff]
    %v138 = vld [vmem:[%s3 + $0x298] sm:$0xff]
    %v139 = vld [vmem:[%s3 + $0x2a0] sm:$0xff]
    %v140 = vld [vmem:[%s3 + $0x2a8] sm:$0xff]
    %v141 = vld [vmem:[%s3 + $0x2b0] sm:$0xff]
    %v142 = vld [vmem:[%s3 + $0x2b8] sm:$0xff]
    %v143 = vld [vmem:[%s3 + $0x2c0] sm:$0xff]
    %v144 = vld [vmem:[%s3 + $0x2c8] sm:$0xff]
    %v145 = vld [vmem:[%s3 + $0x2d0] sm:$0xff]
    %v146 = vld [vmem:[%s3 + $0x2d8] sm:$0xff]
    %v147 = vld [vmem:[%s3 + $0x2e0] sm:$0xff]
    %v148 = vld [vmem:[%s3 + $0x2e8] sm:$0xff]
    %v149 = vld [vmem:[%s3 + $0x2f0] sm:$0xff]
    %v150 = vld [vmem:[%s3 + $0x2f8] sm:$0xff]
    %v151 = vld [vmem:[%s3 + $0x300] sm:$0xff]
    %v152 = vld [vmem:[%s3 + $0x308] sm:$0xff]
    %v153 = vld [vmem:[%s3 + $0x310] sm:$0xff]
    %v154 = vld [vmem:[%s3 + $0x318] sm:$0xff]
    %v155 = vld [vmem:[%s3 + $0x320] sm:$0xff]
    %v156 = vld [vmem:[%s3 + $0x328] sm:$0xff]
    %v157 = vld [vmem:[%s3 + $0x330] sm:$0xff]
    %v158 = vld [vmem:[%s3 + $0x338] sm:$0xff]
    %v159 = vld [vmem:[%s3 + $0x340] sm:$0xff]
    %v160 = vld [vmem:[%s3 + $0x348] sm:$0xff]
    %v161 = vld [vmem:[%s3 + $0x350] sm:$0xff]
    %v162 = vld [vmem:[%s3 + $0x358] sm:$0xff]
    %v163 = vld [vmem:[%s3 + $0x360] sm:$0xff]
    %v164 = vld [vmem:[%s3 + $0x368] sm:$0xff]
    %v165 = vld [vmem:[%s3 + $0x370] sm:$0xff]
    %v166 = vld [vmem:[%s3 + $0x378] sm:$0xff]
    %v167 = vld [vmem:[%s3 + $0x380] sm:$0xff]
    %v168 = vld [vmem:[%s3 + $0x388] sm:$0xff]
    %v169 = vld [vmem:[%s3 + $0x390] sm:$0xff]
    %v170 = vld [vmem:[%s3 + $0x398] sm:$0xff]
    %v171 = vld [vmem:[%s3 + $0x3a0] sm:$0xff]
    %v172 = vld [vmem:[%s3 + $0x3a8] sm:$0xff]
    %v173 = vld [vmem:[%s3 + $0x3b0] sm:$0xff]
    %v174 = vld [vmem:[%s3 + $0x3b8] sm:$0xff]
    %v175 = vld [vmem:[%s3 + $0x3c0] sm:$0xff]
    %v176 = vld [vmem:[%s3 + $0x3c8] sm:$0xff]
    %v177 = vld [vmem:[%s3 + $0x3d0] sm:$0xff]
    %v178 = vld [vmem:[%s3 + $0x3d8] sm:$0xff]
    %v179 = vld [vmem:[%s3 + $0x3e0] sm:$0xff]
    %v180 = vld [vmem:[%s3 + $0x3e8] sm:$0xff]
    %v181 = vld [vmem:[%s3 + $0x3f0] sm:$0xff]
    %v182 = vld [vmem:[%s3 + $0x3f8] sm:$0xff]
    %v183 = vld [vmem:[%s3 + $0x400] sm:$0xff]
    %v184 = vld [vmem:[%s3 + $0x408] sm:$0xff]
    %v185 = vld [vmem:[%s3 + $0x410] sm:$0xff]
    %v186 = vld [vmem:[%s3 + $0x418] sm:$0xff]
    %v187 = vld [vmem:[%s3 + $0x420] sm:$0xff]
    %v188 = vld [vmem:[%s3 + $0x428] sm:$0xff]
    %v189 = vld [vmem:[%s3 + $0x430] sm:$0xff]
    %v190 = vld [vmem:[%s3 + $0x438] sm:$0xff]
    %v191 = vld [vmem:[%s3 + $0x440] sm:$0xff]
    %v192 = vld [vmem:[%s3 + $0x448] sm:$0xff]
    %v193 = vld [vmem:[%s3 + $0x450] sm:$0xff]
    %v194 = vld [vmem:[%s3 + $0x458] sm:$0xff]
    %v195 = vld [vmem:[%s3 + $0x460] sm:$0xff]
    %v196 = vld [vmem:[%s3 + $0x468] sm:$0xff]
    %v197 = vld [vmem:[%s3 + $0x470] sm:$0xff]
    %v198 = vld [vmem:[%s3 + $0x478] sm:$0xff]
    %v199 = vld [vmem:[%s3 + $0x480] sm:$0xff]
    %v200 = vld [vmem:[%s3 + $0x488] sm:$0xff]
    %v201 = vld [vmem:[%s3 + $0x490] sm:$0xff]
    %v202 = vld [vmem:[%s3 + $0x498] sm:$0xff]
    %v203 = vld [vmem:[%s3 + $0x4a0] sm:$0xff]
    %v204 = vld [vmem:[%s3 + $0x4a8] sm:$0xff]
    %v205 = vld [vmem:[%s3 + $0x4b0] sm:$0xff]
    %v206 = vld [vmem:[%s3 + $0x4b8] sm:$0xff]
    %v207 = vld [vmem:[%s3 + $0x4c0] sm:$0xff]
    %v208 = vld [vmem:[%s3 + $0x4c8] sm:$0xff]
    %v209 = vld [vmem:[%s3 + $0x4d0] sm:$0xff]
    %v210 = vld [vmem:[%s3 + $0x4d8] sm:$0xff]
    %v211 = vld [vmem:[%s3 + $0x4e0] sm:$0xff]
    %v212 = vld [vmem:[%s3 + $0x4e8] sm:$0xff]
    %v213 = vld [vmem:[%s3 + $0x4f0] sm:$0xff]
    %v214 = vld [vmem:[%s3 + $0x4f8] sm:$0xff]
    %v215 = vld [vmem:[%s3 + $0x500] sm:$0xff]
    %v216 = vld [vmem:[%s3 + $0x508] sm:$0xff]
    %v217 = vld [vmem:[%s3 + $0x510] sm:$0xff]
    %v218 = vld [vmem:[%s3 + $0x518] sm:$0xff]
    %v219 = vld [vmem:[%s3 + $0x520] sm:$0xff]
    %v220 = vld [vmem:[%s3 + $0x528] sm:$0xff]
    %v221 = vld [vmem:[%s3 + $0x530] sm:$0xff]
    %v222 = vld [vmem:[%s3 + $0x538] sm:$0xff]
    %v223 = vld [vmem:[%s3 + $0x540] sm:$0xff]
    %v224 = vld [vmem:[%s3 + $0x548] sm:$0xff]
    %v225 = vld [vmem:[%s3 + $0x550] sm:$0xff]
    %v226 = vld [vmem:[%s3 + $0x558] sm:$0xff]
    %v227 = vld [vmem:[%s3 + $0x560] sm:$0xff]
    %v228 = vld [vmem:[%s3 + $0x568] sm:$0xff]
    %v229 = vld [vmem:[%s3 + $0x570] sm:$0xff]
    %v230 = vld [vmem:[%s3 + $0x578] sm:$0xff]
    %v231 = vld [vmem:[%s3 + $0x580] sm:$0xff]
    %v232 = vld [vmem:[%s3 + $0x588] sm:$0xff]
    %v233 = vld [vmem:[%s3 + $0x590] sm:$0xff]
    %v234 = vld [vmem:[%s3 + $0x598] sm:$0xff]
    %v235 = vld [vmem:[%s3 + $0x5a0] sm:$0xff]
    %v236 = vld [vmem:[%s3 + $0x5a8] sm:$0xff]
    %v237 = vld [vmem:[%s3 + $0x5b0] sm:$0xff]
    %v238 = vld [vmem:[%s3 + $0x5b8] sm:$0xff]
    %v239 = vld [vmem:[%s3 + $0x5c0] sm:$0xff]
    %v240 = vld [vmem:[%s3 + $0x5c8] sm:$0xff]
    %v241 = vld [vmem:[%s3 + $0x5d0] sm:$0xff]
    %v242 = vld [vmem:[%s3 + $0x5d8] sm:$0xff]
    %v243 = vld [vmem:[%s3 + $0x5e0] sm:$0xff]
    %v244 = vld [vmem:[%s3 + $0x5e8] sm:$0xff]
    %v245 = vld [vmem:[%s3 + $0x5f0] sm:$0xff]
    %v246 = vld [vmem:[%s3 + $0x5f8] sm:$0xff]
    %v247 = vld [vmem:[%s3 + $0x600] sm:$0xff]
    %v248 = vld [vmem:[%s3 + $0x608] sm:$0xff]
    %v249 = vld [vmem:[%s3 + $0x610] sm:$0xff]
    %v250 = vld [vmem:[%s3 + $0x618] sm:$0xff]
    %v251 = vld [vmem:[%s4] sm:$0xff]
    %v252 = vld [vmem:[%s4 + $0x8] sm:$0xff]
    %v253 = vld [vmem:[%s4 + $0x10] sm:$0x11]
    %v254 = vld [vmem:[%s4 + $0x18] sm:$0x11]
    %v259 = vunpack.c.l.b16 %v251
    %v260 = vunpack.c.h.b16 %v251
    %v261 = vunpack.c.l.b16 %v252
    %v262 = vunpack.c.h.b16 %v252
    %v263 = vunpack.c.l.b16 %v253
    %v264 = vunpack.c.h.b16 %v253
    %v265 = vunpack.c.l.b16 %v254
    %v266 = vunpack.c.h.b16 %v254
    %v267 = vpack.c.b16 %v263, %v259
    %v268 = vpack.c.b16 %v264, %v260
    %v269 = vpack.c.b16 %v265, %v261
    %v270 = vpack.c.b16 %v266, %v262
    %vm271 = vcmask 80896
    %v273 = vsel %vm271, %v53, 0
    %vm275 = vcmask 1044480
    %v277 = vsel %vm275, %v267, 0
    %v280 = vsel %vm275, %v268, 0
    %v283 = vsel %vm275, %v269, 0
    %v286 = vsel %vm275, %v270, 0
    %288 = vmatprep.subr.bf16.mxu0 %v280
    %289 = vmatpush1.bf16.msra.mxu0 %v277
    %290 = vmatprep.subr.bf16.mxu0 0
    %291 = vmatpush1.bf16.msra.mxu0 0
    %292 = vmatprep.subr.bf16.mxu0 0
    %293 = vmatpush1.bf16.msra.mxu0 0
    %294 = vmatprep.subr.bf16.mxu0 0
    %295 = vmatpush1.bf16.msra.mxu0 0
    %296 = vmatprep.subr.bf16.mxu0 0
    %297 = vmatpush1.bf16.msra.mxu0 0
    %298 = vmatprep.subr.bf16.mxu0 0
    %299 = vmatpush1.bf16.msra.mxu0 0
    %300 = vmatprep.subr.bf16.mxu0 0
    %301 = vmatpush1.bf16.msra.mxu0 0
    %302 = vmatprep.subr.bf16.mxu0 0
    %303 = vmatpush1.bf16.msra.mxu0 0
    %304 = vmatprep.subr.bf16.mxu0 0
    %305 = vmatpush1.bf16.msra.mxu0 0
    %306 = vmatprep.subr.bf16.mxu0 0
    %307 = vmatpush1.bf16.msra.mxu0 0
    %308 = vmatprep.subr.bf16.mxu0 0
    %309 = vmatpush1.bf16.msra.mxu0 0
    %310 = vmatprep.subr.bf16.mxu0 0
    %311 = vmatpush1.bf16.msra.mxu0 0
    %312 = vmatprep.subr.bf16.mxu0 0
    %313 = vmatpush1.bf16.msra.mxu0 0
    %314 = vmatprep.subr.bf16.mxu0 0
    %315 = vmatpush1.bf16.msra.mxu0 0
    %316 = vmatprep.subr.bf16.mxu0 0
    %317 = vmatpush1.bf16.msra.mxu0 0
    %318 = vmatprep.subr.bf16.mxu0 0
    %319 = vmatpush1.bf16.msra.mxu0 0
    %320 = vmatprep.mubr.bf16.mxu0 0
    %321 = vmatmul.mubr.bf16.gmra.mrb[0].mxu0 %v273
    %v322 = vpop.f32.mrb[0].mxu0
    %v323 = vadd.f32 0.0, %v322
    %v324 = vpop.f32.mrb[0].mxu0
    %v325 = vadd.f32 0.0, %v324
    %v326 = vpop.f32.mrb[0].mxu0
    %v327 = vpop.f32.mrb[0].mxu0
    %328 = vdwg.mxu0
    %329 = vmatprep.subr.bf16.mxu0 %v286
    %330 = vmatpush1.bf16.msra.mxu0 %v283
    %331 = vmatprep.subr.bf16.mxu0 0
    %332 = vmatpush1.bf16.msra.mxu0 0
    %333 = vmatprep.subr.bf16.mxu0 0
    %334 = vmatpush1.bf16.msra.mxu0 0
    %335 = vmatprep.subr.bf16.mxu0 0
    %336 = vmatpush1.bf16.msra.mxu0 0
    %337 = vmatprep.subr.bf16.mxu0 0
    %338 = vmatpush1.bf16.msra.mxu0 0
    %339 = vmatprep.subr.bf16.mxu0 0
    %340 = vmatpush1.bf16.msra.mxu0 0
    %341 = vmatprep.subr.bf16.mxu0 0
    %342 = vmatpush1.bf16.msra.mxu0 0
    %343 = vmatprep.subr.bf16.mxu0 0
    %344 = vmatpush1.bf16.msra.mxu0 0
    %345 = vmatprep.subr.bf16.mxu0 0
    %346 = vmatpush1.bf16.msra.mxu0 0
    %347 = vmatprep.subr.bf16.mxu0 0
    %348 = vmatpush1.bf16.msra.mxu0 0
    %349 = vmatprep.subr.bf16.mxu0 0
    %350 = vmatpush1.bf16.msra.mxu0 0
    %351 = vmatprep.subr.bf16.mxu0 0
    %352 = vmatpush1.bf16.msra.mxu0 0
    %353 = vmatprep.subr.bf16.mxu0 0
    %354 = vmatpush1.bf16.msra.mxu0 0
    %355 = vmatprep.subr.bf16.mxu0 0
    %356 = vmatpush1.bf16.msra.mxu0 0
    %357 = vmatprep.subr.bf16.mxu0 0
    %358 = vmatpush1.bf16.msra.mxu0 0
    %359 = vmatprep.subr.bf16.mxu0 0
    %360 = vmatpush1.bf16.msra.mxu0 0
    %361 = vmatprep.mubr.bf16.mxu0 0
    %362 = vmatmul.mubr.bf16.gmra.mrb[0].mxu0 %v273
    %v363 = vpop.f32.mrb[0].mxu0
    %v364 = vadd.f32 0.0, %v363
    %v365 = vpop.f32.mrb[0].mxu0
    %v366 = vadd.f32 0.0, %v365
    %v367 = vpop.f32.mrb[0].mxu0
    %v368 = vpop.f32.mrb[0].mxu0
    %369 = vdwg.mxu0
    %v374 = vunpack.c.l.b16 %v49
    %v375 = vunpack.c.h.b16 %v49
    %v376 = vunpack.c.l.b16 %v50
    %v377 = vunpack.c.h.b16 %v50
    %v378 = vunpack.c.l.b16 %v51
    %v379 = vunpack.c.h.b16 %v51
    %v380 = vunpack.c.l.b16 %v52
    %v381 = vpack.c.b16 %v374, %v374
    %v382 = vpack.c.b16 %v375, %v375
    %v383 = vpack.c.b16 %v376, %v376
    %v384 = vpack.c.b16 %v377, %v377
    %v385 = vpack.c.b16 %v378, %v378
    %v386 = vpack.c.b16 %v379, %v379
    %v387 = vpack.c.b16 %v380, %v380
    %v590 = vunpack.c.l.b16 %v55
    %v591 = vunpack.c.h.b16 %v55
    %v592 = vunpack.c.l.b16 %v56
    %v593 = vunpack.c.h.b16 %v56
    %v594 = vunpack.c.l.b16 %v57
    %v595 = vunpack.c.h.b16 %v57
    %v596 = vunpack.c.l.b16 %v58
    %v597 = vunpack.c.h.b16 %v58
    %v598 = vunpack.c.l.b16 %v59
    %v599 = vunpack.c.h.b16 %v59
    %v600 = vunpack.c.l.b16 %v60
    %v601 = vunpack.c.h.b16 %v60
    %v602 = vunpack.c.l.b16 %v61
    %v603 = vunpack.c.h.b16 %v61
    %v604 = vunpack.c.l.b16 %v62
    %v605 = vunpack.c.h.b16 %v62
    %v606 = vunpack.c.l.b16 %v63
    %v607 = vunpack.c.h.b16 %v63
    %v608 = vunpack.c.l.b16 %v64
    %v609 = vunpack.c.h.b16 %v64
    %v610 = vunpack.c.l.b16 %v65
    %v611 = vunpack.c.h.b16 %v65
    %v612 = vunpack.c.l.b16 %v66
    %v613 = vunpack.c.h.b16 %v66
    %v614 = vunpack.c.l.b16 %v67
    %v615 = vunpack.c.h.b16 %v67
    %v616 = vunpack.c.l.b16 %v68
    %v617 = vunpack.c.h.b16 %v68
    %v618 = vunpack.c.l.b16 %v69
    %v619 = vunpack.c.h.b16 %v69
    %v620 = vunpack.c.l.b16 %v70
    %v621 = vunpack.c.h.b16 %v70
    %v622 = vunpack.c.l.b16 %v71
    %v623 = vunpack.c.h.b16 %v71
    %v624 = vunpack.c.l.b16 %v72
    %v625 = vunpack.c.h.b16 %v72
    %v626 = vunpack.c.l.b16 %v73
    %v627 = vunpack.c.h.b16 %v73
    %v628 = vunpack.c.l.b16 %v74
    %v629 = vunpack.c.h.b16 %v74
    %v630 = vunpack.c.l.b16 %v75
    %v631 = vunpack.c.h.b16 %v75
    %v632 = vunpack.c.l.b16 %v76
    %v633 = vunpack.c.h.b16 %v76
    %v634 = vunpack.c.l.b16 %v77
    %v635 = vunpack.c.h.b16 %v77
    %v636 = vunpack.c.l.b16 %v78
    %v637 = vunpack.c.h.b16 %v78
    %v638 = vunpack.c.l.b16 %v79
    %v639 = vunpack.c.h.b16 %v79
    %v640 = vunpack.c.l.b16 %v80
    %v641 = vunpack.c.h.b16 %v80
    %v642 = vunpack.c.l.b16 %v81
    %v643 = vunpack.c.h.b16 %v81
    %v644 = vunpack.c.l.b16 %v82
    %v645 = vunpack.c.h.b16 %v82
    %v646 = vunpack.c.l.b16 %v83
    %v647 = vunpack.c.h.b16 %v83
    %v648 = vunpack.c.l.b16 %v84
    %v649 = vunpack.c.h.b16 %v84
    %v650 = vunpack.c.l.b16 %v85
    %v651 = vunpack.c.h.b16 %v85
    %v652 = vunpack.c.l.b16 %v86
    %v653 = vunpack.c.h.b16 %v86
    %v654 = vunpack.c.l.b16 %v87
    %v655 = vunpack.c.h.b16 %v87
    %v656 = vunpack.c.l.b16 %v88
    %v657 = vunpack.c.h.b16 %v88
    %v658 = vunpack.c.l.b16 %v89
    %v659 = vunpack.c.h.b16 %v89
    %v660 = vunpack.c.l.b16 %v90
    %v661 = vunpack.c.h.b16 %v90
    %v662 = vunpack.c.l.b16 %v91
    %v663 = vunpack.c.h.b16 %v91
    %v664 = vunpack.c.l.b16 %v92
    %v665 = vunpack.c.h.b16 %v92
    %v666 = vunpack.c.l.b16 %v93
    %v667 = vunpack.c.h.b16 %v93
    %v668 = vunpack.c.l.b16 %v94
    %v669 = vunpack.c.h.b16 %v94
    %v670 = vunpack.c.l.b16 %v95
    %v671 = vunpack.c.h.b16 %v95
    %v672 = vunpack.c.l.b16 %v96
    %v673 = vunpack.c.h.b16 %v96
    %v674 = vunpack.c.l.b16 %v97
    %v675 = vunpack.c.h.b16 %v97
    %v676 = vunpack.c.l.b16 %v98
    %v677 = vunpack.c.h.b16 %v98
    %v678 = vunpack.c.l.b16 %v99
    %v679 = vunpack.c.h.b16 %v99
    %v680 = vunpack.c.l.b16 %v100
    %v681 = vunpack.c.h.b16 %v100
    %v682 = vunpack.c.l.b16 %v101
    %v683 = vunpack.c.h.b16 %v101
    %v684 = vunpack.c.l.b16 %v102
    %v685 = vunpack.c.h.b16 %v102
    %v686 = vunpack.c.l.b16 %v103
    %v687 = vunpack.c.h.b16 %v103
    %v688 = vunpack.c.l.b16 %v104
    %v689 = vunpack.c.h.b16 %v104
    %v690 = vunpack.c.l.b16 %v105
    %v691 = vunpack.c.h.b16 %v105
    %v692 = vunpack.c.l.b16 %v106
    %v693 = vunpack.c.h.b16 %v106
    %v694 = vunpack.c.l.b16 %v107
    %v695 = vunpack.c.h.b16 %v107
    %v696 = vunpack.c.l.b16 %v108
    %v697 = vunpack.c.h.b16 %v108
    %v698 = vunpack.c.l.b16 %v109
    %v699 = vunpack.c.h.b16 %v109
    %v700 = vunpack.c.l.b16 %v110
    %v701 = vunpack.c.h.b16 %v110
    %v702 = vunpack.c.l.b16 %v111
    %v703 = vunpack.c.h.b16 %v111
    %v704 = vunpack.c.l.b16 %v112
    %v705 = vunpack.c.h.b16 %v112
    %v706 = vunpack.c.l.b16 %v113
    %v707 = vunpack.c.h.b16 %v113
    %v708 = vunpack.c.l.b16 %v114
    %v709 = vunpack.c.h.b16 %v114
    %v710 = vunpack.c.l.b16 %v115
    %v711 = vunpack.c.h.b16 %v115
    %v712 = vunpack.c.l.b16 %v116
    %v713 = vunpack.c.h.b16 %v116
    %v714 = vunpack.c.l.b16 %v117
    %v715 = vunpack.c.h.b16 %v117
    %v716 = vunpack.c.l.b16 %v118
    %v717 = vunpack.c.h.b16 %v118
    %v718 = vunpack.c.l.b16 %v119
    %v719 = vunpack.c.h.b16 %v119
    %v720 = vunpack.c.l.b16 %v120
    %v721 = vunpack.c.h.b16 %v120
    %v722 = vunpack.c.l.b16 %v121
    %v723 = vunpack.c.h.b16 %v121
    %v724 = vunpack.c.l.b16 %v122
    %v725 = vunpack.c.h.b16 %v122
    %v726 = vunpack.c.l.b16 %v123
    %v727 = vunpack.c.h.b16 %v123
    %v728 = vunpack.c.l.b16 %v124
    %v729 = vunpack.c.h.b16 %v124
    %v730 = vunpack.c.l.b16 %v125
    %v731 = vunpack.c.h.b16 %v125
    %v732 = vunpack.c.l.b16 %v126
    %v733 = vunpack.c.h.b16 %v126
    %v734 = vunpack.c.l.b16 %v127
    %v735 = vunpack.c.h.b16 %v127
    %v736 = vunpack.c.l.b16 %v128
    %v737 = vunpack.c.h.b16 %v128
    %v738 = vunpack.c.l.b16 %v129
    %v739 = vunpack.c.h.b16 %v129
    %v740 = vunpack.c.l.b16 %v130
    %v741 = vunpack.c.h.b16 %v130
    %v742 = vunpack.c.l.b16 %v131
    %v743 = vunpack.c.h.b16 %v131
    %v744 = vunpack.c.l.b16 %v132
    %v745 = vunpack.c.h.b16 %v132
    %v746 = vunpack.c.l.b16 %v133
    %v747 = vunpack.c.h.b16 %v133
    %v748 = vunpack.c.l.b16 %v134
    %v749 = vunpack.c.h.b16 %v134
    %v750 = vunpack.c.l.b16 %v135
    %v751 = vunpack.c.h.b16 %v135
    %v752 = vunpack.c.l.b16 %v136
    %v753 = vunpack.c.h.b16 %v136
    %v754 = vunpack.c.l.b16 %v137
    %v755 = vunpack.c.h.b16 %v137
    %v756 = vunpack.c.l.b16 %v138
    %v757 = vunpack.c.h.b16 %v138
    %v758 = vunpack.c.l.b16 %v139
    %v759 = vunpack.c.h.b16 %v139
    %v760 = vunpack.c.l.b16 %v140
    %v761 = vunpack.c.h.b16 %v140
    %v762 = vunpack.c.l.b16 %v141
    %v763 = vunpack.c.h.b16 %v141
    %v764 = vunpack.c.l.b16 %v142
    %v765 = vunpack.c.h.b16 %v142
    %v766 = vunpack.c.l.b16 %v143
    %v767 = vunpack.c.h.b16 %v143
    %v768 = vunpack.c.l.b16 %v144
    %v769 = vunpack.c.h.b16 %v144
    %v770 = vunpack.c.l.b16 %v145
    %v771 = vunpack.c.h.b16 %v145
    %v772 = vunpack.c.l.b16 %v146
    %v773 = vunpack.c.h.b16 %v146
    %v774 = vunpack.c.l.b16 %v147
    %v775 = vunpack.c.h.b16 %v147
    %v776 = vunpack.c.l.b16 %v148
    %v777 = vunpack.c.h.b16 %v148
    %v778 = vunpack.c.l.b16 %v149
    %v779 = vunpack.c.h.b16 %v149
    %v780 = vunpack.c.l.b16 %v150
    %v781 = vunpack.c.h.b16 %v150
    %v782 = vunpack.c.l.b16 %v151
    %v783 = vunpack.c.h.b16 %v151
    %v784 = vunpack.c.l.b16 %v152
    %v785 = vunpack.c.h.b16 %v152
    %v786 = vunpack.c.l.b16 %v153
    %v787 = vunpack.c.h.b16 %v153
    %v788 = vunpack.c.l.b16 %v154
    %v789 = vunpack.c.h.b16 %v154
    %v790 = vunpack.c.l.b16 %v155
    %v791 = vunpack.c.h.b16 %v155
    %v792 = vunpack.c.l.b16 %v156
    %v793 = vunpack.c.h.b16 %v156
    %v794 = vunpack.c.l.b16 %v157
    %v795 = vunpack.c.h.b16 %v157
    %v796 = vunpack.c.l.b16 %v158
    %v797 = vunpack.c.h.b16 %v158
    %v798 = vunpack.c.l.b16 %v159
    %v799 = vunpack.c.h.b16 %v159
    %v800 = vunpack.c.l.b16 %v160
    %v801 = vunpack.c.h.b16 %v160
    %v802 = vunpack.c.l.b16 %v161
    %v803 = vunpack.c.h.b16 %v161
    %v804 = vunpack.c.l.b16 %v162
    %v805 = vunpack.c.h.b16 %v162
    %v806 = vunpack.c.l.b16 %v163
    %v807 = vunpack.c.h.b16 %v163
    %v808 = vunpack.c.l.b16 %v164
    %v809 = vunpack.c.h.b16 %v164
    %v810 = vunpack.c.l.b16 %v165
    %v811 = vunpack.c.h.b16 %v165
    %v812 = vunpack.c.l.b16 %v166
    %v813 = vunpack.c.h.b16 %v166
    %v814 = vunpack.c.l.b16 %v167
    %v815 = vunpack.c.h.b16 %v167
    %v816 = vunpack.c.l.b16 %v168
    %v817 = vunpack.c.h.b16 %v168
    %v818 = vunpack.c.l.b16 %v169
    %v819 = vunpack.c.h.b16 %v169
    %v820 = vunpack.c.l.b16 %v170
    %v821 = vunpack.c.h.b16 %v170
    %v822 = vunpack.c.l.b16 %v171
    %v823 = vunpack.c.h.b16 %v171
    %v824 = vunpack.c.l.b16 %v172
    %v825 = vunpack.c.h.b16 %v172
    %v826 = vunpack.c.l.b16 %v173
    %v827 = vunpack.c.h.b16 %v173
    %v828 = vunpack.c.l.b16 %v174
    %v829 = vunpack.c.h.b16 %v174
    %v830 = vunpack.c.l.b16 %v175
    %v831 = vunpack.c.h.b16 %v175
    %v832 = vunpack.c.l.b16 %v176
    %v833 = vunpack.c.h.b16 %v176
    %v834 = vunpack.c.l.b16 %v177
    %v835 = vunpack.c.h.b16 %v177
    %v836 = vunpack.c.l.b16 %v178
    %v837 = vunpack.c.h.b16 %v178
    %v838 = vunpack.c.l.b16 %v179
    %v839 = vunpack.c.h.b16 %v179
    %v840 = vunpack.c.l.b16 %v180
    %v841 = vunpack.c.h.b16 %v180
    %v842 = vunpack.c.l.b16 %v181
    %v843 = vunpack.c.h.b16 %v181
    %v844 = vunpack.c.l.b16 %v182
    %v845 = vunpack.c.h.b16 %v182
    %v846 = vunpack.c.l.b16 %v183
    %v847 = vunpack.c.h.b16 %v183
    %v848 = vunpack.c.l.b16 %v184
    %v849 = vunpack.c.h.b16 %v184
    %v850 = vunpack.c.l.b16 %v185
    %v851 = vunpack.c.h.b16 %v185
    %v852 = vunpack.c.l.b16 %v186
    %v853 = vunpack.c.h.b16 %v186
    %v854 = vunpack.c.l.b16 %v187
    %v855 = vunpack.c.h.b16 %v187
    %v856 = vunpack.c.l.b16 %v188
    %v857 = vunpack.c.h.b16 %v188
    %v858 = vunpack.c.l.b16 %v189
    %v859 = vunpack.c.h.b16 %v189
    %v860 = vunpack.c.l.b16 %v190
    %v861 = vunpack.c.h.b16 %v190
    %v862 = vunpack.c.l.b16 %v191
    %v863 = vunpack.c.h.b16 %v191
    %v864 = vunpack.c.l.b16 %v192
    %v865 = vunpack.c.h.b16 %v192
    %v866 = vunpack.c.l.b16 %v193
    %v867 = vunpack.c.h.b16 %v193
    %v868 = vunpack.c.l.b16 %v194
    %v869 = vunpack.c.h.b16 %v194
    %v870 = vunpack.c.l.b16 %v195
    %v871 = vunpack.c.h.b16 %v195
    %v872 = vunpack.c.l.b16 %v196
    %v873 = vunpack.c.h.b16 %v196
    %v874 = vunpack.c.l.b16 %v197
    %v875 = vunpack.c.h.b16 %v197
    %v876 = vunpack.c.l.b16 %v198
    %v877 = vunpack.c.h.b16 %v198
    %v878 = vunpack.c.l.b16 %v199
    %v879 = vunpack.c.h.b16 %v199
    %v880 = vunpack.c.l.b16 %v200
    %v881 = vunpack.c.h.b16 %v200
    %v882 = vunpack.c.l.b16 %v201
    %v883 = vunpack.c.h.b16 %v201
    %v884 = vunpack.c.l.b16 %v202
    %v885 = vunpack.c.h.b16 %v202
    %v886 = vunpack.c.l.b16 %v203
    %v887 = vunpack.c.h.b16 %v203
    %v888 = vunpack.c.l.b16 %v204
    %v889 = vunpack.c.h.b16 %v204
    %v890 = vunpack.c.l.b16 %v205
    %v891 = vunpack.c.h.b16 %v205
    %v892 = vunpack.c.l.b16 %v206
    %v893 = vunpack.c.h.b16 %v206
    %v894 = vunpack.c.l.b16 %v207
    %v895 = vunpack.c.h.b16 %v207
    %v896 = vunpack.c.l.b16 %v208
    %v897 = vunpack.c.h.b16 %v208
    %v898 = vunpack.c.l.b16 %v209
    %v899 = vunpack.c.h.b16 %v209
    %v900 = vunpack.c.l.b16 %v210
    %v901 = vunpack.c.h.b16 %v210
    %v902 = vunpack.c.l.b16 %v211
    %v903 = vunpack.c.h.b16 %v211
    %v904 = vunpack.c.l.b16 %v212
    %v905 = vunpack.c.h.b16 %v212
    %v906 = vunpack.c.l.b16 %v213
    %v907 = vunpack.c.h.b16 %v213
    %v908 = vunpack.c.l.b16 %v214
    %v909 = vunpack.c.h.b16 %v214
    %v910 = vunpack.c.l.b16 %v215
    %v911 = vunpack.c.h.b16 %v215
    %v912 = vunpack.c.l.b16 %v216
    %v913 = vunpack.c.h.b16 %v216
    %v914 = vunpack.c.l.b16 %v217
    %v915 = vunpack.c.h.b16 %v217
    %v916 = vunpack.c.l.b16 %v218
    %v917 = vunpack.c.h.b16 %v218
    %v918 = vunpack.c.l.b16 %v219
    %v919 = vunpack.c.h.b16 %v219
    %v920 = vunpack.c.l.b16 %v220
    %v921 = vunpack.c.h.b16 %v220
    %v922 = vunpack.c.l.b16 %v221
    %v923 = vunpack.c.h.b16 %v221
    %v924 = vunpack.c.l.b16 %v222
    %v925 = vunpack.c.h.b16 %v222
    %v926 = vunpack.c.l.b16 %v223
    %v927 = vunpack.c.h.b16 %v223
    %v928 = vunpack.c.l.b16 %v224
    %v929 = vunpack.c.h.b16 %v224
    %v930 = vunpack.c.l.b16 %v225
    %v931 = vunpack.c.h.b16 %v225
    %v932 = vunpack.c.l.b16 %v226
    %v933 = vunpack.c.h.b16 %v226
    %v934 = vunpack.c.l.b16 %v227
    %v935 = vunpack.c.h.b16 %v227
    %v936 = vunpack.c.l.b16 %v228
    %v937 = vunpack.c.h.b16 %v228
    %v938 = vunpack.c.l.b16 %v229
    %v939 = vunpack.c.h.b16 %v229
    %v940 = vunpack.c.l.b16 %v230
    %v941 = vunpack.c.h.b16 %v230
    %v942 = vunpack.c.l.b16 %v231
    %v943 = vunpack.c.h.b16 %v231
    %v944 = vunpack.c.l.b16 %v232
    %v945 = vunpack.c.h.b16 %v232
    %v946 = vunpack.c.l.b16 %v233
    %v947 = vunpack.c.h.b16 %v233
    %v948 = vunpack.c.l.b16 %v234
    %v949 = vunpack.c.h.b16 %v234
    %v950 = vunpack.c.l.b16 %v235
    %v951 = vunpack.c.h.b16 %v235
    %v952 = vunpack.c.l.b16 %v236
    %v953 = vunpack.c.h.b16 %v236
    %v954 = vunpack.c.l.b16 %v237
    %v955 = vunpack.c.h.b16 %v237
    %v956 = vunpack.c.l.b16 %v238
    %v957 = vunpack.c.h.b16 %v238
    %v958 = vunpack.c.l.b16 %v239
    %v959 = vunpack.c.h.b16 %v239
    %v960 = vunpack.c.l.b16 %v240
    %v961 = vunpack.c.h.b16 %v240
    %v962 = vunpack.c.l.b16 %v241
    %v963 = vunpack.c.h.b16 %v241
    %v964 = vunpack.c.l.b16 %v242
    %v965 = vunpack.c.h.b16 %v242
    %v966 = vunpack.c.l.b16 %v243
    %v967 = vunpack.c.h.b16 %v243
    %v968 = vunpack.c.l.b16 %v244
    %v969 = vunpack.c.h.b16 %v244
    %v970 = vunpack.c.l.b16 %v245
    %v971 = vunpack.c.h.b16 %v245
    %v972 = vunpack.c.l.b16 %v246
    %v973 = vunpack.c.h.b16 %v246
    %v974 = vunpack.c.l.b16 %v247
    %v975 = vunpack.c.h.b16 %v247
    %v976 = vunpack.c.l.b16 %v248
    %v977 = vunpack.c.h.b16 %v248
    %v978 = vunpack.c.l.b16 %v249
    %v979 = vunpack.c.h.b16 %v249
    %v980 = vunpack.c.l.b16 %v250
    %v981 = vunpack.c.h.b16 %v250
    %v982 = vpack.c.b16 %v594, %v590
    %v983 = vpack.c.b16 %v595, %v591
    %v984 = vpack.c.b16 %v596, %v592
    %v985 = vpack.c.b16 %v597, %v593
    %v986 = vpack.c.b16 %v602, %v598
    %v987 = vpack.c.b16 %v603, %v599
    %v988 = vpack.c.b16 %v604, %v600
    %v989 = vpack.c.b16 %v605, %v601
    %v990 = vpack.c.b16 %v610, %v606
    %v991 = vpack.c.b16 %v611, %v607
    %v992 = vpack.c.b16 %v612, %v608
    %v993 = vpack.c.b16 %v613, %v609
    %v994 = vpack.c.b16 %v618, %v614
    %v995 = vpack.c.b16 %v619, %v615
    %v996 = vpack.c.b16 %v620, %v616
    %v997 = vpack.c.b16 %v621, %v617
    %v998 = vpack.c.b16 %v626, %v622
    %v999 = vpack.c.b16 %v627, %v623
    %v1000 = vpack.c.b16 %v628, %v624
    %v1001 = vpack.c.b16 %v629, %v625
    %v1002 = vpack.c.b16 %v634, %v630
    %v1003 = vpack.c.b16 %v635, %v631
    %v1004 = vpack.c.b16 %v636, %v632
    %v1005 = vpack.c.b16 %v637, %v633
    %v1006 = vpack.c.b16 %v642, %v638
    %v1007 = vpack.c.b16 %v643, %v639
    %v1008 = vpack.c.b16 %v644, %v640
    %v1009 = vpack.c.b16 %v645, %v641
    %v1010 = vpack.c.b16 %v650, %v646
    %v1011 = vpack.c.b16 %v651, %v647
    %v1012 = vpack.c.b16 %v652, %v648
    %v1013 = vpack.c.b16 %v653, %v649
    %v1014 = vpack.c.b16 %v658, %v654
    %v1015 = vpack.c.b16 %v659, %v655
    %v1016 = vpack.c.b16 %v660, %v656
    %v1017 = vpack.c.b16 %v661, %v657
    %v1018 = vpack.c.b16 %v666, %v662
    %v1019 = vpack.c.b16 %v667, %v663
    %v1020 = vpack.c.b16 %v668, %v664
    %v1021 = vpack.c.b16 %v669, %v665
    %v1022 = vpack.c.b16 %v674, %v670
    %v1023 = vpack.c.b16 %v675, %v671
    %v1024 = vpack.c.b16 %v676, %v672
    %v1025 = vpack.c.b16 %v677, %v673
    %v1026 = vpack.c.b16 %v682, %v678
    %v1027 = vpack.c.b16 %v683, %v679
    %v1028 = vpack.c.b16 %v684, %v680
    %v1029 = vpack.c.b16 %v685, %v681
    %v1030 = vpack.c.b16 %v690, %v686
    %v1031 = vpack.c.b16 %v691, %v687
    %v1032 = vpack.c.b16 %v692, %v688
    %v1033 = vpack.c.b16 %v693, %v689
    %v1034 = vpack.c.b16 %v698, %v694
    %v1035 = vpack.c.b16 %v699, %v695
    %v1036 = vpack.c.b16 %v700, %v696
    %v1037 = vpack.c.b16 %v701, %v697
    %v1038 = vpack.c.b16 %v706, %v702
    %v1039 = vpack.c.b16 %v707, %v703
    %v1040 = vpack.c.b16 %v708, %v704
    %v1041 = vpack.c.b16 %v709, %v705
    %v1042 = vpack.c.b16 %v714, %v710
    %v1043 = vpack.c.b16 %v715, %v711
    %v1044 = vpack.c.b16 %v716, %v712
    %v1045 = vpack.c.b16 %v717, %v713
    %v1046 = vpack.c.b16 %v722, %v718
    %v1047 = vpack.c.b16 %v723, %v719
    %v1048 = vpack.c.b16 %v724, %v720
    %v1049 = vpack.c.b16 %v725, %v721
    %v1050 = vpack.c.b16 %v730, %v726
    %v1051 = vpack.c.b16 %v731, %v727
    %v1052 = vpack.c.b16 %v732, %v728
    %v1053 = vpack.c.b16 %v733, %v729
    %v1054 = vpack.c.b16 %v738, %v734
    %v1055 = vpack.c.b16 %v739, %v735
    %v1056 = vpack.c.b16 %v740, %v736
    %v1057 = vpack.c.b16 %v741, %v737
    %v1058 = vpack.c.b16 %v746, %v742
    %v1059 = vpack.c.b16 %v747, %v743
    %v1060 = vpack.c.b16 %v748, %v744
    %v1061 = vpack.c.b16 %v749, %v745
    %v1062 = vpack.c.b16 %v754, %v750
    %v1063 = vpack.c.b16 %v755, %v751
    %v1064 = vpack.c.b16 %v756, %v752
    %v1065 = vpack.c.b16 %v757, %v753
    %v1066 = vpack.c.b16 %v762, %v758
    %v1067 = vpack.c.b16 %v763, %v759
    %v1068 = vpack.c.b16 %v764, %v760
    %v1069 = vpack.c.b16 %v765, %v761
    %v1070 = vpack.c.b16 %v770, %v766
    %v1071 = vpack.c.b16 %v771, %v767
    %v1072 = vpack.c.b16 %v772, %v768
    %v1073 = vpack.c.b16 %v773, %v769
    %v1074 = vpack.c.b16 %v778, %v774
    %v1075 = vpack.c.b16 %v779, %v775
    %v1076 = vpack.c.b16 %v780, %v776
    %v1077 = vpack.c.b16 %v781, %v777
    %v1078 = vpack.c.b16 %v786, %v782
    %v1079 = vpack.c.b16 %v787, %v783
    %v1080 = vpack.c.b16 %v788, %v784
    %v1081 = vpack.c.b16 %v789, %v785
    %v1082 = vpack.c.b16 %v794, %v790
    %v1083 = vpack.c.b16 %v795, %v791
    %v1084 = vpack.c.b16 %v796, %v792
    %v1085 = vpack.c.b16 %v797, %v793
    %v1086 = vpack.c.b16 %v802, %v798
    %v1087 = vpack.c.b16 %v803, %v799
    %v1088 = vpack.c.b16 %v804, %v800
    %v1089 = vpack.c.b16 %v805, %v801
    %v1090 = vpack.c.b16 %v810, %v806
    %v1091 = vpack.c.b16 %v811, %v807
    %v1092 = vpack.c.b16 %v812, %v808
    %v1093 = vpack.c.b16 %v813, %v809
    %v1094 = vpack.c.b16 %v818, %v814
    %v1095 = vpack.c.b16 %v819, %v815
    %v1096 = vpack.c.b16 %v820, %v816
    %v1097 = vpack.c.b16 %v821, %v817
    %v1098 = vpack.c.b16 %v826, %v822
    %v1099 = vpack.c.b16 %v827, %v823
    %v1100 = vpack.c.b16 %v828, %v824
    %v1101 = vpack.c.b16 %v829, %v825
    %v1102 = vpack.c.b16 %v834, %v830
    %v1103 = vpack.c.b16 %v835, %v831
    %v1104 = vpack.c.b16 %v836, %v832
    %v1105 = vpack.c.b16 %v837, %v833
    %v1106 = vpack.c.b16 %v842, %v838
    %v1107 = vpack.c.b16 %v843, %v839
    %v1108 = vpack.c.b16 %v844, %v840
    %v1109 = vpack.c.b16 %v845, %v841
    %v1110 = vpack.c.b16 %v850, %v846
    %v1111 = vpack.c.b16 %v851, %v847
    %v1112 = vpack.c.b16 %v852, %v848
    %v1113 = vpack.c.b16 %v853, %v849
    %v1114 = vpack.c.b16 %v858, %v854
    %v1115 = vpack.c.b16 %v859, %v855
    %v1116 = vpack.c.b16 %v860, %v856
    %v1117 = vpack.c.b16 %v861, %v857
    %v1118 = vpack.c.b16 %v866, %v862
    %v1119 = vpack.c.b16 %v867, %v863
    %v1120 = vpack.c.b16 %v868, %v864
    %v1121 = vpack.c.b16 %v869, %v865
    %v1122 = vpack.c.b16 %v874, %v870
    %v1123 = vpack.c.b16 %v875, %v871
    %v1124 = vpack.c.b16 %v876, %v872
    %v1125 = vpack.c.b16 %v877, %v873
    %v1126 = vpack.c.b16 %v882, %v878
    %v1127 = vpack.c.b16 %v883, %v879
    %v1128 = vpack.c.b16 %v884, %v880
    %v1129 = vpack.c.b16 %v885, %v881
    %v1130 = vpack.c.b16 %v890, %v886
    %v1131 = vpack.c.b16 %v891, %v887
    %v1132 = vpack.c.b16 %v892, %v888
    %v1133 = vpack.c.b16 %v893, %v889
    %v1134 = vpack.c.b16 %v898, %v894
    %v1135 = vpack.c.b16 %v899, %v895
    %v1136 = vpack.c.b16 %v900, %v896
    %v1137 = vpack.c.b16 %v901, %v897
    %v1138 = vpack.c.b16 %v906, %v902
    %v1139 = vpack.c.b16 %v907, %v903
    %v1140 = vpack.c.b16 %v908, %v904
    %v1141 = vpack.c.b16 %v909, %v905
    %v1142 = vpack.c.b16 %v914, %v910
    %v1143 = vpack.c.b16 %v915, %v911
    %v1144 = vpack.c.b16 %v916, %v912
    %v1145 = vpack.c.b16 %v917, %v913
    %v1146 = vpack.c.b16 %v922, %v918
    %v1147 = vpack.c.b16 %v923, %v919
    %v1148 = vpack.c.b16 %v924, %v920
    %v1149 = vpack.c.b16 %v925, %v921
    %v1150 = vpack.c.b16 %v930, %v926
    %v1151 = vpack.c.b16 %v931, %v927
    %v1152 = vpack.c.b16 %v932, %v928
    %v1153 = vpack.c.b16 %v933, %v929
    %v1154 = vpack.c.b16 %v938, %v934
    %v1155 = vpack.c.b16 %v939, %v935
    %v1156 = vpack.c.b16 %v940, %v936
    %v1157 = vpack.c.b16 %v941, %v937
    %v1158 = vpack.c.b16 %v946, %v942
    %v1159 = vpack.c.b16 %v947, %v943
    %v1160 = vpack.c.b16 %v948, %v944
    %v1161 = vpack.c.b16 %v949, %v945
    %v1162 = vpack.c.b16 %v954, %v950
    %v1163 = vpack.c.b16 %v955, %v951
    %v1164 = vpack.c.b16 %v956, %v952
    %v1165 = vpack.c.b16 %v957, %v953
    %v1166 = vpack.c.b16 %v962, %v958
    %v1167 = vpack.c.b16 %v963, %v959
    %v1168 = vpack.c.b16 %v964, %v960
    %v1169 = vpack.c.b16 %v965, %v961
    %v1170 = vpack.c.b16 %v970, %v966
    %v1171 = vpack.c.b16 %v971, %v967
    %v1172 = vpack.c.b16 %v972, %v968
    %v1173 = vpack.c.b16 %v973, %v969
    %v1174 = vpack.c.b16 %v978, %v974
    %v1175 = vpack.c.b16 %v979, %v975
    %v1176 = vpack.c.b16 %v980, %v976
    %v1177 = vpack.c.b16 %v981, %v977
    %vm1374 = vcmask 130048
    %v1376 = vsel %vm1374, %v387, 0
    %1378 = vmatprep.subr.bf16.mxu0 %v983
    %1379 = vmatpush1.bf16.msra.mxu0 %v982
    %1380 = vmatprep.subr.bf16.mxu0 %v987
    %1381 = vmatpush1.bf16.msra.mxu0 %v986
    %1382 = vmatprep.subr.bf16.mxu0 %v991
    %1383 = vmatpush1.bf16.msra.mxu0 %v990
    %1384 = vmatprep.subr.bf16.mxu0 %v995
    %1385 = vmatpush1.bf16.msra.mxu0 %v994
    %1386 = vmatprep.subr.bf16.mxu0 %v999
    %1387 = vmatpush1.bf16.msra.mxu0 %v998
    %1388 = vmatprep.subr.bf16.mxu0 %v1003
    %1389 = vmatpush1.bf16.msra.mxu0 %v1002
    %1390 = vmatprep.subr.bf16.mxu0 %v1007
    %1391 = vmatpush1.bf16.msra.mxu0 %v1006
    %1392 = vmatprep.subr.bf16.mxu0 %v1011
    %1393 = vmatpush1.bf16.msra.mxu0 %v1010
    %1394 = vmatprep.subr.bf16.mxu0 %v1015
    %1395 = vmatpush1.bf16.msra.mxu0 %v1014
    %1396 = vmatprep.subr.bf16.mxu0 %v1019
    %1397 = vmatpush1.bf16.msra.mxu0 %v1018
    %1398 = vmatprep.subr.bf16.mxu0 %v1023
    %1399 = vmatpush1.bf16.msra.mxu0 %v1022
    %1400 = vmatprep.subr.bf16.mxu0 %v1027
    %1401 = vmatpush1.bf16.msra.mxu0 %v1026
    %1402 = vmatprep.subr.bf16.mxu0 %v1031
    %1403 = vmatpush1.bf16.msra.mxu0 %v1030
    %1404 = vmatprep.subr.bf16.mxu0 %v1035
    %1405 = vmatpush1.bf16.msra.mxu0 %v1034
    %1406 = vmatprep.subr.bf16.mxu0 %v1039
    %1407 = vmatpush1.bf16.msra.mxu0 %v1038
    %1408 = vmatprep.subr.bf16.mxu0 %v1043
    %1409 = vmatpush1.bf16.msra.mxu0 %v1042
    %1410 = vmatprep.mubr.bf16.mxu0 %v382
    %1411 = vmatmul.mubr.bf16.gmra.mrb[0].mxu0 %v381
    %v1412 = vpop.f32.mrb[0].mxu0
    %v1413 = vadd.f32 %v323, %v1412
    %v1414 = vpop.f32.mrb[0].mxu0
    %v1415 = vadd.f32 %v325, %v1414
    %v1416 = vpop.f32.mrb[0].mxu0
    %v1417 = vpop.f32.mrb[0].mxu0
    %1418 = vdwg.mxu0
    %1419 = vmatprep.subr.bf16.mxu0 %v1047
    %1420 = vmatpush1.bf16.msra.mxu0 %v1046
    %1421 = vmatprep.subr.bf16.mxu0 %v1051
    %1422 = vmatpush1.bf16.msra.mxu0 %v1050
    %1423 = vmatprep.subr.bf16.mxu0 %v1055
    %1424 = vmatpush1.bf16.msra.mxu0 %v1054
    %1425 = vmatprep.subr.bf16.mxu0 %v1059
    %1426 = vmatpush1.bf16.msra.mxu0 %v1058
    %1427 = vmatprep.subr.bf16.mxu0 %v1063
    %1428 = vmatpush1.bf16.msra.mxu0 %v1062
    %1429 = vmatprep.subr.bf16.mxu0 %v1067
    %1430 = vmatpush1.bf16.msra.mxu0 %v1066
    %1431 = vmatprep.subr.bf16.mxu0 %v1071
    %1432 = vmatpush1.bf16.msra.mxu0 %v1070
    %1433 = vmatprep.subr.bf16.mxu0 %v1075
    %1434 = vmatpush1.bf16.msra.mxu0 %v1074
    %1435 = vmatprep.subr.bf16.mxu0 %v1079
    %1436 = vmatpush1.bf16.msra.mxu0 %v1078
    %1437 = vmatprep.subr.bf16.mxu0 %v1083
    %1438 = vmatpush1.bf16.msra.mxu0 %v1082
    %1439 = vmatprep.subr.bf16.mxu0 %v1087
    %1440 = vmatpush1.bf16.msra.mxu0 %v1086
    %1441 = vmatprep.subr.bf16.mxu0 %v1091
    %1442 = vmatpush1.bf16.msra.mxu0 %v1090
    %1443 = vmatprep.subr.bf16.mxu0 %v1095
    %1444 = vmatpush1.bf16.msra.mxu0 %v1094
    %1445 = vmatprep.subr.bf16.mxu0 %v1099
    %1446 = vmatpush1.bf16.msra.mxu0 %v1098
    %1447 = vmatprep.subr.bf16.mxu0 %v1103
    %1448 = vmatpush1.bf16.msra.mxu0 %v1102
    %1449 = vmatprep.subr.bf16.mxu0 %v1107
    %1450 = vmatpush1.bf16.msra.mxu0 %v1106
    %1451 = vmatprep.mubr.bf16.mxu0 %v384
    %1452 = vmatmul.mubr.bf16.gmra.mrb[0].mxu0 %v383
    %v1453 = vpop.f32.mrb[0].mxu0
    %v1454 = vadd.f32 %v1413, %v1453
    %v1455 = vpop.f32.mrb[0].mxu0
    %v1456 = vadd.f32 %v1415, %v1455
    %v1457 = vpop.f32.mrb[0].mxu0
    %v1458 = vpop.f32.mrb[0].mxu0
    %1459 = vdwg.mxu0
    %1460 = vmatprep.subr.bf16.mxu0 %v1111
    %1461 = vmatpush1.bf16.msra.mxu0 %v1110
    %1462 = vmatprep.subr.bf16.mxu0 %v1115
    %1463 = vmatpush1.bf16.msra.mxu0 %v1114
    %1464 = vmatprep.subr.bf16.mxu0 %v1119
    %1465 = vmatpush1.bf16.msra.mxu0 %v1118
    %1466 = vmatprep.subr.bf16.mxu0 %v1123
    %1467 = vmatpush1.bf16.msra.mxu0 %v1122
    %1468 = vmatprep.subr.bf16.mxu0 %v1127
    %1469 = vmatpush1.bf16.msra.mxu0 %v1126
    %1470 = vmatprep.subr.bf16.mxu0 %v1131
    %1471 = vmatpush1.bf16.msra.mxu0 %v1130
    %1472 = vmatprep.subr.bf16.mxu0 %v1135
    %1473 = vmatpush1.bf16.msra.mxu0 %v1134
    %1474 = vmatprep.subr.bf16.mxu0 %v1139
    %1475 = vmatpush1.bf16.msra.mxu0 %v1138
    %1476 = vmatprep.subr.bf16.mxu0 %v1143
    %1477 = vmatpush1.bf16.msra.mxu0 %v1142
    %1478 = vmatprep.subr.bf16.mxu0 %v1147
    %1479 = vmatpush1.bf16.msra.mxu0 %v1146
    %1480 = vmatprep.subr.bf16.mxu0 %v1151
    %1481 = vmatpush1.bf16.msra.mxu0 %v1150
    %1482 = vmatprep.subr.bf16.mxu0 %v1155
    %1483 = vmatpush1.bf16.msra.mxu0 %v1154
    %1484 = vmatprep.subr.bf16.mxu0 %v1159
    %1485 = vmatpush1.bf16.msra.mxu0 %v1158
    %1486 = vmatprep.subr.bf16.mxu0 %v1163
    %1487 = vmatpush1.bf16.msra.mxu0 %v1162
    %1488 = vmatprep.subr.bf16.mxu0 %v1167
    %1489 = vmatpush1.bf16.msra.mxu0 %v1166
    %1490 = vmatprep.subr.bf16.mxu0 %v1171
    %1491 = vmatpush1.bf16.msra.mxu0 %v1170
    %1492 = vmatprep.mubr.bf16.mxu0 %v386
    %1493 = vmatmul.mubr.bf16.gmra.mrb[0].mxu0 %v385
    %v1494 = vpop.f32.mrb[0].mxu0
    %v1495 = vadd.f32 %v1454, %v1494
    %v1496 = vpop.f32.mrb[0].mxu0
    %v1497 = vadd.f32 %v1456, %v1496
    %v1498 = vpop.f32.mrb[0].mxu0
    %v1499 = vpop.f32.mrb[0].mxu0
    %1500 = vdwg.mxu0
    %1501 = vmatprep.subr.bf16.mxu0 %v1175
    %1502 = vmatpush1.bf16.msra.mxu0 %v1174
    %1503 = vmatprep.subr.bf16.mxu0 0
    %1504 = vmatpush1.bf16.msra.mxu0 0
    %1505 = vmatprep.subr.bf16.mxu0 0
    %1506 = vmatpush1.bf16.msra.mxu0 0
    %1507 = vmatprep.subr.bf16.mxu0 0
    %1508 = vmatpush1.bf16.msra.mxu0 0
    %1509 = vmatprep.subr.bf16.mxu0 0
    %1510 = vmatpush1.bf16.msra.mxu0 0
    %1511 = vmatprep.subr.bf16.mxu0 0
    %1512 = vmatpush1.bf16.msra.mxu0 0
    %1513 = vmatprep.subr.bf16.mxu0 0
    %1514 = vmatpush1.bf16.msra.mxu0 0
    %1515 = vmatprep.subr.bf16.mxu0 0
    %1516 = vmatpush1.bf16.msra.mxu0 0
    %1517 = vmatprep.subr.bf16.mxu0 0
    %1518 = vmatpush1.bf16.msra.mxu0 0
    %1519 = vmatprep.subr.bf16.mxu0 0
    %1520 = vmatpush1.bf16.msra.mxu0 0
    %1521 = vmatprep.subr.bf16.mxu0 0
    %1522 = vmatpush1.bf16.msra.mxu0 0
    %1523 = vmatprep.subr.bf16.mxu0 0
    %1524 = vmatpush1.bf16.msra.mxu0 0
    %1525 = vmatprep.subr.bf16.mxu0 0
    %1526 = vmatpush1.bf16.msra.mxu0 0
    %1527 = vmatprep.subr.bf16.mxu0 0
    %1528 = vmatpush1.bf16.msra.mxu0 0
    %1529 = vmatprep.subr.bf16.mxu0 0
    %1530 = vmatpush1.bf16.msra.mxu0 0
    %1531 = vmatprep.subr.bf16.mxu0 0
    %1532 = vmatpush1.bf16.msra.mxu0 0
    %1533 = vmatprep.mubr.bf16.mxu0 0
    %1534 = vmatmul.mubr.bf16.gmra.mrb[0].mxu0 %v1376
    %v1535 = vpop.f32.mrb[0].mxu0
    %v1536 = vadd.f32 %v1495, %v1535
    %v1537 = vpop.f32.mrb[0].mxu0
    %v1538 = vadd.f32 %v1497, %v1537
    %v1539 = vpop.f32.mrb[0].mxu0
    %v1540 = vpop.f32.mrb[0].mxu0
    %1541 = vdwg.mxu0
    %1542 = vmatprep.subr.bf16.mxu0 %v985
    %1543 = vmatpush1.bf16.msra.mxu0 %v984
    %1544 = vmatprep.subr.bf16.mxu0 %v989
    %1545 = vmatpush1.bf16.msra.mxu0 %v988
    %1546 = vmatprep.subr.bf16.mxu0 %v993
    %1547 = vmatpush1.bf16.msra.mxu0 %v992
    %1548 = vmatprep.subr.bf16.mxu0 %v997
    %1549 = vmatpush1.bf16.msra.mxu0 %v996
    %1550 = vmatprep.subr.bf16.mxu0 %v1001
    %1551 = vmatpush1.bf16.msra.mxu0 %v1000
    %1552 = vmatprep.subr.bf16.mxu0 %v1005
    %1553 = vmatpush1.bf16.msra.mxu0 %v1004
    %1554 = vmatprep.subr.bf16.mxu0 %v1009
    %1555 = vmatpush1.bf16.msra.mxu0 %v1008
    %1556 = vmatprep.subr.bf16.mxu0 %v1013
    %1557 = vmatpush1.bf16.msra.mxu0 %v1012
    %1558 = vmatprep.subr.bf16.mxu0 %v1017
    %1559 = vmatpush1.bf16.msra.mxu0 %v1016
    %1560 = vmatprep.subr.bf16.mxu0 %v1021
    %1561 = vmatpush1.bf16.msra.mxu0 %v1020
    %1562 = vmatprep.subr.bf16.mxu0 %v1025
    %1563 = vmatpush1.bf16.msra.mxu0 %v1024
    %1564 = vmatprep.subr.bf16.mxu0 %v1029
    %1565 = vmatpush1.bf16.msra.mxu0 %v1028
    %1566 = vmatprep.subr.bf16.mxu0 %v1033
    %1567 = vmatpush1.bf16.msra.mxu0 %v1032
    %1568 = vmatprep.subr.bf16.mxu0 %v1037
    %1569 = vmatpush1.bf16.msra.mxu0 %v1036
    %1570 = vmatprep.subr.bf16.mxu0 %v1041
    %1571 = vmatpush1.bf16.msra.mxu0 %v1040
    %1572 = vmatprep.subr.bf16.mxu0 %v1045
    %1573 = vmatpush1.bf16.msra.mxu0 %v1044
    %1574 = vmatprep.mubr.bf16.mxu0 %v382
    %1575 = vmatmul.mubr.bf16.gmra.mrb[0].mxu0 %v381
    %v1576 = vpop.f32.mrb[0].mxu0
    %v1577 = vadd.f32 %v364, %v1576
    %v1578 = vpop.f32.mrb[0].mxu0
    %v1579 = vadd.f32 %v366, %v1578
    %v1580 = vpop.f32.mrb[0].mxu0
    %v1581 = vpop.f32.mrb[0].mxu0
    %1582 = vdwg.mxu0
    %1583 = vmatprep.subr.bf16.mxu0 %v1049
    %1584 = vmatpush1.bf16.msra.mxu0 %v1048
    %1585 = vmatprep.subr.bf16.mxu0 %v1053
    %1586 = vmatpush1.bf16.msra.mxu0 %v1052
    %1587 = vmatprep.subr.bf16.mxu0 %v1057
    %1588 = vmatpush1.bf16.msra.mxu0 %v1056
    %1589 = vmatprep.subr.bf16.mxu0 %v1061
    %1590 = vmatpush1.bf16.msra.mxu0 %v1060
    %1591 = vmatprep.subr.bf16.mxu0 %v1065
    %1592 = vmatpush1.bf16.msra.mxu0 %v1064
    %1593 = vmatprep.subr.bf16.mxu0 %v1069
    %1594 = vmatpush1.bf16.msra.mxu0 %v1068
    %1595 = vmatprep.subr.bf16.mxu0 %v1073
    %1596 = vmatpush1.bf16.msra.mxu0 %v1072
    %1597 = vmatprep.subr.bf16.mxu0 %v1077
    %1598 = vmatpush1.bf16.msra.mxu0 %v1076
    %1599 = vmatprep.subr.bf16.mxu0 %v1081
    %1600 = vmatpush1.bf16.msra.mxu0 %v1080
    %1601 = vmatprep.subr.bf16.mxu0 %v1085
    %1602 = vmatpush1.bf16.msra.mxu0 %v1084
    %1603 = vmatprep.subr.bf16.mxu0 %v1089
    %1604 = vmatpush1.bf16.msra.mxu0 %v1088
    %1605 = vmatprep.subr.bf16.mxu0 %v1093
    %1606 = vmatpush1.bf16.msra.mxu0 %v1092
    %1607 = vmatprep.subr.bf16.mxu0 %v1097
    %1608 = vmatpush1.bf16.msra.mxu0 %v1096
    %1609 = vmatprep.subr.bf16.mxu0 %v1101
    %1610 = vmatpush1.bf16.msra.mxu0 %v1100
    %1611 = vmatprep.subr.bf16.mxu0 %v1105
    %1612 = vmatpush1.bf16.msra.mxu0 %v1104
    %1613 = vmatprep.subr.bf16.mxu0 %v1109
    %1614 = vmatpush1.bf16.msra.mxu0 %v1108
    %1615 = vmatprep.mubr.bf16.mxu0 %v384
    %1616 = vmatmul.mubr.bf16.gmra.mrb[0].mxu0 %v383
    %v1617 = vpop.f32.mrb[0].mxu0
    %v1618 = vadd.f32 %v1577, %v1617
    %v1619 = vpop.f32.mrb[0].mxu0
    %v1620 = vadd.f32 %v1579, %v1619
    %v1621 = vpop.f32.mrb[0].mxu0
    %v1622 = vpop.f32.mrb[0].mxu0
    %1623 = vdwg.mxu0
    %1624 = vmatprep.subr.bf16.mxu0 %v1113
    %1625 = vmatpush1.bf16.msra.mxu0 %v1112
    %1626 = vmatprep.subr.bf16.mxu0 %v1117
    %1627 = vmatpush1.bf16.msra.mxu0 %v1116
    %1628 = vmatprep.subr.bf16.mxu0 %v1121
    %1629 = vmatpush1.bf16.msra.mxu0 %v1120
    %1630 = vmatprep.subr.bf16.mxu0 %v1125
    %1631 = vmatpush1.bf16.msra.mxu0 %v1124
    %1632 = vmatprep.subr.bf16.mxu0 %v1129
    %1633 = vmatpush1.bf16.msra.mxu0 %v1128
    %1634 = vmatprep.subr.bf16.mxu0 %v1133
    %1635 = vmatpush1.bf16.msra.mxu0 %v1132
    %1636 = vmatprep.subr.bf16.mxu0 %v1137
    %1637 = vmatpush1.bf16.msra.mxu0 %v1136
    %1638 = vmatprep.subr.bf16.mxu0 %v1141
    %1639 = vmatpush1.bf16.msra.mxu0 %v1140
    %1640 = vmatprep.subr.bf16.mxu0 %v1145
    %1641 = vmatpush1.bf16.msra.mxu0 %v1144
    %1642 = vmatprep.subr.bf16.mxu0 %v1149
    %1643 = vmatpush1.bf16.msra.mxu0 %v1148
    %1644 = vmatprep.subr.bf16.mxu0 %v1153
    %1645 = vmatpush1.bf16.msra.mxu0 %v1152
    %1646 = vmatprep.subr.bf16.mxu0 %v1157
    %1647 = vmatpush1.bf16.msra.mxu0 %v1156
    %1648 = vmatprep.subr.bf16.mxu0 %v1161
    %1649 = vmatpush1.bf16.msra.mxu0 %v1160
    %1650 = vmatprep.subr.bf16.mxu0 %v1165
    %1651 = vmatpush1.bf16.msra.mxu0 %v1164
    %1652 = vmatprep.subr.bf16.mxu0 %v1169
    %1653 = vmatpush1.bf16.msra.mxu0 %v1168
    %1654 = vmatprep.subr.bf16.mxu0 %v1173
    %1655 = vmatpush1.bf16.msra.mxu0 %v1172
    %1656 = vmatprep.mubr.bf16.mxu0 %v386
    %1657 = vmatmul.mubr.bf16.gmra.mrb[0].mxu0 %v385
    %v1658 = vpop.f32.mrb[0].mxu0
    %v1659 = vadd.f32 %v1618, %v1658
    %v1660 = vpop.f32.mrb[0].mxu0
    %v1661 = vadd.f32 %v1620, %v1660
    %v1662 = vpop.f32.mrb[0].mxu0
    %v1663 = vpop.f32.mrb[0].mxu0
    %1664 = vdwg.mxu0
    %1665 = vmatprep.subr.bf16.mxu0 %v1177
    %1666 = vmatpush1.bf16.msra.mxu0 %v1176
    %1667 = vmatprep.subr.bf16.mxu0 0
    %1668 = vmatpush1.bf16.msra.mxu0 0
    %1669 = vmatprep.subr.bf16.mxu0 0
    %1670 = vmatpush1.bf16.msra.mxu0 0
    %1671 = vmatprep.subr.bf16.mxu0 0
    %1672 = vmatpush1.bf16.msra.mxu0 0
    %1673 = vmatprep.subr.bf16.mxu0 0
    %1674 = vmatpush1.bf16.msra.mxu0 0
    %1675 = vmatprep.subr.bf16.mxu0 0
    %1676 = vmatpush1.bf16.msra.mxu0 0
    %1677 = vmatprep.subr.bf16.mxu0 0
    %1678 = vmatpush1.bf16.msra.mxu0 0
    %1679 = vmatprep.subr.bf16.mxu0 0
    %1680 = vmatpush1.bf16.msra.mxu0 0
    %1681 = vmatprep.subr.bf16.mxu0 0
    %1682 = vmatpush1.bf16.msra.mxu0 0
    %1683 = vmatprep.subr.bf16.mxu0 0
    %1684 = vmatpush1.bf16.msra.mxu0 0
    %1685 = vmatprep.subr.bf16.mxu0 0
    %1686 = vmatpush1.bf16.msra.mxu0 0
    %1687 = vmatprep.subr.bf16.mxu0 0
    %1688 = vmatpush1.bf16.msra.mxu0 0
    %1689 = vmatprep.subr.bf16.mxu0 0
    %1690 = vmatpush1.bf16.msra.mxu0 0
    %1691 = vmatprep.subr.bf16.mxu0 0
    %1692 = vmatpush1.bf16.msra.mxu0 0
    %1693 = vmatprep.subr.bf16.mxu0 0
    %1694 = vmatpush1.bf16.msra.mxu0 0
    %1695 = vmatprep.subr.bf16.mxu0 0
    %1696 = vmatpush1.bf16.msra.mxu0 0
    %1697 = vmatprep.mubr.bf16.mxu0 0
    %1698 = vmatmul.mubr.bf16.gmra.mrb[0].mxu0 %v1376
    %v1699 = vpop.f32.mrb[0].mxu0
    %v1700 = vadd.f32 %v1659, %v1699
    %v1701 = vpop.f32.mrb[0].mxu0
    %v1702 = vadd.f32 %v1661, %v1701
    %v1703 = vpop.f32.mrb[0].mxu0
    %v1704 = vpop.f32.mrb[0].mxu0
    %1705 = vdwg.mxu0
    %v1706 = vld [vmem:[%s5] sm:$0xf]
    %v1708 = vlaneseq
    %v1709 = vshrl.u32 %v1708, 7
    %v1710 = vsub.s32 0, %v1709
    %v1711 = vrot.slane %v1706, %v1710
    %v1712 = vlaneseq
    %v1713 = vshrl.u32 %v1712, 7
    %v1714 = vsub.s32 1, %v1713
    %v1715 = vrot.slane %v1706, %v1714
    %v1716 = vlaneseq
    %v1717 = vshrl.u32 %v1716, 7
    %v1718 = vsub.s32 2, %v1717
    %v1719 = vrot.slane %v1706, %v1718
    %v1720 = vlaneseq
    %v1721 = vshrl.u32 %v1720, 7
    %v1722 = vsub.s32 3, %v1721
    %v1723 = vrot.slane %v1706, %v1722
    %v1728 = vadd.f32 %v1536, %v1711
    %v1729 = vadd.f32 %v1538, %v1715
    %v1730 = vadd.f32 %v1700, %v1719
    %v1731 = vadd.f32 %v1702, %v1723
    %v1732 = vmax.f32 %v1728, 0.0
    %v1733 = vmax.f32 %v1729, 0.0
    %v1734 = vmax.f32 %v1730, 0.0
    %v1735 = vmax.f32 %v1731, 0.0
    %v1736 = vpack.c.bf16 %v1732, %v1732
    %v1737 = vpack.c.bf16 %v1733, %v1733
    %v1738 = vpack.c.bf16 %v1734, %v1734
    %v1739 = vpack.c.bf16 %v1735, %v1735
    %v1740 = vld [vmem:[%s6] sm:$0xf]
    %v1741 = vld [vmem:[%s6 + $0x4] sm:$0xf]
    %v1742 = vld [vmem:[%s6 + $0x8] sm:$0xf]
    %v1743 = vld [vmem:[%s6 + $0xc] sm:$0xf]
    %v1744 = vld [vmem:[%s6 + $0x10] sm:$0xf]
    %v1745 = vld [vmem:[%s6 + $0x14] sm:$0xf]
    %v1746 = vld [vmem:[%s6 + $0x18] sm:$0xf]
    %v1747 = vld [vmem:[%s6 + $0x1c] sm:$0xf]
    %v1748 = vld [vmem:[%s6 + $0x20] sm:$0xf]
    %v1749 = vld [vmem:[%s6 + $0x24] sm:$0xf]
    %v1750 = vld [vmem:[%s6 + $0x28] sm:$0xf]
    %v1751 = vld [vmem:[%s6 + $0x2c] sm:$0xf]
    %v1752 = vld [vmem:[%s6 + $0x30] sm:$0xf]
    %v1753 = vld [vmem:[%s6 + $0x34] sm:$0xf]
    %v1754 = vld [vmem:[%s6 + $0x38] sm:$0xf]
    %v1755 = vld [vmem:[%s6 + $0x3c] sm:$0xf]
    %v1756 = vld [vmem:[%s6 + $0x40] sm:$0xf]
    %v1757 = vld [vmem:[%s6 + $0x44] sm:$0xf]
    %v1758 = vld [vmem:[%s6 + $0x48] sm:$0xf]
    %v1759 = vld [vmem:[%s6 + $0x4c] sm:$0xf]
    %v1760 = vld [vmem:[%s6 + $0x50] sm:$0xf]
    %v1761 = vld [vmem:[%s6 + $0x54] sm:$0xf]
    %v1762 = vld [vmem:[%s6 + $0x58] sm:$0xf]
    %v1763 = vld [vmem:[%s6 + $0x5c] sm:$0xf]
    %v1764 = vld [vmem:[%s6 + $0x60] sm:$0xf]
    %v1765 = vld [vmem:[%s6 + $0x64] sm:$0xf]
    %v1766 = vld [vmem:[%s6 + $0x68] sm:$0xf]
    %v1767 = vld [vmem:[%s6 + $0x6c] sm:$0xf]
    %v1768 = vld [vmem:[%s6 + $0x70] sm:$0xf]
    %v1769 = vld [vmem:[%s6 + $0x74] sm:$0xf]
    %v1770 = vld [vmem:[%s6 + $0x78] sm:$0xf]
    %v1771 = vld [vmem:[%s6 + $0x7c] sm:$0xf]
    %v1772 = vld [vmem:[%s6 + $0x80] sm:$0xf]
    %v1773 = vld [vmem:[%s6 + $0x84] sm:$0xf]
    %v1774 = vld [vmem:[%s6 + $0x88] sm:$0xf]
    %v1775 = vld [vmem:[%s6 + $0x8c] sm:$0xf]
    %v1776 = vld [vmem:[%s6 + $0x90] sm:$0xf]
    %v1777 = vld [vmem:[%s6 + $0x94] sm:$0xf]
    %v1778 = vld [vmem:[%s6 + $0x98] sm:$0xf]
    %v1779 = vld [vmem:[%s6 + $0x9c] sm:$0xf]
    %v1780 = vld [vmem:[%s6 + $0xa0] sm:$0xf]
    %v1781 = vld [vmem:[%s6 + $0xa4] sm:$0xf]
    %v1782 = vld [vmem:[%s6 + $0xa8] sm:$0xf]
    %v1783 = vld [vmem:[%s6 + $0xac] sm:$0xf]
    %v1784 = vld [vmem:[%s6 + $0xb0] sm:$0xf]
    %v1785 = vld [vmem:[%s6 + $0xb4] sm:$0xf]
    %v1786 = vld [vmem:[%s6 + $0xb8] sm:$0xf]
    %v1787 = vld [vmem:[%s6 + $0xbc] sm:$0xf]
    %v1788 = vld [vmem:[%s6 + $0xc0] sm:$0xf]
    %v1789 = vld [vmem:[%s6 + $0xc4] sm:$0xf]
    %v1790 = vld [vmem:[%s7] sm:$0x1]
    %v1792 = vlaneseq
    %v1793 = vshrl.u32 %v1792, 7
    %v1794 = vsub.s32 0, %v1793
    %v1795 = vrot.slane %v1790, %v1794
    %v1847 = vunpack.c.l.b16 %v1740
    %v1848 = vunpack.c.l.b16 %v1741
    %v1849 = vunpack.c.l.b16 %v1742
    %v1850 = vunpack.c.l.b16 %v1743
    %v1851 = vunpack.c.l.b16 %v1744
    %v1852 = vunpack.c.l.b16 %v1745
    %v1853 = vunpack.c.l.b16 %v1746
    %v1854 = vunpack.c.l.b16 %v1747
    %v1855 = vunpack.c.l.b16 %v1748
    %v1856 = vunpack.c.l.b16 %v1749
    %v1857 = vunpack.c.l.b16 %v1750
    %v1858 = vunpack.c.l.b16 %v1751
    %v1859 = vunpack.c.l.b16 %v1752
    %v1860 = vunpack.c.l.b16 %v1753
    %v1861 = vunpack.c.l.b16 %v1754
    %v1862 = vunpack.c.l.b16 %v1755
    %v1863 = vunpack.c.l.b16 %v1756
    %v1864 = vunpack.c.l.b16 %v1757
    %v1865 = vunpack.c.l.b16 %v1758
    %v1866 = vunpack.c.l.b16 %v1759
    %v1867 = vunpack.c.l.b16 %v1760
    %v1868 = vunpack.c.l.b16 %v1761
    %v1869 = vunpack.c.l.b16 %v1762
    %v1870 = vunpack.c.l.b16 %v1763
    %v1871 = vunpack.c.l.b16 %v1764
    %v1872 = vunpack.c.l.b16 %v1765
    %v1873 = vunpack.c.l.b16 %v1766
    %v1874 = vunpack.c.l.b16 %v1767
    %v1875 = vunpack.c.l.b16 %v1768
    %v1876 = vunpack.c.l.b16 %v1769
    %v1877 = vunpack.c.l.b16 %v1770
    %v1878 = vunpack.c.l.b16 %v1771
    %v1879 = vunpack.c.l.b16 %v1772
    %v1880 = vunpack.c.l.b16 %v1773
    %v1881 = vunpack.c.l.b16 %v1774
    %v1882 = vunpack.c.l.b16 %v1775
    %v1883 = vunpack.c.l.b16 %v1776
    %v1884 = vunpack.c.l.b16 %v1777
    %v1885 = vunpack.c.l.b16 %v1778
    %v1886 = vunpack.c.l.b16 %v1779
    %v1887 = vunpack.c.l.b16 %v1780
    %v1888 = vunpack.c.l.b16 %v1781
    %v1889 = vunpack.c.l.b16 %v1782
    %v1890 = vunpack.c.l.b16 %v1783
    %v1891 = vunpack.c.l.b16 %v1784
    %v1892 = vunpack.c.l.b16 %v1785
    %v1893 = vunpack.c.l.b16 %v1786
    %v1894 = vunpack.c.l.b16 %v1787
    %v1895 = vunpack.c.l.b16 %v1788
    %v1896 = vunpack.c.l.b16 %v1789
    %v1897 = vpack.c.b16 %v1848, %v1847
    %v1898 = vpack.c.b16 %v1850, %v1849
    %v1899 = vpack.c.b16 %v1852, %v1851
    %v1900 = vpack.c.b16 %v1854, %v1853
    %v1901 = vpack.c.b16 %v1856, %v1855
    %v1902 = vpack.c.b16 %v1858, %v1857
    %v1903 = vpack.c.b16 %v1860, %v1859
    %v1904 = vpack.c.b16 %v1862, %v1861
    %v1905 = vpack.c.b16 %v1864, %v1863
    %v1906 = vpack.c.b16 %v1866, %v1865
    %v1907 = vpack.c.b16 %v1868, %v1867
    %v1908 = vpack.c.b16 %v1870, %v1869
    %v1909 = vpack.c.b16 %v1872, %v1871
    %v1910 = vpack.c.b16 %v1874, %v1873
    %v1911 = vpack.c.b16 %v1876, %v1875
    %v1912 = vpack.c.b16 %v1878, %v1877
    %v1913 = vpack.c.b16 %v1880, %v1879
    %v1914 = vpack.c.b16 %v1882, %v1881
    %v1915 = vpack.c.b16 %v1884, %v1883
    %v1916 = vpack.c.b16 %v1886, %v1885
    %v1917 = vpack.c.b16 %v1888, %v1887
    %v1918 = vpack.c.b16 %v1890, %v1889
    %v1919 = vpack.c.b16 %v1892, %v1891
    %v1920 = vpack.c.b16 %v1894, %v1893
    %v1921 = vpack.c.b16 %v1896, %v1895
    %v1948 = vsel %vm1374, %v1739, 0
    %1950 = vmatprep.subr.bf16.mxu0 0
    %1951 = vmatpush1.bf16.msra.mxu0 %v1897
    %1952 = vmatprep.subr.bf16.mxu0 0
    %1953 = vmatpush1.bf16.msra.mxu0 %v1898
    %1954 = vmatprep.subr.bf16.mxu0 0
    %1955 = vmatpush1.bf16.msra.mxu0 %v1899
    %1956 = vmatprep.subr.bf16.mxu0 0
    %1957 = vmatpush1.bf16.msra.mxu0 %v1900
    %1958 = vmatprep.subr.bf16.mxu0 0
    %1959 = vmatpush1.bf16.msra.mxu0 %v1901
    %1960 = vmatprep.subr.bf16.mxu0 0
    %1961 = vmatpush1.bf16.msra.mxu0 %v1902
    %1962 = vmatprep.subr.bf16.mxu0 0
    %1963 = vmatpush1.bf16.msra.mxu0 %v1903
    %1964 = vmatprep.subr.bf16.mxu0 0
    %1965 = vmatpush1.bf16.msra.mxu0 %v1904
    %1966 = vmatprep.subr.bf16.mxu0 0
    %1967 = vmatpush1.bf16.msra.mxu0 %v1905
    %1968 = vmatprep.subr.bf16.mxu0 0
    %1969 = vmatpush1.bf16.msra.mxu0 %v1906
    %1970 = vmatprep.subr.bf16.mxu0 0
    %1971 = vmatpush1.bf16.msra.mxu0 %v1907
    %1972 = vmatprep.subr.bf16.mxu0 0
    %1973 = vmatpush1.bf16.msra.mxu0 %v1908
    %1974 = vmatprep.subr.bf16.mxu0 0
    %1975 = vmatpush1.bf16.msra.mxu0 %v1909
    %1976 = vmatprep.subr.bf16.mxu0 0
    %1977 = vmatpush1.bf16.msra.mxu0 %v1910
    %1978 = vmatprep.subr.bf16.mxu0 0
    %1979 = vmatpush1.bf16.msra.mxu0 %v1911
    %1980 = vmatprep.subr.bf16.mxu0 0
    %1981 = vmatpush1.bf16.msra.mxu0 %v1912
    %1982 = vmatprep.mubr.bf16.mxu0 %v1737
    %1983 = vmatmul.mubr.bf16.gmra.mrb[0].mxu0 %v1736
    %v1984 = vpop.f32.mrb[0].mxu0
    %v1985 = vadd.f32 %v1795, %v1984
    %v1986 = vpop.f32.mrb[0].mxu0
    %v1987 = vpop.f32.mrb[0].mxu0
    %v1988 = vpop.f32.mrb[0].mxu0
    %1989 = vdwg.mxu0
    %1990 = vmatprep.subr.bf16.mxu0 0
    %1991 = vmatpush1.bf16.msra.mxu0 %v1913
    %1992 = vmatprep.subr.bf16.mxu0 0
    %1993 = vmatpush1.bf16.msra.mxu0 %v1914
    %1994 = vmatprep.subr.bf16.mxu0 0
    %1995 = vmatpush1.bf16.msra.mxu0 %v1915
    %1996 = vmatprep.subr.bf16.mxu0 0
    %1997 = vmatpush1.bf16.msra.mxu0 %v1916
    %1998 = vmatprep.subr.bf16.mxu0 0
    %1999 = vmatpush1.bf16.msra.mxu0 %v1917
    %2000 = vmatprep.subr.bf16.mxu0 0
    %2001 = vmatpush1.bf16.msra.mxu0 %v1918
    %2002 = vmatprep.subr.bf16.mxu0 0
    %2003 = vmatpush1.bf16.msra.mxu0 %v1919
    %2004 = vmatprep.subr.bf16.mxu0 0
    %2005 = vmatpush1.bf16.msra.mxu0 %v1920
    %2006 = vmatprep.subr.bf16.mxu0 0
    %2007 = vmatpush1.bf16.msra.mxu0 %v1921
    %2008 = vmatprep.subr.bf16.mxu0 0
    %2009 = vmatpush1.bf16.msra.mxu0 0
    %2010 = vmatprep.subr.bf16.mxu0 0
    %2011 = vmatpush1.bf16.msra.mxu0 0
    %2012 = vmatprep.subr.bf16.mxu0 0
    %2013 = vmatpush1.bf16.msra.mxu0 0
    %2014 = vmatprep.subr.bf16.mxu0 0
    %2015 = vmatpush1.bf16.msra.mxu0 0
    %2016 = vmatprep.subr.bf16.mxu0 0
    %2017 = vmatpush1.bf16.msra.mxu0 0
    %2018 = vmatprep.subr.bf16.mxu0 0
    %2019 = vmatpush1.bf16.msra.mxu0 0
    %2020 = vmatprep.subr.bf16.mxu0 0
    %2021 = vmatpush1.bf16.msra.mxu0 0
    %2022 = vmatprep.mubr.bf16.mxu0 %v1948
    %2023 = vmatmul.mubr.bf16.gmra.mrb[0].mxu0 %v1738
    %v2024 = vpop.f32.mrb[0].mxu0
    %v2025 = vadd.f32 %v1985, %v2024
    %v2026 = vpop.f32.mrb[0].mxu0
    %v2027 = vpop.f32.mrb[0].mxu0
    %v2028 = vpop.f32.mrb[0].mxu0
    %2029 = vdwg.mxu0
    %2030 = vst [vmem:[#allocation4] sm:$0xff] %v2025
    %v2031 = vmul.f32 %v2025, 0.5
    %v2032 = vmul.f32 %v2031, 1.442695
    %v2033 = vpow.pop %v2032
    %2035 = vrot.lane.b32.xlu0 %v2033, 64
    %v2036 = vpop.permute.xlu0 %2035
    %v2038 = vmul.f32 %v54, %v2036
    %v2039 = vadd.f32 %v2025, %v2038
    %v2040 = vpack.c.bf16 %v2039, %v2039
    %v2041 = vld [vmem:[%s8] sm:$0xff]
    %v2042 = vld [vmem:[%s8 + $0x8] sm:$0xff]
    %v2043 = vld [vmem:[%s8 + $0x10] sm:$0xff]
    %v2044 = vld [vmem:[%s8 + $0x18] sm:$0xff]
    %v2045 = vld [vmem:[%s8 + $0x20] sm:$0xff]
    %v2046 = vld [vmem:[%s8 + $0x28] sm:$0xff]
    %v2047 = vld [vmem:[%s8 + $0x30] sm:$0xff]
    %v2048 = vld [vmem:[%s8 + $0x38] sm:$0xff]
    %v2049 = vld [vmem:[%s8 + $0x40] sm:$0xff]
    %v2050 = vld [vmem:[%s8 + $0x48] sm:$0xff]
    %v2051 = vld [vmem:[%s8 + $0x50] sm:$0xff]
    %v2052 = vld [vmem:[%s8 + $0x58] sm:$0xff]
    %v2053 = vld [vmem:[%s8 + $0x60] sm:$0xff]
    %v2054 = vld [vmem:[%s8 + $0x68] sm:$0xff]
    %v2055 = vld [vmem:[%s8 + $0x70] sm:$0xff]
    %v2056 = vld [vmem:[%s8 + $0x78] sm:$0xff]
    %v2057 = vld [vmem:[%s9] sm:$0xff]
    %v2058 = vld [vmem:[%s9 + $0x8] sm:$0xff]
    %v2059 = vld [vmem:[%s9 + $0x10] sm:$0x11]
    %v2060 = vld [vmem:[%s9 + $0x18] sm:$0x11]
    %v2065 = vunpack.c.l.b16 %v2057
    %v2066 = vunpack.c.h.b16 %v2057
    %v2067 = vunpack.c.l.b16 %v2058
    %v2068 = vunpack.c.h.b16 %v2058
    %v2069 = vunpack.c.l.b16 %v2059
    %v2070 = vunpack.c.h.b16 %v2059
    %v2071 = vunpack.c.l.b16 %v2060
    %v2072 = vunpack.c.h.b16 %v2060
    %v2073 = vpack.c.b16 %v2069, %v2065
    %v2074 = vpack.c.b16 %v2070, %v2066
    %v2075 = vpack.c.b16 %v2071, %v2067
    %v2076 = vpack.c.b16 %v2072, %v2068
    %v2078 = vsel %vm275, %v2073, 0
    %v2081 = vsel %vm275, %v2074, 0
    %v2084 = vsel %vm275, %v2075, 0
    %v2087 = vsel %vm275, %v2076, 0
    %2089 = vmatprep.subr.bf16.mxu0 %v2081
    %2090 = vmatpush1.bf16.msra.mxu0 %v2078
    %2091 = vmatprep.subr.bf16.mxu0 0
    %2092 = vmatpush1.bf16.msra.mxu0 0
    %2093 = vmatprep.subr.bf16.mxu0 0
    %2094 = vmatpush1.bf16.msra.mxu0 0
    %2095 = vmatprep.subr.bf16.mxu0 0
    %2096 = vmatpush1.bf16.msra.mxu0 0
    %2097 = vmatprep.subr.bf16.mxu0 0
    %2098 = vmatpush1.bf16.msra.mxu0 0
    %2099 = vmatprep.subr.bf16.mxu0 0
    %2100 = vmatpush1.bf16.msra.mxu0 0
    %2101 = vmatprep.subr.bf16.mxu0 0
    %2102 = vmatpush1.bf16.msra.mxu0 0
    %2103 = vmatprep.subr.bf16.mxu0 0
    %2104 = vmatpush1.bf16.msra.mxu0 0
    %2105 = vmatprep.subr.bf16.mxu0 0
    %2106 = vmatpush1.bf16.msra.mxu0 0
    %2107 = vmatprep.subr.bf16.mxu0 0
    %2108 = vmatpush1.bf16.msra.mxu0 0
    %2109 = vmatprep.subr.bf16.mxu0 0
    %2110 = vmatpush1.bf16.msra.mxu0 0
    %2111 = vmatprep.subr.bf16.mxu0 0
    %2112 = vmatpush1.bf16.msra.mxu0 0
    %2113 = vmatprep.subr.bf16.mxu0 0
    %2114 = vmatpush1.bf16.msra.mxu0 0
    %2115 = vmatprep.subr.bf16.mxu0 0
    %2116 = vmatpush1.bf16.msra.mxu0 0
    %2117 = vmatprep.subr.bf16.mxu0 0
    %2118 = vmatpush1.bf16.msra.mxu0 0
    %2119 = vmatprep.subr.bf16.mxu0 0
    %2120 = vmatpush1.bf16.msra.mxu0 0
    %2121 = vmatprep.mubr.bf16.mxu0 0
    %2122 = vmatmul.mubr.bf16.gmra.mrb[0].mxu0 %v273
    %v2123 = vpop.f32.mrb[0].mxu0
    %v2124 = vadd.f32 0.0, %v2123
    %v2125 = vpop.f32.mrb[0].mxu0
    %v2126 = vadd.f32 0.0, %v2125
    %v2127 = vpop.f32.mrb[0].mxu0
    %v2128 = vpop.f32.mrb[0].mxu0
    %2129 = vdwg.mxu0
    %2130 = vmatprep.subr.bf16.mxu0 %v2087
    %2131 = vmatpush1.bf16.msra.mxu0 %v2084
    %2132 = vmatprep.subr.bf16.mxu0 0
    %2133 = vmatpush1.bf16.msra.mxu0 0
    %2134 = vmatprep.subr.bf16.mxu0 0
    %2135 = vmatpush1.bf16.msra.mxu0 0
    %2136 = vmatprep.subr.bf16.mxu0 0
    %2137 = vmatpush1.bf16.msra.mxu0 0
    %2138 = vmatprep.subr.bf16.mxu0 0
    %2139 = vmatpush1.bf16.msra.mxu0 0
    %2140 = vmatprep.subr.bf16.mxu0 0
    %2141 = vmatpush1.bf16.msra.mxu0 0
    %2142 = vmatprep.subr.bf16.mxu0 0
    %2143 = vmatpush1.bf16.msra.mxu0 0
    %2144 = vmatprep.subr.bf16.mxu0 0
    %2145 = vmatpush1.bf16.msra.mxu0 0
    %2146 = vmatprep.subr.bf16.mxu0 0
    %2147 = vmatpush1.bf16.msra.mxu0 0
    %2148 = vmatprep.subr.bf16.mxu0 0
    %2149 = vmatpush1.bf16.msra.mxu0 0
    %2150 = vmatprep.subr.bf16.mxu0 0
    %2151 = vmatpush1.bf16.msra.mxu0 0
    %2152 = vmatprep.subr.bf16.mxu0 0
    %2153 = vmatpush1.bf16.msra.mxu0 0
    %2154 = vmatprep.subr.bf16.mxu0 0
    %2155 = vmatpush1.bf16.msra.mxu0 0
    %2156 = vmatprep.subr.bf16.mxu0 0
    %2157 = vmatpush1.bf16.msra.mxu0 0
    %2158 = vmatprep.subr.bf16.mxu0 0
    %2159 = vmatpush1.bf16.msra.mxu0 0
    %2160 = vmatprep.subr.bf16.mxu0 0
    %2161 = vmatpush1.bf16.msra.mxu0 0
    %2162 = vmatprep.mubr.bf16.mxu0 0
    %2163 = vmatmul.mubr.bf16.gmra.mrb[0].mxu0 %v273
    %v2164 = vpop.f32.mrb[0].mxu0
    %v2165 = vadd.f32 0.0, %v2164
    %v2166 = vpop.f32.mrb[0].mxu0
    %v2167 = vadd.f32 0.0, %v2166
    %v2168 = vpop.f32.mrb[0].mxu0
    %v2169 = vpop.f32.mrb[0].mxu0
    %2170 = vdwg.mxu0
    %v2187 = vunpack.c.l.b16 %v2041
    %v2188 = vunpack.c.h.b16 %v2041
    %v2189 = vunpack.c.l.b16 %v2042
    %v2190 = vunpack.c.h.b16 %v2042
    %v2191 = vunpack.c.l.b16 %v2043
    %v2192 = vunpack.c.h.b16 %v2043
    %v2193 = vunpack.c.l.b16 %v2044
    %v2194 = vunpack.c.h.b16 %v2044
    %v2195 = vunpack.c.l.b16 %v2045
    %v2196 = vunpack.c.h.b16 %v2045
    %v2197 = vunpack.c.l.b16 %v2046
    %v2198 = vunpack.c.h.b16 %v2046
    %v2199 = vunpack.c.l.b16 %v2047
    %v2200 = vunpack.c.h.b16 %v2047
    %v2201 = vunpack.c.l.b16 %v2048
    %v2202 = vunpack.c.h.b16 %v2048
    %v2203 = vunpack.c.l.b16 %v2049
    %v2204 = vunpack.c.h.b16 %v2049
    %v2205 = vunpack.c.l.b16 %v2050
    %v2206 = vunpack.c.h.b16 %v2050
    %v2207 = vunpack.c.l.b16 %v2051
    %v2208 = vunpack.c.h.b16 %v2051
    %v2209 = vunpack.c.l.b16 %v2052
    %v2210 = vunpack.c.h.b16 %v2052
    %v2211 = vunpack.c.l.b16 %v2053
    %v2212 = vunpack.c.h.b16 %v2053
    %v2213 = vunpack.c.l.b16 %v2054
    %v2214 = vunpack.c.h.b16 %v2054
    %v2215 = vunpack.c.l.b16 %v2055
    %v2216 = vunpack.c.h.b16 %v2055
    %v2217 = vunpack.c.l.b16 %v2056
    %v2218 = vunpack.c.h.b16 %v2056
    %v2219 = vpack.c.b16 %v2191, %v2187
    %v2220 = vpack.c.b16 %v2192, %v2188
    %v2221 = vpack.c.b16 %v2193, %v2189
    %v2222 = vpack.c.b16 %v2194, %v2190
    %v2223 = vpack.c.b16 %v2199, %v2195
    %v2224 = vpack.c.b16 %v2200, %v2196
    %v2225 = vpack.c.b16 %v2201, %v2197
    %v2226 = vpack.c.b16 %v2202, %v2198
    %v2227 = vpack.c.b16 %v2207, %v2203
    %v2228 = vpack.c.b16 %v2208, %v2204
    %v2229 = vpack.c.b16 %v2209, %v2205
    %v2230 = vpack.c.b16 %v2210, %v2206
    %v2231 = vpack.c.b16 %v2215, %v2211
    %v2232 = vpack.c.b16 %v2216, %v2212
    %v2233 = vpack.c.b16 %v2217, %v2213
    %v2234 = vpack.c.b16 %v2218, %v2214
    %vm2251 = vcmask 523264
    %v2253 = vsel %vm2251, %v2040, 0
    %2255 = vmatprep.subr.bf16.mxu0 %v2220
    %2256 = vmatpush1.bf16.msra.mxu0 %v2219
    %2257 = vmatprep.subr.bf16.mxu0 %v2224
    %2258 = vmatpush1.bf16.msra.mxu0 %v2223
    %2259 = vmatprep.subr.bf16.mxu0 %v2228
    %2260 = vmatpush1.bf16.msra.mxu0 %v2227
    %2261 = vmatprep.subr.bf16.mxu0 %v2232
    %2262 = vmatpush1.bf16.msra.mxu0 %v2231
    %2263 = vmatprep.subr.bf16.mxu0 0
    %2264 = vmatpush1.bf16.msra.mxu0 0
    %2265 = vmatprep.subr.bf16.mxu0 0
    %2266 = vmatpush1.bf16.msra.mxu0 0
    %2267 = vmatprep.subr.bf16.mxu0 0
    %2268 = vmatpush1.bf16.msra.mxu0 0
    %2269 = vmatprep.subr.bf16.mxu0 0
    %2270 = vmatpush1.bf16.msra.mxu0 0
    %2271 = vmatprep.subr.bf16.mxu0 0
    %2272 = vmatpush1.bf16.msra.mxu0 0
    %2273 = vmatprep.subr.bf16.mxu0 0
    %2274 = vmatpush1.bf16.msra.mxu0 0
    %2275 = vmatprep.subr.bf16.mxu0 0
    %2276 = vmatpush1.bf16.msra.mxu0 0
    %2277 = vmatprep.subr.bf16.mxu0 0
    %2278 = vmatpush1.bf16.msra.mxu0 0
    %2279 = vmatprep.subr.bf16.mxu0 0
    %2280 = vmatpush1.bf16.msra.mxu0 0
    %2281 = vmatprep.subr.bf16.mxu0 0
    %2282 = vmatpush1.bf16.msra.mxu0 0
    %2283 = vmatprep.subr.bf16.mxu0 0
    %2284 = vmatpush1.bf16.msra.mxu0 0
    %2285 = vmatprep.subr.bf16.mxu0 0
    %2286 = vmatpush1.bf16.msra.mxu0 0
    %2287 = vmatprep.mubr.bf16.mxu0 0
    %2288 = vmatmul.mubr.bf16.gmra.mrb[0].mxu0 %v2253
    %v2289 = vpop.f32.mrb[0].mxu0
    %v2290 = vadd.f32 %v2124, %v2289
    %v2291 = vpop.f32.mrb[0].mxu0
    %v2292 = vadd.f32 %v2126, %v2291
    %v2293 = vpop.f32.mrb[0].mxu0
    %v2294 = vpop.f32.mrb[0].mxu0
    %2295 = vdwg.mxu0
    %2296 = vmatprep.subr.bf16.mxu0 %v2222
    %2297 = vmatpush1.bf16.msra.mxu0 %v2221
    %2298 = vmatprep.subr.bf16.mxu0 %v2226
    %2299 = vmatpush1.bf16.msra.mxu0 %v2225
    %2300 = vmatprep.subr.bf16.mxu0 %v2230
    %2301 = vmatpush1.bf16.msra.mxu0 %v2229
    %2302 = vmatprep.subr.bf16.mxu0 %v2234
    %2303 = vmatpush1.bf16.msra.mxu0 %v2233
    %2304 = vmatprep.subr.bf16.mxu0 0
    %2305 = vmatpush1.bf16.msra.mxu0 0
    %2306 = vmatprep.subr.bf16.mxu0 0
    %2307 = vmatpush1.bf16.msra.mxu0 0
    %2308 = vmatprep.subr.bf16.mxu0 0
    %2309 = vmatpush1.bf16.msra.mxu0 0
    %2310 = vmatprep.subr.bf16.mxu0 0
    %2311 = vmatpush1.bf16.msra.mxu0 0
    %2312 = vmatprep.subr.bf16.mxu0 0
    %2313 = vmatpush1.bf16.msra.mxu0 0
    %2314 = vmatprep.subr.bf16.mxu0 0
    %2315 = vmatpush1.bf16.msra.mxu0 0
    %2316 = vmatprep.subr.bf16.mxu0 0
    %2317 = vmatpush1.bf16.msra.mxu0 0
    %2318 = vmatprep.subr.bf16.mxu0 0
    %2319 = vmatpush1.bf16.msra.mxu0 0
    %2320 = vmatprep.subr.bf16.mxu0 0
    %2321 = vmatpush1.bf16.msra.mxu0 0
    %2322 = vmatprep.subr.bf16.mxu0 0
    %2323 = vmatpush1.bf16.msra.mxu0 0
    %2324 = vmatprep.subr.bf16.mxu0 0
    %2325 = vmatpush1.bf16.msra.mxu0 0
    %2326 = vmatprep.subr.bf16.mxu0 0
    %2327 = vmatpush1.bf16.msra.mxu0 0
    %2328 = vmatprep.mubr.bf16.mxu0 0
    %2329 = vmatmul.mubr.bf16.gmra.mrb[0].mxu0 %v2253
    %v2330 = vpop.f32.mrb[0].mxu0
    %v2331 = vadd.f32 %v2165, %v2330
    %v2332 = vpop.f32.mrb[0].mxu0
    %v2333 = vadd.f32 %v2167, %v2332
    %v2334 = vpop.f32.mrb[0].mxu0
    %v2335 = vpop.f32.mrb[0].mxu0
    %2336 = vdwg.mxu0
    %v2337 = vld [vmem:[%s10] sm:$0xf]
    %v2339 = vlaneseq
    %v2340 = vshrl.u32 %v2339, 7
    %v2341 = vsub.s32 0, %v2340
    %v2342 = vrot.slane %v2337, %v2341
    %v2343 = vlaneseq
    %v2344 = vshrl.u32 %v2343, 7
    %v2345 = vsub.s32 1, %v2344
    %v2346 = vrot.slane %v2337, %v2345
    %v2347 = vlaneseq
    %v2348 = vshrl.u32 %v2347, 7
    %v2349 = vsub.s32 2, %v2348
    %v2350 = vrot.slane %v2337, %v2349
    %v2351 = vlaneseq
    %v2352 = vshrl.u32 %v2351, 7
    %v2353 = vsub.s32 3, %v2352
    %v2354 = vrot.slane %v2337, %v2353
    %v2359 = vadd.f32 %v2290, %v2342
    %v2360 = vadd.f32 %v2292, %v2346
    %v2361 = vadd.f32 %v2331, %v2350
    %v2362 = vadd.f32 %v2333, %v2354
    %v2363 = vmax.f32 %v2359, 0.0
    %v2364 = vmax.f32 %v2360, 0.0
    %v2365 = vmax.f32 %v2361, 0.0
    %v2366 = vmax.f32 %v2362, 0.0
    %v2367 = vpack.c.bf16 %v2363, %v2363
    %v2368 = vpack.c.bf16 %v2364, %v2364
    %v2369 = vpack.c.bf16 %v2365, %v2365
    %v2370 = vpack.c.bf16 %v2366, %v2366
    %v2371 = vld [vmem:[%s11] sm:$0xff]
    %v2372 = vld [vmem:[%s11 + $0x8] sm:$0xff]
    %v2373 = vld [vmem:[%s11 + $0x10] sm:$0xff]
    %v2374 = vld [vmem:[%s11 + $0x18] sm:$0xf]
    %v2375 = vld [vmem:[%s11 + $0x1c] sm:$0xff]
    %v2376 = vld [vmem:[%s11 + $0x24] sm:$0xff]
    %v2377 = vld [vmem:[%s11 + $0x2c] sm:$0xff]
    %v2378 = vld [vmem:[%s11 + $0x34] sm:$0xf]
    %v2379 = vld [vmem:[%s11 + $0x38] sm:$0xff]
    %v2380 = vld [vmem:[%s11 + $0x40] sm:$0xff]
    %v2381 = vld [vmem:[%s11 + $0x48] sm:$0xff]
    %v2382 = vld [vmem:[%s11 + $0x50] sm:$0xf]
    %v2383 = vld [vmem:[%s11 + $0x54] sm:$0xff]
    %v2384 = vld [vmem:[%s11 + $0x5c] sm:$0xff]
    %v2385 = vld [vmem:[%s11 + $0x64] sm:$0xff]
    %v2386 = vld [vmem:[%s11 + $0x6c] sm:$0xf]
    %v2387 = vld [vmem:[%s11 + $0x70] sm:$0xff]
    %v2388 = vld [vmem:[%s11 + $0x78] sm:$0xff]
    %v2389 = vld [vmem:[%s11 + $0x80] sm:$0xff]
    %v2390 = vld [vmem:[%s11 + $0x88] sm:$0xf]
    %v2391 = vld [vmem:[%s11 + $0x8c] sm:$0xff]
    %v2392 = vld [vmem:[%s11 + $0x94] sm:$0xff]
    %v2393 = vld [vmem:[%s11 + $0x9c] sm:$0xff]
    %v2394 = vld [vmem:[%s11 + $0xa4] sm:$0xf]
    %v2395 = vld [vmem:[%s11 + $0xa8] sm:$0xff]
    %v2396 = vld [vmem:[%s11 + $0xb0] sm:$0xff]
    %v2397 = vld [vmem:[%s11 + $0xb8] sm:$0xff]
    %v2398 = vld [vmem:[%s11 + $0xc0] sm:$0xf]
    %v2399 = vld [vmem:[%s11 + $0xc4] sm:$0xff]
    %v2400 = vld [vmem:[%s11 + $0xcc] sm:$0xff]
    %v2401 = vld [vmem:[%s11 + $0xd4] sm:$0xff]
    %v2402 = vld [vmem:[%s11 + $0xdc] sm:$0xf]
    %v2403 = vld [vmem:[%s11 + $0xe0] sm:$0xff]
    %v2404 = vld [vmem:[%s11 + $0xe8] sm:$0xff]
    %v2405 = vld [vmem:[%s11 + $0xf0] sm:$0xff]
    %v2406 = vld [vmem:[%s11 + $0xf8] sm:$0xf]
    %v2407 = vld [vmem:[%s11 + $0xfc] sm:$0xff]
    %v2408 = vld [vmem:[%s11 + $0x104] sm:$0xff]
    %v2409 = vld [vmem:[%s11 + $0x10c] sm:$0xff]
    %v2410 = vld [vmem:[%s11 + $0x114] sm:$0xf]
    %v2411 = vld [vmem:[%s11 + $0x118] sm:$0xff]
    %v2412 = vld [vmem:[%s11 + $0x120] sm:$0xff]
    %v2413 = vld [vmem:[%s11 + $0x128] sm:$0xff]
    %v2414 = vld [vmem:[%s11 + $0x130] sm:$0xf]
    %v2415 = vld [vmem:[%s11 + $0x134] sm:$0xff]
    %v2416 = vld [vmem:[%s11 + $0x13c] sm:$0xff]
    %v2417 = vld [vmem:[%s11 + $0x144] sm:$0xff]
    %v2418 = vld [vmem:[%s11 + $0x14c] sm:$0xf]
    %v2419 = vld [vmem:[%s11 + $0x150] sm:$0xff]
    %v2420 = vld [vmem:[%s11 + $0x158] sm:$0xff]
    %v2421 = vld [vmem:[%s11 + $0x160] sm:$0xff]
    %v2422 = vld [vmem:[%s11 + $0x168] sm:$0xf]
    %v2423 = vld [vmem:[%s11 + $0x16c] sm:$0xff]
    %v2424 = vld [vmem:[%s11 + $0x174] sm:$0xff]
    %v2425 = vld [vmem:[%s11 + $0x17c] sm:$0xff]
    %v2426 = vld [vmem:[%s11 + $0x184] sm:$0xf]
    %v2427 = vld [vmem:[%s11 + $0x188] sm:$0xff]
    %v2428 = vld [vmem:[%s11 + $0x190] sm:$0xff]
    %v2429 = vld [vmem:[%s11 + $0x198] sm:$0xff]
    %v2430 = vld [vmem:[%s11 + $0x1a0] sm:$0xf]
    %v2431 = vld [vmem:[%s11 + $0x1a4] sm:$0xff]
    %v2432 = vld [vmem:[%s11 + $0x1ac] sm:$0xff]
    %v2433 = vld [vmem:[%s11 + $0x1b4] sm:$0xff]
    %v2434 = vld [vmem:[%s11 + $0x1bc] sm:$0xf]
    %v2435 = vld [vmem:[%s11 + $0x1c0] sm:$0xff]
    %v2436 = vld [vmem:[%s11 + $0x1c8] sm:$0xff]
    %v2437 = vld [vmem:[%s11 + $0x1d0] sm:$0xff]
    %v2438 = vld [vmem:[%s11 + $0x1d8] sm:$0xf]
    %v2439 = vld [vmem:[%s11 + $0x1dc] sm:$0xff]
    %v2440 = vld [vmem:[%s11 + $0x1e4] sm:$0xff]
    %v2441 = vld [vmem:[%s11 + $0x1ec] sm:$0xff]
    %v2442 = vld [vmem:[%s11 + $0x1f4] sm:$0xf]
    %v2443 = vld [vmem:[%s11 + $0x1f8] sm:$0xff]
    %v2444 = vld [vmem:[%s11 + $0x200] sm:$0xff]
    %v2445 = vld [vmem:[%s11 + $0x208] sm:$0xff]
    %v2446 = vld [vmem:[%s11 + $0x210] sm:$0xf]
    %v2447 = vld [vmem:[%s11 + $0x214] sm:$0xff]
    %v2448 = vld [vmem:[%s11 + $0x21c] sm:$0xff]
    %v2449 = vld [vmem:[%s11 + $0x224] sm:$0xff]
    %v2450 = vld [vmem:[%s11 + $0x22c] sm:$0xf]
    %v2451 = vld [vmem:[%s11 + $0x230] sm:$0xff]
    %v2452 = vld [vmem:[%s11 + $0x238] sm:$0xff]
    %v2453 = vld [vmem:[%s11 + $0x240] sm:$0xff]
    %v2454 = vld [vmem:[%s11 + $0x248] sm:$0xf]
    %v2455 = vld [vmem:[%s11 + $0x24c] sm:$0xff]
    %v2456 = vld [vmem:[%s11 + $0x254] sm:$0xff]
    %v2457 = vld [vmem:[%s11 + $0x25c] sm:$0xff]
    %v2458 = vld [vmem:[%s11 + $0x264] sm:$0xf]
    %v2459 = vld [vmem:[%s11 + $0x268] sm:$0xff]
    %v2460 = vld [vmem:[%s11 + $0x270] sm:$0xff]
    %v2461 = vld [vmem:[%s11 + $0x278] sm:$0xff]
    %v2462 = vld [vmem:[%s11 + $0x280] sm:$0xf]
    %v2463 = vld [vmem:[%s11 + $0x284] sm:$0xff]
    %v2464 = vld [vmem:[%s11 + $0x28c] sm:$0xff]
    %v2465 = vld [vmem:[%s11 + $0x294] sm:$0xff]
    %v2466 = vld [vmem:[%s11 + $0x29c] sm:$0xf]
    %v2467 = vld [vmem:[%s11 + $0x2a0] sm:$0xff]
    %v2468 = vld [vmem:[%s11 + $0x2a8] sm:$0xff]
    %v2469 = vld [vmem:[%s11 + $0x2b0] sm:$0xff]
    %v2470 = vld [vmem:[%s11 + $0x2b8] sm:$0xf]
    %v2471 = vld [vmem:[%s11 + $0x2bc] sm:$0xff]
    %v2472 = vld [vmem:[%s11 + $0x2c4] sm:$0xff]
    %v2473 = vld [vmem:[%s11 + $0x2cc] sm:$0xff]
    %v2474 = vld [vmem:[%s11 + $0x2d4] sm:$0xf]
    %v2475 = vld [vmem:[%s11 + $0x2d8] sm:$0xff]
    %v2476 = vld [vmem:[%s11 + $0x2e0] sm:$0xff]
    %v2477 = vld [vmem:[%s11 + $0x2e8] sm:$0xff]
    %v2478 = vld [vmem:[%s11 + $0x2f0] sm:$0xf]
    %v2479 = vld [vmem:[%s11 + $0x2f4] sm:$0xff]
    %v2480 = vld [vmem:[%s11 + $0x2fc] sm:$0xff]
    %v2481 = vld [vmem:[%s11 + $0x304] sm:$0xff]
    %v2482 = vld [vmem:[%s11 + $0x30c] sm:$0xf]
    %v2483 = vld [vmem:[%s11 + $0x310] sm:$0xff]
    %v2484 = vld [vmem:[%s11 + $0x318] sm:$0xff]
    %v2485 = vld [vmem:[%s11 + $0x320] sm:$0xff]
    %v2486 = vld [vmem:[%s11 + $0x328] sm:$0xf]
    %v2487 = vld [vmem:[%s11 + $0x32c] sm:$0xff]
    %v2488 = vld [vmem:[%s11 + $0x334] sm:$0xff]
    %v2489 = vld [vmem:[%s11 + $0x33c] sm:$0xff]
    %v2490 = vld [vmem:[%s11 + $0x344] sm:$0xf]
    %v2491 = vld [vmem:[%s11 + $0x348] sm:$0xff]
    %v2492 = vld [vmem:[%s11 + $0x350] sm:$0xff]
    %v2493 = vld [vmem:[%s11 + $0x358] sm:$0xff]
    %v2494 = vld [vmem:[%s11 + $0x360] sm:$0xf]
    %v2495 = vld [vmem:[%s11 + $0x364] sm:$0xff]
    %v2496 = vld [vmem:[%s11 + $0x36c] sm:$0xff]
    %v2497 = vld [vmem:[%s11 + $0x374] sm:$0xff]
    %v2498 = vld [vmem:[%s11 + $0x37c] sm:$0xf]
    %v2499 = vld [vmem:[%s11 + $0x380] sm:$0xff]
    %v2500 = vld [vmem:[%s11 + $0x388] sm:$0xff]
    %v2501 = vld [vmem:[%s11 + $0x390] sm:$0xff]
    %v2502 = vld [vmem:[%s11 + $0x398] sm:$0xf]
    %v2503 = vld [vmem:[%s11 + $0x39c] sm:$0xff]
    %v2504 = vld [vmem:[%s11 + $0x3a4] sm:$0xff]
    %v2505 = vld [vmem:[%s11 + $0x3ac] sm:$0xff]
    %v2506 = vld [vmem:[%s11 + $0x3b4] sm:$0xf]
    %v2507 = vld [vmem:[%s11 + $0x3b8] sm:$0xff]
    %v2508 = vld [vmem:[%s11 + $0x3c0] sm:$0xff]
    %v2509 = vld [vmem:[%s11 + $0x3c8] sm:$0xff]
    %v2510 = vld [vmem:[%s11 + $0x3d0] sm:$0xf]
    %v2511 = vld [vmem:[%s11 + $0x3d4] sm:$0xff]
    %v2512 = vld [vmem:[%s11 + $0x3dc] sm:$0xff]
    %v2513 = vld [vmem:[%s11 + $0x3e4] sm:$0xff]
    %v2514 = vld [vmem:[%s11 + $0x3ec] sm:$0xf]
    %v2515 = vld [vmem:[%s11 + $0x3f0] sm:$0xff]
    %v2516 = vld [vmem:[%s11 + $0x3f8] sm:$0xff]
    %v2517 = vld [vmem:[%s11 + $0x400] sm:$0xff]
    %v2518 = vld [vmem:[%s11 + $0x408] sm:$0xf]
    %v2519 = vld [vmem:[%s11 + $0x40c] sm:$0xff]
    %v2520 = vld [vmem:[%s11 + $0x414] sm:$0xff]
    %v2521 = vld [vmem:[%s11 + $0x41c] sm:$0xff]
    %v2522 = vld [vmem:[%s11 + $0x424] sm:$0xf]
    %v2523 = vld [vmem:[%s11 + $0x428] sm:$0xff]
    %v2524 = vld [vmem:[%s11 + $0x430] sm:$0xff]
    %v2525 = vld [vmem:[%s11 + $0x438] sm:$0xff]
    %v2526 = vld [vmem:[%s11 + $0x440] sm:$0xf]
    %v2527 = vld [vmem:[%s11 + $0x444] sm:$0xff]
    %v2528 = vld [vmem:[%s11 + $0x44c] sm:$0xff]
    %v2529 = vld [vmem:[%s11 + $0x454] sm:$0xff]
    %v2530 = vld [vmem:[%s11 + $0x45c] sm:$0xf]
    %v2531 = vld [vmem:[%s11 + $0x460] sm:$0xff]
    %v2532 = vld [vmem:[%s11 + $0x468] sm:$0xff]
    %v2533 = vld [vmem:[%s11 + $0x470] sm:$0xff]
    %v2534 = vld [vmem:[%s11 + $0x478] sm:$0xf]
    %v2535 = vld [vmem:[%s11 + $0x47c] sm:$0xff]
    %v2536 = vld [vmem:[%s11 + $0x484] sm:$0xff]
    %v2537 = vld [vmem:[%s11 + $0x48c] sm:$0xff]
    %v2538 = vld [vmem:[%s11 + $0x494] sm:$0xf]
    %v2539 = vld [vmem:[%s11 + $0x498] sm:$0xff]
    %v2540 = vld [vmem:[%s11 + $0x4a0] sm:$0xff]
    %v2541 = vld [vmem:[%s11 + $0x4a8] sm:$0xff]
    %v2542 = vld [vmem:[%s11 + $0x4b0] sm:$0xf]
    %v2543 = vld [vmem:[%s11 + $0x4b4] sm:$0xff]
    %v2544 = vld [vmem:[%s11 + $0x4bc] sm:$0xff]
    %v2545 = vld [vmem:[%s11 + $0x4c4] sm:$0xff]
    %v2546 = vld [vmem:[%s11 + $0x4cc] sm:$0xf]
    %v2547 = vld [vmem:[%s11 + $0x4d0] sm:$0xff]
    %v2548 = vld [vmem:[%s11 + $0x4d8] sm:$0xff]
    %v2549 = vld [vmem:[%s11 + $0x4e0] sm:$0xff]
    %v2550 = vld [vmem:[%s11 + $0x4e8] sm:$0xf]
    %v2551 = vld [vmem:[%s11 + $0x4ec] sm:$0xff]
    %v2552 = vld [vmem:[%s11 + $0x4f4] sm:$0xff]
    %v2553 = vld [vmem:[%s11 + $0x4fc] sm:$0xff]
    %v2554 = vld [vmem:[%s11 + $0x504] sm:$0xf]
    %v2555 = vld [vmem:[%s11 + $0x508] sm:$0xff]
    %v2556 = vld [vmem:[%s11 + $0x510] sm:$0xff]
    %v2557 = vld [vmem:[%s11 + $0x518] sm:$0xff]
    %v2558 = vld [vmem:[%s11 + $0x520] sm:$0xf]
    %v2559 = vld [vmem:[%s11 + $0x524] sm:$0xff]
    %v2560 = vld [vmem:[%s11 + $0x52c] sm:$0xff]
    %v2561 = vld [vmem:[%s11 + $0x534] sm:$0xff]
    %v2562 = vld [vmem:[%s11 + $0x53c] sm:$0xf]
    %v2563 = vld [vmem:[%s11 + $0x540] sm:$0xff]
    %v2564 = vld [vmem:[%s11 + $0x548] sm:$0xff]
    %v2565 = vld [vmem:[%s11 + $0x550] sm:$0xff]
    %v2566 = vld [vmem:[%s11 + $0x558] sm:$0xf]
    %v2567 = vld [vmem:[%s11 + $0x55c] sm:$0xff]
    %v2568 = vld [vmem:[%s11 + $0x564] sm:$0xff]
    %v2569 = vld [vmem:[%s11 + $0x56c] sm:$0xff]
    %v2570 = vld [vmem:[%s11 + $0x574] sm:$0xf]
    %v2571 = vld [vmem:[%s12] sm:$0x7f]
    %v2573 = vlaneseq
    %v2574 = vshrl.u32 %v2573, 7
    %v2575 = vsub.s32 0, %v2574
    %v2576 = vrot.slane %v2571, %v2575
    %v2577 = vlaneseq
    %v2578 = vshrl.u32 %v2577, 7
    %v2579 = vsub.s32 1, %v2578
    %v2580 = vrot.slane %v2571, %v2579
    %v2581 = vlaneseq
    %v2582 = vshrl.u32 %v2581, 7
    %v2583 = vsub.s32 2, %v2582
    %v2584 = vrot.slane %v2571, %v2583
    %v2585 = vlaneseq
    %v2586 = vshrl.u32 %v2585, 7
    %v2587 = vsub.s32 3, %v2586
    %v2588 = vrot.slane %v2571, %v2587
    %v2589 = vlaneseq
    %v2590 = vshrl.u32 %v2589, 7
    %v2591 = vsub.s32 4, %v2590
    %v2592 = vrot.slane %v2571, %v2591
    %v2593 = vlaneseq
    %v2594 = vshrl.u32 %v2593, 7
    %v2595 = vsub.s32 5, %v2594
    %v2596 = vrot.slane %v2571, %v2595
    %v2597 = vlaneseq
    %v2598 = vshrl.u32 %v2597, 7
    %v2599 = vsub.s32 6, %v2598
    %v2600 = vrot.slane %v2571, %v2599
    %v2808 = vunpack.c.l.b16 %v2371
    %v2809 = vunpack.c.h.b16 %v2371
    %v2810 = vunpack.c.l.b16 %v2372
    %v2811 = vunpack.c.h.b16 %v2372
    %v2812 = vunpack.c.l.b16 %v2373
    %v2813 = vunpack.c.h.b16 %v2373
    %v2814 = vunpack.c.l.b16 %v2374
    %v2815 = vunpack.c.l.b16 %v2375
    %v2816 = vunpack.c.h.b16 %v2375
    %v2817 = vunpack.c.l.b16 %v2376
    %v2818 = vunpack.c.h.b16 %v2376
    %v2819 = vunpack.c.l.b16 %v2377
    %v2820 = vunpack.c.h.b16 %v2377
    %v2821 = vunpack.c.l.b16 %v2378
    %v2822 = vunpack.c.l.b16 %v2379
    %v2823 = vunpack.c.h.b16 %v2379
    %v2824 = vunpack.c.l.b16 %v2380
    %v2825 = vunpack.c.h.b16 %v2380
    %v2826 = vunpack.c.l.b16 %v2381
    %v2827 = vunpack.c.h.b16 %v2381
    %v2828 = vunpack.c.l.b16 %v2382
    %v2829 = vunpack.c.l.b16 %v2383
    %v2830 = vunpack.c.h.b16 %v2383
    %v2831 = vunpack.c.l.b16 %v2384
    %v2832 = vunpack.c.h.b16 %v2384
    %v2833 = vunpack.c.l.b16 %v2385
    %v2834 = vunpack.c.h.b16 %v2385
    %v2835 = vunpack.c.l.b16 %v2386
    %v2836 = vunpack.c.l.b16 %v2387
    %v2837 = vunpack.c.h.b16 %v2387
    %v2838 = vunpack.c.l.b16 %v2388
    %v2839 = vunpack.c.h.b16 %v2388
    %v2840 = vunpack.c.l.b16 %v2389
    %v2841 = vunpack.c.h.b16 %v2389
    %v2842 = vunpack.c.l.b16 %v2390
    %v2843 = vunpack.c.l.b16 %v2391
    %v2844 = vunpack.c.h.b16 %v2391
    %v2845 = vunpack.c.l.b16 %v2392
    %v2846 = vunpack.c.h.b16 %v2392
    %v2847 = vunpack.c.l.b16 %v2393
    %v2848 = vunpack.c.h.b16 %v2393
    %v2849 = vunpack.c.l.b16 %v2394
    %v2850 = vunpack.c.l.b16 %v2395
    %v2851 = vunpack.c.h.b16 %v2395
    %v2852 = vunpack.c.l.b16 %v2396
    %v2853 = vunpack.c.h.b16 %v2396
    %v2854 = vunpack.c.l.b16 %v2397
    %v2855 = vunpack.c.h.b16 %v2397
    %v2856 = vunpack.c.l.b16 %v2398
    %v2857 = vunpack.c.l.b16 %v2399
    %v2858 = vunpack.c.h.b16 %v2399
    %v2859 = vunpack.c.l.b16 %v2400
    %v2860 = vunpack.c.h.b16 %v2400
    %v2861 = vunpack.c.l.b16 %v2401
    %v2862 = vunpack.c.h.b16 %v2401
    %v2863 = vunpack.c.l.b16 %v2402
    %v2864 = vunpack.c.l.b16 %v2403
    %v2865 = vunpack.c.h.b16 %v2403
    %v2866 = vunpack.c.l.b16 %v2404
    %v2867 = vunpack.c.h.b16 %v2404
    %v2868 = vunpack.c.l.b16 %v2405
    %v2869 = vunpack.c.h.b16 %v2405
    %v2870 = vunpack.c.l.b16 %v2406
    %v2871 = vunpack.c.l.b16 %v2407
    %v2872 = vunpack.c.h.b16 %v2407
    %v2873 = vunpack.c.l.b16 %v2408
    %v2874 = vunpack.c.h.b16 %v2408
    %v2875 = vunpack.c.l.b16 %v2409
    %v2876 = vunpack.c.h.b16 %v2409
    %v2877 = vunpack.c.l.b16 %v2410
    %v2878 = vunpack.c.l.b16 %v2411
    %v2879 = vunpack.c.h.b16 %v2411
    %v2880 = vunpack.c.l.b16 %v2412
    %v2881 = vunpack.c.h.b16 %v2412
    %v2882 = vunpack.c.l.b16 %v2413
    %v2883 = vunpack.c.h.b16 %v2413
    %v2884 = vunpack.c.l.b16 %v2414
    %v2885 = vunpack.c.l.b16 %v2415
    %v2886 = vunpack.c.h.b16 %v2415
    %v2887 = vunpack.c.l.b16 %v2416
    %v2888 = vunpack.c.h.b16 %v2416
    %v2889 = vunpack.c.l.b16 %v2417
    %v2890 = vunpack.c.h.b16 %v2417
    %v2891 = vunpack.c.l.b16 %v2418
    %v2892 = vunpack.c.l.b16 %v2419
    %v2893 = vunpack.c.h.b16 %v2419
    %v2894 = vunpack.c.l.b16 %v2420
    %v2895 = vunpack.c.h.b16 %v2420
    %v2896 = vunpack.c.l.b16 %v2421
    %v2897 = vunpack.c.h.b16 %v2421
    %v2898 = vunpack.c.l.b16 %v2422
    %v2899 = vunpack.c.l.b16 %v2423
    %v2900 = vunpack.c.h.b16 %v2423
    %v2901 = vunpack.c.l.b16 %v2424
    %v2902 = vunpack.c.h.b16 %v2424
    %v2903 = vunpack.c.l.b16 %v2425
    %v2904 = vunpack.c.h.b16 %v2425
    %v2905 = vunpack.c.l.b16 %v2426
    %v2906 = vunpack.c.l.b16 %v2427
    %v2907 = vunpack.c.h.b16 %v2427
    %v2908 = vunpack.c.l.b16 %v2428
    %v2909 = vunpack.c.h.b16 %v2428
    %v2910 = vunpack.c.l.b16 %v2429
    %v2911 = vunpack.c.h.b16 %v2429
    %v2912 = vunpack.c.l.b16 %v2430
    %v2913 = vunpack.c.l.b16 %v2431
    %v2914 = vunpack.c.h.b16 %v2431
    %v2915 = vunpack.c.l.b16 %v2432
    %v2916 = vunpack.c.h.b16 %v2432
    %v2917 = vunpack.c.l.b16 %v2433
    %v2918 = vunpack.c.h.b16 %v2433
    %v2919 = vunpack.c.l.b16 %v2434
    %v2920 = vunpack.c.l.b16 %v2435
    %v2921 = vunpack.c.h.b16 %v2435
    %v2922 = vunpack.c.l.b16 %v2436
    %v2923 = vunpack.c.h.b16 %v2436
    %v2924 = vunpack.c.l.b16 %v2437
    %v2925 = vunpack.c.h.b16 %v2437
    %v2926 = vunpack.c.l.b16 %v2438
    %v2927 = vunpack.c.l.b16 %v2439
    %v2928 = vunpack.c.h.b16 %v2439
    %v2929 = vunpack.c.l.b16 %v2440
    %v2930 = vunpack.c.h.b16 %v2440
    %v2931 = vunpack.c.l.b16 %v2441
    %v2932 = vunpack.c.h.b16 %v2441
    %v2933 = vunpack.c.l.b16 %v2442
    %v2934 = vunpack.c.l.b16 %v2443
    %v2935 = vunpack.c.h.b16 %v2443
    %v2936 = vunpack.c.l.b16 %v2444
    %v2937 = vunpack.c.h.b16 %v2444
    %v2938 = vunpack.c.l.b16 %v2445
    %v2939 = vunpack.c.h.b16 %v2445
    %v2940 = vunpack.c.l.b16 %v2446
    %v2941 = vunpack.c.l.b16 %v2447
    %v2942 = vunpack.c.h.b16 %v2447
    %v2943 = vunpack.c.l.b16 %v2448
    %v2944 = vunpack.c.h.b16 %v2448
    %v2945 = vunpack.c.l.b16 %v2449
    %v2946 = vunpack.c.h.b16 %v2449
    %v2947 = vunpack.c.l.b16 %v2450
    %v2948 = vunpack.c.l.b16 %v2451
    %v2949 = vunpack.c.h.b16 %v2451
    %v2950 = vunpack.c.l.b16 %v2452
    %v2951 = vunpack.c.h.b16 %v2452
    %v2952 = vunpack.c.l.b16 %v2453
    %v2953 = vunpack.c.h.b16 %v2453
    %v2954 = vunpack.c.l.b16 %v2454
    %v2955 = vunpack.c.l.b16 %v2455
    %v2956 = vunpack.c.h.b16 %v2455
    %v2957 = vunpack.c.l.b16 %v2456
    %v2958 = vunpack.c.h.b16 %v2456
    %v2959 = vunpack.c.l.b16 %v2457
    %v2960 = vunpack.c.h.b16 %v2457
    %v2961 = vunpack.c.l.b16 %v2458
    %v2962 = vunpack.c.l.b16 %v2459
    %v2963 = vunpack.c.h.b16 %v2459
    %v2964 = vunpack.c.l.b16 %v2460
    %v2965 = vunpack.c.h.b16 %v2460
    %v2966 = vunpack.c.l.b16 %v2461
    %v2967 = vunpack.c.h.b16 %v2461
    %v2968 = vunpack.c.l.b16 %v2462
    %v2969 = vunpack.c.l.b16 %v2463
    %v2970 = vunpack.c.h.b16 %v2463
    %v2971 = vunpack.c.l.b16 %v2464
    %v2972 = vunpack.c.h.b16 %v2464
    %v2973 = vunpack.c.l.b16 %v2465
    %v2974 = vunpack.c.h.b16 %v2465
    %v2975 = vunpack.c.l.b16 %v2466
    %v2976 = vunpack.c.l.b16 %v2467
    %v2977 = vunpack.c.h.b16 %v2467
    %v2978 = vunpack.c.l.b16 %v2468
    %v2979 = vunpack.c.h.b16 %v2468
    %v2980 = vunpack.c.l.b16 %v2469
    %v2981 = vunpack.c.h.b16 %v2469
    %v2982 = vunpack.c.l.b16 %v2470
    %v2983 = vunpack.c.l.b16 %v2471
    %v2984 = vunpack.c.h.b16 %v2471
    %v2985 = vunpack.c.l.b16 %v2472
    %v2986 = vunpack.c.h.b16 %v2472
    %v2987 = vunpack.c.l.b16 %v2473
    %v2988 = vunpack.c.h.b16 %v2473
    %v2989 = vunpack.c.l.b16 %v2474
    %v2990 = vunpack.c.l.b16 %v2475
    %v2991 = vunpack.c.h.b16 %v2475
    %v2992 = vunpack.c.l.b16 %v2476
    %v2993 = vunpack.c.h.b16 %v2476
    %v2994 = vunpack.c.l.b16 %v2477
    %v2995 = vunpack.c.h.b16 %v2477
    %v2996 = vunpack.c.l.b16 %v2478
    %v2997 = vunpack.c.l.b16 %v2479
    %v2998 = vunpack.c.h.b16 %v2479
    %v2999 = vunpack.c.l.b16 %v2480
    %v3000 = vunpack.c.h.b16 %v2480
    %v3001 = vunpack.c.l.b16 %v2481
    %v3002 = vunpack.c.h.b16 %v2481
    %v3003 = vunpack.c.l.b16 %v2482
    %v3004 = vunpack.c.l.b16 %v2483
    %v3005 = vunpack.c.h.b16 %v2483
    %v3006 = vunpack.c.l.b16 %v2484
    %v3007 = vunpack.c.h.b16 %v2484
    %v3008 = vunpack.c.l.b16 %v2485
    %v3009 = vunpack.c.h.b16 %v2485
    %v3010 = vunpack.c.l.b16 %v2486
    %v3011 = vunpack.c.l.b16 %v2487
    %v3012 = vunpack.c.h.b16 %v2487
    %v3013 = vunpack.c.l.b16 %v2488
    %v3014 = vunpack.c.h.b16 %v2488
    %v3015 = vunpack.c.l.b16 %v2489
    %v3016 = vunpack.c.h.b16 %v2489
    %v3017 = vunpack.c.l.b16 %v2490
    %v3018 = vunpack.c.l.b16 %v2491
    %v3019 = vunpack.c.h.b16 %v2491
    %v3020 = vunpack.c.l.b16 %v2492
    %v3021 = vunpack.c.h.b16 %v2492
    %v3022 = vunpack.c.l.b16 %v2493
    %v3023 = vunpack.c.h.b16 %v2493
    %v3024 = vunpack.c.l.b16 %v2494
    %v3025 = vunpack.c.l.b16 %v2495
    %v3026 = vunpack.c.h.b16 %v2495
    %v3027 = vunpack.c.l.b16 %v2496
    %v3028 = vunpack.c.h.b16 %v2496
    %v3029 = vunpack.c.l.b16 %v2497
    %v3030 = vunpack.c.h.b16 %v2497
    %v3031 = vunpack.c.l.b16 %v2498
    %v3032 = vunpack.c.l.b16 %v2499
    %v3033 = vunpack.c.h.b16 %v2499
    %v3034 = vunpack.c.l.b16 %v2500
    %v3035 = vunpack.c.h.b16 %v2500
    %v3036 = vunpack.c.l.b16 %v2501
    %v3037 = vunpack.c.h.b16 %v2501
    %v3038 = vunpack.c.l.b16 %v2502
    %v3039 = vunpack.c.l.b16 %v2503
    %v3040 = vunpack.c.h.b16 %v2503
    %v3041 = vunpack.c.l.b16 %v2504
    %v3042 = vunpack.c.h.b16 %v2504
    %v3043 = vunpack.c.l.b16 %v2505
    %v3044 = vunpack.c.h.b16 %v2505
    %v3045 = vunpack.c.l.b16 %v2506
    %v3046 = vunpack.c.l.b16 %v2507
    %v3047 = vunpack.c.h.b16 %v2507
    %v3048 = vunpack.c.l.b16 %v2508
    %v3049 = vunpack.c.h.b16 %v2508
    %v3050 = vunpack.c.l.b16 %v2509
    %v3051 = vunpack.c.h.b16 %v2509
    %v3052 = vunpack.c.l.b16 %v2510
    %v3053 = vunpack.c.l.b16 %v2511
    %v3054 = vunpack.c.h.b16 %v2511
    %v3055 = vunpack.c.l.b16 %v2512
    %v3056 = vunpack.c.h.b16 %v2512
    %v3057 = vunpack.c.l.b16 %v2513
    %v3058 = vunpack.c.h.b16 %v2513
    %v3059 = vunpack.c.l.b16 %v2514
    %v3060 = vunpack.c.l.b16 %v2515
    %v3061 = vunpack.c.h.b16 %v2515
    %v3062 = vunpack.c.l.b16 %v2516
    %v3063 = vunpack.c.h.b16 %v2516
    %v3064 = vunpack.c.l.b16 %v2517
    %v3065 = vunpack.c.h.b16 %v2517
    %v3066 = vunpack.c.l.b16 %v2518
    %v3067 = vunpack.c.l.b16 %v2519
    %v3068 = vunpack.c.h.b16 %v2519
    %v3069 = vunpack.c.l.b16 %v2520
    %v3070 = vunpack.c.h.b16 %v2520
    %v3071 = vunpack.c.l.b16 %v2521
    %v3072 = vunpack.c.h.b16 %v2521
    %v3073 = vunpack.c.l.b16 %v2522
    %v3074 = vunpack.c.l.b16 %v2523
    %v3075 = vunpack.c.h.b16 %v2523
    %v3076 = vunpack.c.l.b16 %v2524
    %v3077 = vunpack.c.h.b16 %v2524
    %v3078 = vunpack.c.l.b16 %v2525
    %v3079 = vunpack.c.h.b16 %v2525
    %v3080 = vunpack.c.l.b16 %v2526
    %v3081 = vunpack.c.l.b16 %v2527
    %v3082 = vunpack.c.h.b16 %v2527
    %v3083 = vunpack.c.l.b16 %v2528
    %v3084 = vunpack.c.h.b16 %v2528
    %v3085 = vunpack.c.l.b16 %v2529
    %v3086 = vunpack.c.h.b16 %v2529
    %v3087 = vunpack.c.l.b16 %v2530
    %v3088 = vunpack.c.l.b16 %v2531
    %v3089 = vunpack.c.h.b16 %v2531
    %v3090 = vunpack.c.l.b16 %v2532
    %v3091 = vunpack.c.h.b16 %v2532
    %v3092 = vunpack.c.l.b16 %v2533
    %v3093 = vunpack.c.h.b16 %v2533
    %v3094 = vunpack.c.l.b16 %v2534
    %v3095 = vunpack.c.l.b16 %v2535
    %v3096 = vunpack.c.h.b16 %v2535
    %v3097 = vunpack.c.l.b16 %v2536
    %v3098 = vunpack.c.h.b16 %v2536
    %v3099 = vunpack.c.l.b16 %v2537
    %v3100 = vunpack.c.h.b16 %v2537
    %v3101 = vunpack.c.l.b16 %v2538
    %v3102 = vunpack.c.l.b16 %v2539
    %v3103 = vunpack.c.h.b16 %v2539
    %v3104 = vunpack.c.l.b16 %v2540
    %v3105 = vunpack.c.h.b16 %v2540
    %v3106 = vunpack.c.l.b16 %v2541
    %v3107 = vunpack.c.h.b16 %v2541
    %v3108 = vunpack.c.l.b16 %v2542
    %v3109 = vunpack.c.l.b16 %v2543
    %v3110 = vunpack.c.h.b16 %v2543
    %v3111 = vunpack.c.l.b16 %v2544
    %v3112 = vunpack.c.h.b16 %v2544
    %v3113 = vunpack.c.l.b16 %v2545
    %v3114 = vunpack.c.h.b16 %v2545
    %v3115 = vunpack.c.l.b16 %v2546
    %v3116 = vunpack.c.l.b16 %v2547
    %v3117 = vunpack.c.h.b16 %v2547
    %v3118 = vunpack.c.l.b16 %v2548
    %v3119 = vunpack.c.h.b16 %v2548
    %v3120 = vunpack.c.l.b16 %v2549
    %v3121 = vunpack.c.h.b16 %v2549
    %v3122 = vunpack.c.l.b16 %v2550
    %v3123 = vunpack.c.l.b16 %v2551
    %v3124 = vunpack.c.h.b16 %v2551
    %v3125 = vunpack.c.l.b16 %v2552
    %v3126 = vunpack.c.h.b16 %v2552
    %v3127 = vunpack.c.l.b16 %v2553
    %v3128 = vunpack.c.h.b16 %v2553
    %v3129 = vunpack.c.l.b16 %v2554
    %v3130 = vunpack.c.l.b16 %v2555
    %v3131 = vunpack.c.h.b16 %v2555
    %v3132 = vunpack.c.l.b16 %v2556
    %v3133 = vunpack.c.h.b16 %v2556
    %v3134 = vunpack.c.l.b16 %v2557
    %v3135 = vunpack.c.h.b16 %v2557
    %v3136 = vunpack.c.l.b16 %v2558
    %v3137 = vunpack.c.l.b16 %v2559
    %v3138 = vunpack.c.h.b16 %v2559
    %v3139 = vunpack.c.l.b16 %v2560
    %v3140 = vunpack.c.h.b16 %v2560
    %v3141 = vunpack.c.l.b16 %v2561
    %v3142 = vunpack.c.h.b16 %v2561
    %v3143 = vunpack.c.l.b16 %v2562
    %v3144 = vunpack.c.l.b16 %v2563
    %v3145 = vunpack.c.h.b16 %v2563
    %v3146 = vunpack.c.l.b16 %v2564
    %v3147 = vunpack.c.h.b16 %v2564
    %v3148 = vunpack.c.l.b16 %v2565
    %v3149 = vunpack.c.h.b16 %v2565
    %v3150 = vunpack.c.l.b16 %v2566
    %v3151 = vunpack.c.l.b16 %v2567
    %v3152 = vunpack.c.h.b16 %v2567
    %v3153 = vunpack.c.l.b16 %v2568
    %v3154 = vunpack.c.h.b16 %v2568
    %v3155 = vunpack.c.l.b16 %v2569
    %v3156 = vunpack.c.h.b16 %v2569
    %v3157 = vunpack.c.l.b16 %v2570
    %v3158 = vpack.c.b16 %v2815, %v2808
    %v3159 = vpack.c.b16 %v2816, %v2809
    %v3160 = vpack.c.b16 %v2817, %v2810
    %v3161 = vpack.c.b16 %v2818, %v2811
    %v3162 = vpack.c.b16 %v2819, %v2812
    %v3163 = vpack.c.b16 %v2820, %v2813
    %v3164 = vpack.c.b16 %v2821, %v2814
    %v3165 = vpack.c.b16 %v2829, %v2822
    %v3166 = vpack.c.b16 %v2830, %v2823
    %v3167 = vpack.c.b16 %v2831, %v2824
    %v3168 = vpack.c.b16 %v2832, %v2825
    %v3169 = vpack.c.b16 %v2833, %v2826
    %v3170 = vpack.c.b16 %v2834, %v2827
    %v3171 = vpack.c.b16 %v2835, %v2828
    %v3172 = vpack.c.b16 %v2843, %v2836
    %v3173 = vpack.c.b16 %v2844, %v2837
    %v3174 = vpack.c.b16 %v2845, %v2838
    %v3175 = vpack.c.b16 %v2846, %v2839
    %v3176 = vpack.c.b16 %v2847, %v2840
    %v3177 = vpack.c.b16 %v2848, %v2841
    %v3178 = vpack.c.b16 %v2849, %v2842
    %v3179 = vpack.c.b16 %v2857, %v2850
    %v3180 = vpack.c.b16 %v2858, %v2851
    %v3181 = vpack.c.b16 %v2859, %v2852
    %v3182 = vpack.c.b16 %v2860, %v2853
    %v3183 = vpack.c.b16 %v2861, %v2854
    %v3184 = vpack.c.b16 %v2862, %v2855
    %v3185 = vpack.c.b16 %v2863, %v2856
    %v3186 = vpack.c.b16 %v2871, %v2864
    %v3187 = vpack.c.b16 %v2872, %v2865
    %v3188 = vpack.c.b16 %v2873, %v2866
    %v3189 = vpack.c.b16 %v2874, %v2867
    %v3190 = vpack.c.b16 %v2875, %v2868
    %v3191 = vpack.c.b16 %v2876, %v2869
    %v3192 = vpack.c.b16 %v2877, %v2870
    %v3193 = vpack.c.b16 %v2885, %v2878
    %v3194 = vpack.c.b16 %v2886, %v2879
    %v3195 = vpack.c.b16 %v2887, %v2880
    %v3196 = vpack.c.b16 %v2888, %v2881
    %v3197 = vpack.c.b16 %v2889, %v2882
    %v3198 = vpack.c.b16 %v2890, %v2883
    %v3199 = vpack.c.b16 %v2891, %v2884
    %v3200 = vpack.c.b16 %v2899, %v2892
    %v3201 = vpack.c.b16 %v2900, %v2893
    %v3202 = vpack.c.b16 %v2901, %v2894
    %v3203 = vpack.c.b16 %v2902, %v2895
    %v3204 = vpack.c.b16 %v2903, %v2896
    %v3205 = vpack.c.b16 %v2904, %v2897
    %v3206 = vpack.c.b16 %v2905, %v2898
    %v3207 = vpack.c.b16 %v2913, %v2906
    %v3208 = vpack.c.b16 %v2914, %v2907
    %v3209 = vpack.c.b16 %v2915, %v2908
    %v3210 = vpack.c.b16 %v2916, %v2909
    %v3211 = vpack.c.b16 %v2917, %v2910
    %v3212 = vpack.c.b16 %v2918, %v2911
    %v3213 = vpack.c.b16 %v2919, %v2912
    %v3214 = vpack.c.b16 %v2927, %v2920
    %v3215 = vpack.c.b16 %v2928, %v2921
    %v3216 = vpack.c.b16 %v2929, %v2922
    %v3217 = vpack.c.b16 %v2930, %v2923
    %v3218 = vpack.c.b16 %v2931, %v2924
    %v3219 = vpack.c.b16 %v2932, %v2925
    %v3220 = vpack.c.b16 %v2933, %v2926
    %v3221 = vpack.c.b16 %v2941, %v2934
    %v3222 = vpack.c.b16 %v2942, %v2935
    %v3223 = vpack.c.b16 %v2943, %v2936
    %v3224 = vpack.c.b16 %v2944, %v2937
    %v3225 = vpack.c.b16 %v2945, %v2938
    %v3226 = vpack.c.b16 %v2946, %v2939
    %v3227 = vpack.c.b16 %v2947, %v2940
    %v3228 = vpack.c.b16 %v2955, %v2948
    %v3229 = vpack.c.b16 %v2956, %v2949
    %v3230 = vpack.c.b16 %v2957, %v2950
    %v3231 = vpack.c.b16 %v2958, %v2951
    %v3232 = vpack.c.b16 %v2959, %v2952
    %v3233 = vpack.c.b16 %v2960, %v2953
    %v3234 = vpack.c.b16 %v2961, %v2954
    %v3235 = vpack.c.b16 %v2969, %v2962
    %v3236 = vpack.c.b16 %v2970, %v2963
    %v3237 = vpack.c.b16 %v2971, %v2964
    %v3238 = vpack.c.b16 %v2972, %v2965
    %v3239 = vpack.c.b16 %v2973, %v2966
    %v3240 = vpack.c.b16 %v2974, %v2967
    %v3241 = vpack.c.b16 %v2975, %v2968
    %v3242 = vpack.c.b16 %v2983, %v2976
    %v3243 = vpack.c.b16 %v2984, %v2977
    %v3244 = vpack.c.b16 %v2985, %v2978
    %v3245 = vpack.c.b16 %v2986, %v2979
    %v3246 = vpack.c.b16 %v2987, %v2980
    %v3247 = vpack.c.b16 %v2988, %v2981
    %v3248 = vpack.c.b16 %v2989, %v2982
    %v3249 = vpack.c.b16 %v2997, %v2990
    %v3250 = vpack.c.b16 %v2998, %v2991
    %v3251 = vpack.c.b16 %v2999, %v2992
    %v3252 = vpack.c.b16 %v3000, %v2993
    %v3253 = vpack.c.b16 %v3001, %v2994
    %v3254 = vpack.c.b16 %v3002, %v2995
    %v3255 = vpack.c.b16 %v3003, %v2996
    %v3256 = vpack.c.b16 %v3011, %v3004
    %v3257 = vpack.c.b16 %v3012, %v3005
    %v3258 = vpack.c.b16 %v3013, %v3006
    %v3259 = vpack.c.b16 %v3014, %v3007
    %v3260 = vpack.c.b16 %v3015, %v3008
    %v3261 = vpack.c.b16 %v3016, %v3009
    %v3262 = vpack.c.b16 %v3017, %v3010
    %v3263 = vpack.c.b16 %v3025, %v3018
    %v3264 = vpack.c.b16 %v3026, %v3019
    %v3265 = vpack.c.b16 %v3027, %v3020
    %v3266 = vpack.c.b16 %v3028, %v3021
    %v3267 = vpack.c.b16 %v3029, %v3022
    %v3268 = vpack.c.b16 %v3030, %v3023
    %v3269 = vpack.c.b16 %v3031, %v3024
    %v3270 = vpack.c.b16 %v3039, %v3032
    %v3271 = vpack.c.b16 %v3040, %v3033
    %v3272 = vpack.c.b16 %v3041, %v3034
    %v3273 = vpack.c.b16 %v3042, %v3035
    %v3274 = vpack.c.b16 %v3043, %v3036
    %v3275 = vpack.c.b16 %v3044, %v3037
    %v3276 = vpack.c.b16 %v3045, %v3038
    %v3277 = vpack.c.b16 %v3053, %v3046
    %v3278 = vpack.c.b16 %v3054, %v3047
    %v3279 = vpack.c.b16 %v3055, %v3048
    %v3280 = vpack.c.b16 %v3056, %v3049
    %v3281 = vpack.c.b16 %v3057, %v3050
    %v3282 = vpack.c.b16 %v3058, %v3051
    %v3283 = vpack.c.b16 %v3059, %v3052
    %v3284 = vpack.c.b16 %v3067, %v3060
    %v3285 = vpack.c.b16 %v3068, %v3061
    %v3286 = vpack.c.b16 %v3069, %v3062
    %v3287 = vpack.c.b16 %v3070, %v3063
    %v3288 = vpack.c.b16 %v3071, %v3064
    %v3289 = vpack.c.b16 %v3072, %v3065
    %v3290 = vpack.c.b16 %v3073, %v3066
    %v3291 = vpack.c.b16 %v3081, %v3074
    %v3292 = vpack.c.b16 %v3082, %v3075
    %v3293 = vpack.c.b16 %v3083, %v3076
    %v3294 = vpack.c.b16 %v3084, %v3077
    %v3295 = vpack.c.b16 %v3085, %v3078
    %v3296 = vpack.c.b16 %v3086, %v3079
    %v3297 = vpack.c.b16 %v3087, %v3080
    %v3298 = vpack.c.b16 %v3095, %v3088
    %v3299 = vpack.c.b16 %v3096, %v3089
    %v3300 = vpack.c.b16 %v3097, %v3090
    %v3301 = vpack.c.b16 %v3098, %v3091
    %v3302 = vpack.c.b16 %v3099, %v3092
    %v3303 = vpack.c.b16 %v3100, %v3093
    %v3304 = vpack.c.b16 %v3101, %v3094
    %v3305 = vpack.c.b16 %v3109, %v3102
    %v3306 = vpack.c.b16 %v3110, %v3103
    %v3307 = vpack.c.b16 %v3111, %v3104
    %v3308 = vpack.c.b16 %v3112, %v3105
    %v3309 = vpack.c.b16 %v3113, %v3106
    %v3310 = vpack.c.b16 %v3114, %v3107
    %v3311 = vpack.c.b16 %v3115, %v3108
    %v3312 = vpack.c.b16 %v3123, %v3116
    %v3313 = vpack.c.b16 %v3124, %v3117
    %v3314 = vpack.c.b16 %v3125, %v3118
    %v3315 = vpack.c.b16 %v3126, %v3119
    %v3316 = vpack.c.b16 %v3127, %v3120
    %v3317 = vpack.c.b16 %v3128, %v3121
    %v3318 = vpack.c.b16 %v3129, %v3122
    %v3319 = vpack.c.b16 %v3137, %v3130
    %v3320 = vpack.c.b16 %v3138, %v3131
    %v3321 = vpack.c.b16 %v3139, %v3132
    %v3322 = vpack.c.b16 %v3140, %v3133
    %v3323 = vpack.c.b16 %v3141, %v3134
    %v3324 = vpack.c.b16 %v3142, %v3135
    %v3325 = vpack.c.b16 %v3143, %v3136
    %v3326 = vpack.c.b16 %v3151, %v3144
    %v3327 = vpack.c.b16 %v3152, %v3145
    %v3328 = vpack.c.b16 %v3153, %v3146
    %v3329 = vpack.c.b16 %v3154, %v3147
    %v3330 = vpack.c.b16 %v3155, %v3148
    %v3331 = vpack.c.b16 %v3156, %v3149
    %v3332 = vpack.c.b16 %v3157, %v3150
    %v3509 = vsel %vm1374, %v2370, 0
    %3511 = vmatprep.subr.bf16.mxu0 %v3159
    %3512 = vmatpush1.bf16.msra.mxu0 %v3158
    %3513 = vmatprep.subr.bf16.mxu0 %v3166
    %3514 = vmatpush1.bf16.msra.mxu0 %v3165
    %3515 = vmatprep.subr.bf16.mxu0 %v3173
    %3516 = vmatpush1.bf16.msra.mxu0 %v3172
    %3517 = vmatprep.subr.bf16.mxu0 %v3180
    %3518 = vmatpush1.bf16.msra.mxu0 %v3179
    %3519 = vmatprep.subr.bf16.mxu0 %v3187
    %3520 = vmatpush1.bf16.msra.mxu0 %v3186
    %3521 = vmatprep.subr.bf16.mxu0 %v3194
    %3522 = vmatpush1.bf16.msra.mxu0 %v3193
    %3523 = vmatprep.subr.bf16.mxu0 %v3201
    %3524 = vmatpush1.bf16.msra.mxu0 %v3200
    %3525 = vmatprep.subr.bf16.mxu0 %v3208
    %3526 = vmatpush1.bf16.msra.mxu0 %v3207
    %3527 = vmatprep.subr.bf16.mxu0 %v3215
    %3528 = vmatpush1.bf16.msra.mxu0 %v3214
    %3529 = vmatprep.subr.bf16.mxu0 %v3222
    %3530 = vmatpush1.bf16.msra.mxu0 %v3221
    %3531 = vmatprep.subr.bf16.mxu0 %v3229
    %3532 = vmatpush1.bf16.msra.mxu0 %v3228
    %3533 = vmatprep.subr.bf16.mxu0 %v3236
    %3534 = vmatpush1.bf16.msra.mxu0 %v3235
    %3535 = vmatprep.subr.bf16.mxu0 %v3243
    %3536 = vmatpush1.bf16.msra.mxu0 %v3242
    %3537 = vmatprep.subr.bf16.mxu0 %v3250
    %3538 = vmatpush1.bf16.msra.mxu0 %v3249
    %3539 = vmatprep.subr.bf16.mxu0 %v3257
    %3540 = vmatpush1.bf16.msra.mxu0 %v3256
    %3541 = vmatprep.subr.bf16.mxu0 %v3264
    %3542 = vmatpush1.bf16.msra.mxu0 %v3263
    %3543 = vmatprep.mubr.bf16.mxu0 %v2368
    %3544 = vmatmul.mubr.bf16.gmra.mrb[0].mxu0 %v2367
    %v3545 = vpop.f32.mrb[0].mxu0
    %v3546 = vadd.f32 %v2576, %v3545
    %v3547 = vpop.f32.mrb[0].mxu0
    %v3548 = vadd.f32 %v2580, %v3547
    %v3549 = vpop.f32.mrb[0].mxu0
    %v3550 = vpop.f32.mrb[0].mxu0
    %3551 = vdwg.mxu0
    %3552 = vmatprep.subr.bf16.mxu0 %v3271
    %3553 = vmatpush1.bf16.msra.mxu0 %v3270
    %3554 = vmatprep.subr.bf16.mxu0 %v3278
    %3555 = vmatpush1.bf16.msra.mxu0 %v3277
    %3556 = vmatprep.subr.bf16.mxu0 %v3285
    %3557 = vmatpush1.bf16.msra.mxu0 %v3284
    %3558 = vmatprep.subr.bf16.mxu0 %v3292
    %3559 = vmatpush1.bf16.msra.mxu0 %v3291
    %3560 = vmatprep.subr.bf16.mxu0 %v3299
    %3561 = vmatpush1.bf16.msra.mxu0 %v3298
    %3562 = vmatprep.subr.bf16.mxu0 %v3306
    %3563 = vmatpush1.bf16.msra.mxu0 %v3305
    %3564 = vmatprep.subr.bf16.mxu0 %v3313
    %3565 = vmatpush1.bf16.msra.mxu0 %v3312
    %3566 = vmatprep.subr.bf16.mxu0 %v3320
    %3567 = vmatpush1.bf16.msra.mxu0 %v3319
    %3568 = vmatprep.subr.bf16.mxu0 %v3327
    %3569 = vmatpush1.bf16.msra.mxu0 %v3326
    %3570 = vmatprep.subr.bf16.mxu0 0
    %3571 = vmatpush1.bf16.msra.mxu0 0
    %3572 = vmatprep.subr.bf16.mxu0 0
    %3573 = vmatpush1.bf16.msra.mxu0 0
    %3574 = vmatprep.subr.bf16.mxu0 0
    %3575 = vmatpush1.bf16.msra.mxu0 0
    %3576 = vmatprep.subr.bf16.mxu0 0
    %3577 = vmatpush1.bf16.msra.mxu0 0
    %3578 = vmatprep.subr.bf16.mxu0 0
    %3579 = vmatpush1.bf16.msra.mxu0 0
    %3580 = vmatprep.subr.bf16.mxu0 0
    %3581 = vmatpush1.bf16.msra.mxu0 0
    %3582 = vmatprep.subr.bf16.mxu0 0
    %3583 = vmatpush1.bf16.msra.mxu0 0
    %3584 = vmatprep.mubr.bf16.mxu0 %v3509
    %3585 = vmatmul.mubr.bf16.gmra.mrb[0].mxu0 %v2369
    %v3586 = vpop.f32.mrb[0].mxu0
    %v3587 = vadd.f32 %v3546, %v3586
    %v3588 = vpop.f32.mrb[0].mxu0
    %v3589 = vadd.f32 %v3548, %v3588
    %v3590 = vpop.f32.mrb[0].mxu0
    %v3591 = vpop.f32.mrb[0].mxu0
    %3592 = vdwg.mxu0
    %3593 = vmatprep.subr.bf16.mxu0 %v3161
    %3594 = vmatpush1.bf16.msra.mxu0 %v3160
    %3595 = vmatprep.subr.bf16.mxu0 %v3168
    %3596 = vmatpush1.bf16.msra.mxu0 %v3167
    %3597 = vmatprep.subr.bf16.mxu0 %v3175
    %3598 = vmatpush1.bf16.msra.mxu0 %v3174
    %3599 = vmatprep.subr.bf16.mxu0 %v3182
    %3600 = vmatpush1.bf16.msra.mxu0 %v3181
    %3601 = vmatprep.subr.bf16.mxu0 %v3189
    %3602 = vmatpush1.bf16.msra.mxu0 %v3188
    %3603 = vmatprep.subr.bf16.mxu0 %v3196
    %3604 = vmatpush1.bf16.msra.mxu0 %v3195
    %3605 = vmatprep.subr.bf16.mxu0 %v3203
    %3606 = vmatpush1.bf16.msra.mxu0 %v3202
    %3607 = vmatprep.subr.bf16.mxu0 %v3210
    %3608 = vmatpush1.bf16.msra.mxu0 %v3209
    %3609 = vmatprep.subr.bf16.mxu0 %v3217
    %3610 = vmatpush1.bf16.msra.mxu0 %v3216
    %3611 = vmatprep.subr.bf16.mxu0 %v3224
    %3612 = vmatpush1.bf16.msra.mxu0 %v3223
    %3613 = vmatprep.subr.bf16.mxu0 %v3231
    %3614 = vmatpush1.bf16.msra.mxu0 %v3230
    %3615 = vmatprep.subr.bf16.mxu0 %v3238
    %3616 = vmatpush1.bf16.msra.mxu0 %v3237
    %3617 = vmatprep.subr.bf16.mxu0 %v3245
    %3618 = vmatpush1.bf16.msra.mxu0 %v3244
    %3619 = vmatprep.subr.bf16.mxu0 %v3252
    %3620 = vmatpush1.bf16.msra.mxu0 %v3251
    %3621 = vmatprep.subr.bf16.mxu0 %v3259
    %3622 = vmatpush1.bf16.msra.mxu0 %v3258
    %3623 = vmatprep.subr.bf16.mxu0 %v3266
    %3624 = vmatpush1.bf16.msra.mxu0 %v3265
    %3625 = vmatprep.mubr.bf16.mxu0 %v2368
    %3626 = vmatmul.mubr.bf16.gmra.mrb[0].mxu0 %v2367
    %v3627 = vpop.f32.mrb[0].mxu0
    %v3628 = vadd.f32 %v2584, %v3627
    %v3629 = vpop.f32.mrb[0].mxu0
    %v3630 = vadd.f32 %v2588, %v3629
    %v3631 = vpop.f32.mrb[0].mxu0
    %v3632 = vpop.f32.mrb[0].mxu0
    %3633 = vdwg.mxu0
    %3634 = vmatprep.subr.bf16.mxu0 %v3273
    %3635 = vmatpush1.bf16.msra.mxu0 %v3272
    %3636 = vmatprep.subr.bf16.mxu0 %v3280
    %3637 = vmatpush1.bf16.msra.mxu0 %v3279
    %3638 = vmatprep.subr.bf16.mxu0 %v3287
    %3639 = vmatpush1.bf16.msra.mxu0 %v3286
    %3640 = vmatprep.subr.bf16.mxu0 %v3294
    %3641 = vmatpush1.bf16.msra.mxu0 %v3293
    %3642 = vmatprep.subr.bf16.mxu0 %v3301
    %3643 = vmatpush1.bf16.msra.mxu0 %v3300
    %3644 = vmatprep.subr.bf16.mxu0 %v3308
    %3645 = vmatpush1.bf16.msra.mxu0 %v3307
    %3646 = vmatprep.subr.bf16.mxu0 %v3315
    %3647 = vmatpush1.bf16.msra.mxu0 %v3314
    %3648 = vmatprep.subr.bf16.mxu0 %v3322
    %3649 = vmatpush1.bf16.msra.mxu0 %v3321
    %3650 = vmatprep.subr.bf16.mxu0 %v3329
    %3651 = vmatpush1.bf16.msra.mxu0 %v3328
    %3652 = vmatprep.subr.bf16.mxu0 0
    %3653 = vmatpush1.bf16.msra.mxu0 0
    %3654 = vmatprep.subr.bf16.mxu0 0
    %3655 = vmatpush1.bf16.msra.mxu0 0
    %3656 = vmatprep.subr.bf16.mxu0 0
    %3657 = vmatpush1.bf16.msra.mxu0 0
    %3658 = vmatprep.subr.bf16.mxu0 0
    %3659 = vmatpush1.bf16.msra.mxu0 0
    %3660 = vmatprep.subr.bf16.mxu0 0
    %3661 = vmatpush1.bf16.msra.mxu0 0
    %3662 = vmatprep.subr.bf16.mxu0 0
    %3663 = vmatpush1.bf16.msra.mxu0 0
    %3664 = vmatprep.subr.bf16.mxu0 0
    %3665 = vmatpush1.bf16.msra.mxu0 0
    %3666 = vmatprep.mubr.bf16.mxu0 %v3509
    %3667 = vmatmul.mubr.bf16.gmra.mrb[0].mxu0 %v2369
    %v3668 = vpop.f32.mrb[0].mxu0
    %v3669 = vadd.f32 %v3628, %v3668
    %v3670 = vpop.f32.mrb[0].mxu0
    %v3671 = vadd.f32 %v3630, %v3670
    %v3672 = vpop.f32.mrb[0].mxu0
    %v3673 = vpop.f32.mrb[0].mxu0
    %3674 = vdwg.mxu0
    %3675 = vmatprep.subr.bf16.mxu0 %v3163
    %3676 = vmatpush1.bf16.msra.mxu0 %v3162
    %3677 = vmatprep.subr.bf16.mxu0 %v3170
    %3678 = vmatpush1.bf16.msra.mxu0 %v3169
    %3679 = vmatprep.subr.bf16.mxu0 %v3177
    %3680 = vmatpush1.bf16.msra.mxu0 %v3176
    %3681 = vmatprep.subr.bf16.mxu0 %v3184
    %3682 = vmatpush1.bf16.msra.mxu0 %v3183
    %3683 = vmatprep.subr.bf16.mxu0 %v3191
    %3684 = vmatpush1.bf16.msra.mxu0 %v3190
    %3685 = vmatprep.subr.bf16.mxu0 %v3198
    %3686 = vmatpush1.bf16.msra.mxu0 %v3197
    %3687 = vmatprep.subr.bf16.mxu0 %v3205
    %3688 = vmatpush1.bf16.msra.mxu0 %v3204
    %3689 = vmatprep.subr.bf16.mxu0 %v3212
    %3690 = vmatpush1.bf16.msra.mxu0 %v3211
    %3691 = vmatprep.subr.bf16.mxu0 %v3219
    %3692 = vmatpush1.bf16.msra.mxu0 %v3218
    %3693 = vmatprep.subr.bf16.mxu0 %v3226
    %3694 = vmatpush1.bf16.msra.mxu0 %v3225
    %3695 = vmatprep.subr.bf16.mxu0 %v3233
    %3696 = vmatpush1.bf16.msra.mxu0 %v3232
    %3697 = vmatprep.subr.bf16.mxu0 %v3240
    %3698 = vmatpush1.bf16.msra.mxu0 %v3239
    %3699 = vmatprep.subr.bf16.mxu0 %v3247
    %3700 = vmatpush1.bf16.msra.mxu0 %v3246
    %3701 = vmatprep.subr.bf16.mxu0 %v3254
    %3702 = vmatpush1.bf16.msra.mxu0 %v3253
    %3703 = vmatprep.subr.bf16.mxu0 %v3261
    %3704 = vmatpush1.bf16.msra.mxu0 %v3260
    %3705 = vmatprep.subr.bf16.mxu0 %v3268
    %3706 = vmatpush1.bf16.msra.mxu0 %v3267
    %3707 = vmatprep.mubr.bf16.mxu0 %v2368
    %3708 = vmatmul.mubr.bf16.gmra.mrb[0].mxu0 %v2367
    %v3709 = vpop.f32.mrb[0].mxu0
    %v3710 = vadd.f32 %v2592, %v3709
    %v3711 = vpop.f32.mrb[0].mxu0
    %v3712 = vadd.f32 %v2596, %v3711
    %v3713 = vpop.f32.mrb[0].mxu0
    %v3714 = vpop.f32.mrb[0].mxu0
    %3715 = vdwg.mxu0
    %3716 = vmatprep.subr.bf16.mxu0 %v3275
    %3717 = vmatpush1.bf16.msra.mxu0 %v3274
    %3718 = vmatprep.subr.bf16.mxu0 %v3282
    %3719 = vmatpush1.bf16.msra.mxu0 %v3281
    %3720 = vmatprep.subr.bf16.mxu0 %v3289
    %3721 = vmatpush1.bf16.msra.mxu0 %v3288
    %3722 = vmatprep.subr.bf16.mxu0 %v3296
    %3723 = vmatpush1.bf16.msra.mxu0 %v3295
    %3724 = vmatprep.subr.bf16.mxu0 %v3303
    %3725 = vmatpush1.bf16.msra.mxu0 %v3302
    %3726 = vmatprep.subr.bf16.mxu0 %v3310
    %3727 = vmatpush1.bf16.msra.mxu0 %v3309
    %3728 = vmatprep.subr.bf16.mxu0 %v3317
    %3729 = vmatpush1.bf16.msra.mxu0 %v3316
    %3730 = vmatprep.subr.bf16.mxu0 %v3324
    %3731 = vmatpush1.bf16.msra.mxu0 %v3323
    %3732 = vmatprep.subr.bf16.mxu0 %v3331
    %3733 = vmatpush1.bf16.msra.mxu0 %v3330
    %3734 = vmatprep.subr.bf16.mxu0 0
    %3735 = vmatpush1.bf16.msra.mxu0 0
    %3736 = vmatprep.subr.bf16.mxu0 0
    %3737 = vmatpush1.bf16.msra.mxu0 0
    %3738 = vmatprep.subr.bf16.mxu0 0
    %3739 = vmatpush1.bf16.msra.mxu0 0
    %3740 = vmatprep.subr.bf16.mxu0 0
    %3741 = vmatpush1.bf16.msra.mxu0 0
    %3742 = vmatprep.subr.bf16.mxu0 0
    %3743 = vmatpush1.bf16.msra.mxu0 0
    %3744 = vmatprep.subr.bf16.mxu0 0
    %3745 = vmatpush1.bf16.msra.mxu0 0
    %3746 = vmatprep.subr.bf16.mxu0 0
    %3747 = vmatpush1.bf16.msra.mxu0 0
    %3748 = vmatprep.mubr.bf16.mxu0 %v3509
    %3749 = vmatmul.mubr.bf16.gmra.mrb[0].mxu0 %v2369
    %v3750 = vpop.f32.mrb[0].mxu0
    %v3751 = vadd.f32 %v3710, %v3750
    %v3752 = vpop.f32.mrb[0].mxu0
    %v3753 = vadd.f32 %v3712, %v3752
    %v3754 = vpop.f32.mrb[0].mxu0
    %v3755 = vpop.f32.mrb[0].mxu0
    %3756 = vdwg.mxu0
    %3757 = vmatprep.subr.bf16.mxu0 0
    %3758 = vmatpush1.bf16.msra.mxu0 %v3164
    %3759 = vmatprep.subr.bf16.mxu0 0
    %3760 = vmatpush1.bf16.msra.mxu0 %v3171
    %3761 = vmatprep.subr.bf16.mxu0 0
    %3762 = vmatpush1.bf16.msra.mxu0 %v3178
    %3763 = vmatprep.subr.bf16.mxu0 0
    %3764 = vmatpush1.bf16.msra.mxu0 %v3185
    %3765 = vmatprep.subr.bf16.mxu0 0
    %3766 = vmatpush1.bf16.msra.mxu0 %v3192
    %3767 = vmatprep.subr.bf16.mxu0 0
    %3768 = vmatpush1.bf16.msra.mxu0 %v3199
    %3769 = vmatprep.subr.bf16.mxu0 0
    %3770 = vmatpush1.bf16.msra.mxu0 %v3206
    %3771 = vmatprep.subr.bf16.mxu0 0
    %3772 = vmatpush1.bf16.msra.mxu0 %v3213
    %3773 = vmatprep.subr.bf16.mxu0 0
    %3774 = vmatpush1.bf16.msra.mxu0 %v3220
    %3775 = vmatprep.subr.bf16.mxu0 0
    %3776 = vmatpush1.bf16.msra.mxu0 %v3227
    %3777 = vmatprep.subr.bf16.mxu0 0
    %3778 = vmatpush1.bf16.msra.mxu0 %v3234
    %3779 = vmatprep.subr.bf16.mxu0 0
    %3780 = vmatpush1.bf16.msra.mxu0 %v3241
    %3781 = vmatprep.subr.bf16.mxu0 0
    %3782 = vmatpush1.bf16.msra.mxu0 %v3248
    %3783 = vmatprep.subr.bf16.mxu0 0
    %3784 = vmatpush1.bf16.msra.mxu0 %v3255
    %3785 = vmatprep.subr.bf16.mxu0 0
    %3786 = vmatpush1.bf16.msra.mxu0 %v3262
    %3787 = vmatprep.subr.bf16.mxu0 0
    %3788 = vmatpush1.bf16.msra.mxu0 %v3269
    %3789 = vmatprep.mubr.bf16.mxu0 %v2368
    %3790 = vmatmul.mubr.bf16.gmra.mrb[0].mxu0 %v2367
    %v3791 = vpop.f32.mrb[0].mxu0
    %v3792 = vadd.f32 %v2600, %v3791
    %v3793 = vpop.f32.mrb[0].mxu0
    %v3794 = vpop.f32.mrb[0].mxu0
    %v3795 = vpop.f32.mrb[0].mxu0
    %3796 = vdwg.mxu0
    %3797 = vmatprep.subr.bf16.mxu0 0
    %3798 = vmatpush1.bf16.msra.mxu0 %v3276
    %3799 = vmatprep.subr.bf16.mxu0 0
    %3800 = vmatpush1.bf16.msra.mxu0 %v3283
    %3801 = vmatprep.subr.bf16.mxu0 0
    %3802 = vmatpush1.bf16.msra.mxu0 %v3290
    %3803 = vmatprep.subr.bf16.mxu0 0
    %3804 = vmatpush1.bf16.msra.mxu0 %v3297
    %3805 = vmatprep.subr.bf16.mxu0 0
    %3806 = vmatpush1.bf16.msra.mxu0 %v3304
    %3807 = vmatprep.subr.bf16.mxu0 0
    %3808 = vmatpush1.bf16.msra.mxu0 %v3311
    %3809 = vmatprep.subr.bf16.mxu0 0
    %3810 = vmatpush1.bf16.msra.mxu0 %v3318
    %3811 = vmatprep.subr.bf16.mxu0 0
    %3812 = vmatpush1.bf16.msra.mxu0 %v3325
    %3813 = vmatprep.subr.bf16.mxu0 0
    %3814 = vmatpush1.bf16.msra.mxu0 %v3332
    %3815 = vmatprep.subr.bf16.mxu0 0
    %3816 = vmatpush1.bf16.msra.mxu0 0
    %3817 = vmatprep.subr.bf16.mxu0 0
    %3818 = vmatpush1.bf16.msra.mxu0 0
    %3819 = vmatprep.subr.bf16.mxu0 0
    %3820 = vmatpush1.bf16.msra.mxu0 0
    %3821 = vmatprep.subr.bf16.mxu0 0
    %3822 = vmatpush1.bf16.msra.mxu0 0
    %3823 = vmatprep.subr.bf16.mxu0 0
    %3824 = vmatpush1.bf16.msra.mxu0 0
    %3825 = vmatprep.subr.bf16.mxu0 0
    %3826 = vmatpush1.bf16.msra.mxu0 0
    %3827 = vmatprep.subr.bf16.mxu0 0
    %3828 = vmatpush1.bf16.msra.mxu0 0
    %3829 = vmatprep.mubr.bf16.mxu0 %v3509
    %3830 = vmatmul.mubr.bf16.gmra.mrb[0].mxu0 %v2369
    %v3831 = vpop.f32.mrb[0].mxu0
    %v3832 = vadd.f32 %v3792, %v3831
    %v3833 = vpop.f32.mrb[0].mxu0
    %v3834 = vpop.f32.mrb[0].mxu0
    %v3835 = vpop.f32.mrb[0].mxu0
    %3836 = vdwg.mxu0
    %v3837 = vxor.u32 %v3587, 2147483648
    %v3838 = vxor.u32 %v3589, 2147483648
    %v3839 = vxor.u32 %v3669, 2147483648
    %v3840 = vxor.u32 %v3671, 2147483648
    %v3841 = vxor.u32 %v3751, 2147483648
    %v3842 = vxor.u32 %v3753, 2147483648
    %v3843 = vxor.u32 %v3832, 2147483648
    %v3844 = vmul.f32 %v3837, 1.442695
    %v3845 = vpow.pop %v3844
    %v3846 = vmul.f32 %v3838, 1.442695
    %v3847 = vpow.pop %v3846
    %v3848 = vmul.f32 %v3839, 1.442695
    %v3849 = vpow.pop %v3848
    %v3850 = vmul.f32 %v3840, 1.442695
    %v3851 = vpow.pop %v3850
    %v3852 = vmul.f32 %v3841, 1.442695
    %v3853 = vpow.pop %v3852
    %v3854 = vmul.f32 %v3842, 1.442695
    %v3855 = vpow.pop %v3854
    %v3856 = vmul.f32 %v3843, 1.442695
    %v3857 = vpow.pop %v3856
    %v3858 = vadd.f32 %v3845, 1.0
    %v3859 = vadd.f32 %v3847, 1.0
    %v3860 = vadd.f32 %v3849, 1.0
    %v3861 = vadd.f32 %v3851, 1.0
    %v3862 = vadd.f32 %v3853, 1.0
    %v3863 = vadd.f32 %v3855, 1.0
    %v3864 = vadd.f32 %v3857, 1.0
    %v3865 = vrcp.pop %v3858
    %v3866 = vmul.f32 1.0, %v3865
    %v3867 = vrcp.pop %v3859
    %v3868 = vmul.f32 1.0, %v3867
    %v3869 = vrcp.pop %v3860
    %v3870 = vmul.f32 1.0, %v3869
    %v3871 = vrcp.pop %v3861
    %v3872 = vmul.f32 1.0, %v3871
    %v3873 = vrcp.pop %v3862
    %v3874 = vmul.f32 1.0, %v3873
    %v3875 = vrcp.pop %v3863
    %v3876 = vmul.f32 1.0, %v3875
    %v3877 = vrcp.pop %v3864
    %v3878 = vmul.f32 1.0, %v3877
    %3879 = vst [vmem:[#allocation2] sm:$0xff] %v3866
    %3880 = vst [vmem:[#allocation2 + $0x8] sm:$0xff] %v3868
    %3881 = vst [vmem:[#allocation2 + $0x10] sm:$0xff] %v3870
    %3882 = vst [vmem:[#allocation2 + $0x18] sm:$0xff] %v3872
    %3883 = vst [vmem:[#allocation2 + $0x20] sm:$0xff] %v3874
    %3884 = vst [vmem:[#allocation2 + $0x28] sm:$0xff] %v3876
    %3885 = vst.msk [vmem:[#allocation2 + $0x30] sm:$0xff] %vm1374, %v3878
    // Predicated region
    $region54: #{tpu_custom_call.1} parent=1 // pred_check
      _
    $region55: #{tpu_custom_call.1} parent=1 // pred_check_branch
      %3887 = sbr.rel (0) target = $region57
    $region56: #{tpu_custom_call.1} parent=1 // pred_region
      %s3889 = ssub.s32 896, 896
      %3890 = vsyncadd [#allocation3], %s3889
      %s3892 = sshll.u32 [#allocation2], 4
      %s3893 = int_to_ptr.vmem [resolvable:$true] %s3892
      %3895 = dma.vmem_to_hbm [thread:$0]  %s3893, 896, %s13, [#allocation3]
    $region57: #{tpu_custom_call.1} parent=1 // pred_fallthru
      _
    // Predicated region
    $region58: #{tpu_custom_call.1} parent=1 // pred_check
      _
    $region59: #{tpu_custom_call.1} parent=1 // pred_check_branch
      %3897 = sbr.rel (0) target = $region61
    $region60: #{tpu_custom_call.1} parent=1 // pred_region
      %s3899 = ssub.s32 128, 128
      %3900 = vsyncadd [#allocation5], %s3899
      %s3902 = sshll.u32 [#allocation4], 4
      %s3903 = int_to_ptr.vmem [resolvable:$true] %s3902
      %3905 = dma.vmem_to_hbm [thread:$0]  %s3903, 128, %s14, [#allocation5]
    $region61: #{tpu_custom_call.1} parent=1 // pred_fallthru
      _
    // Predicated region
    $region62: #{tpu_custom_call.1} parent=1 // pred_check
      _
    $region63: #{tpu_custom_call.1} parent=1 // pred_check_branch
      %3907 = sbr.rel (0) target = $region65
    $region64: #{tpu_custom_call.1} parent=1 // pred_region
      %3908 = dma.done [#allocation3], 896
    $region65: #{tpu_custom_call.1} parent=1 // pred_fallthru
      _
    // Predicated region
    $region66: #{tpu_custom_call.1} parent=1 // pred_check
      _
    $region67: #{tpu_custom_call.1} parent=1 // pred_check_branch
      %3910 = sbr.rel (0) target = $region69
    $region68: #{tpu_custom_call.1} parent=1 // pred_region
      %3911 = dma.done [#allocation5], 128
    $region69: #{tpu_custom_call.1} parent=1 // pred_fallthru
      _
    %3912 = vsyncpa [#allocation3], 1
    %3913 = vsyncpa [#allocation5], 1

</llo_original>
